<compile_context>
chip_gen: v7x
topology: tpu7x:2x2x1
jax: 0.10.0
libtpu: 0.0.40
codegen_flags: <defaults>
</compile_context>

<pallas_src>
import functools

import jax
import jax.numpy as jnp
from jax.experimental import pallas as pl
from jax.experimental.pallas import tpu as pltpu

N_LAYERS = 5
LANE = 128


def _round_up(x, m):
    return (x + m - 1) // m * m


def _pick_tile(n_padded, want):
    """Largest multiple of 128 that divides n_padded and is <= want (>=128)."""
    best = 128
    d = 128
    while d <= n_padded:
        if n_padded % d == 0 and d <= want:
            best = d
        d += 128
    return best


def _linear(x, w, b):
    return jnp.dot(x, w, preferred_element_type=jnp.float32) + b


def _mlp(x, w1, b1, w2, b2):
    h = jnp.maximum(_linear(x, w1, b1), 0.0)
    return jnp.maximum(_linear(h, w2, b2), 0.0)


# ---------------------------------------------------------------------------
# Kernels
# ---------------------------------------------------------------------------

def _mlp_kernel(x_ref, w1_ref, b1_ref, w2_ref, b2_ref, o_ref):
    """Row-tiled MLP: out = relu(relu(x@w1+b1)@w2+b2)."""
    o_ref[...] = _mlp(x_ref[...], w1_ref[...], b1_ref[...],
                      w2_ref[...], b2_ref[...])


def _conv_kernel(adj_ref, xk_ref, x0_ref,
                 w1a_ref, b1a_ref, w1b_ref, b1b_ref,
                 w2a_ref, b2a_ref, w2b_ref, b2b_ref,
                 o_ref, acc_ref):
    """One GraphConv layer for one row-block of nodes.

    grid = (row blocks [parallel], k blocks over adj columns [arbitrary]).
    acc_ref accumulates adj[rows, :] @ x in f32 across the k axis; the two
    MLPs + residual run once per row block on the last k step.
    """
    k = pl.program_id(1)

    @pl.when(k == 0)
    def _():
        acc_ref[...] = jnp.zeros_like(acc_ref)

    # bf16 adj tile x bf16 activations, f32 accumulation on the MXU.
    acc_ref[...] += jnp.dot(adj_ref[...], xk_ref[...],
                            preferred_element_type=jnp.float32)

    @pl.when(k == pl.num_programs(1) - 1)
    def _():
        xa = _mlp(acc_ref[...], w1a_ref[...], b1a_ref[...],
                  w1b_ref[...], b1b_ref[...])
        o_ref[...] = _mlp(x0_ref[...] + xa, w2a_ref[...], b2a_ref[...],
                          w2b_ref[...], b2b_ref[...])


def _head_kernel(x_ref, wf_ref, bf_ref, o_ref):
    """Final Linear(C, 2) (lane-padded to 128 outputs) + sigmoid."""
    o_ref[...] = jax.nn.sigmoid(_linear(x_ref[...], wf_ref[...], bf_ref[...]))


# ---------------------------------------------------------------------------
# pallas_call wrappers
# ---------------------------------------------------------------------------

def _row_mlp_call(x, w1, b1, w2, b2, tm):
    n_p, cin = x.shape
    cout = w2.shape[1]
    grid = (n_p // tm,)
    full = lambda i: (0, 0)
    return pl.pallas_call(
        _mlp_kernel,
        out_shape=jax.ShapeDtypeStruct((n_p, cout), jnp.float32),
        grid_spec=pltpu.PrefetchScalarGridSpec(
            num_scalar_prefetch=0,
            grid=grid,
            in_specs=[pl.BlockSpec((tm, cin), lambda i: (i, 0)),
                      pl.BlockSpec(w1.shape, full),
                      pl.BlockSpec(b1.shape, full),
                      pl.BlockSpec(w2.shape, full),
                      pl.BlockSpec(b2.shape, full)],
            out_specs=pl.BlockSpec((tm, cout), lambda i: (i, 0)),
        ),
        compiler_params=pltpu.CompilerParams(
            dimension_semantics=("parallel",)),
    )(x, w1, b1, w2, b2)


def _head_call(x, wf, bf, tm):
    n_p, cp = x.shape
    cout = wf.shape[1]
    grid = (n_p // tm,)
    full = lambda i: (0, 0)
    return pl.pallas_call(
        _head_kernel,
        out_shape=jax.ShapeDtypeStruct((n_p, cout), jnp.float32),
        grid_spec=pltpu.PrefetchScalarGridSpec(
            num_scalar_prefetch=0,
            grid=grid,
            in_specs=[pl.BlockSpec((tm, cp), lambda i: (i, 0)),
                      pl.BlockSpec(wf.shape, full),
                      pl.BlockSpec(bf.shape, full)],
            out_specs=pl.BlockSpec((tm, cout), lambda i: (i, 0)),
        ),
        compiler_params=pltpu.CompilerParams(
            dimension_semantics=("parallel",)),
    )(x, wf, bf)


def _conv_vmem_limit(tm, tk, cp):
    need = (2 * tm * tk * 2            # adj bf16 tiles, double buffered
            + 2 * tk * cp * 2          # x (bf16) k-slabs
            + 2 * tm * cp * 4          # x0 f32 row slabs
            + 2 * tm * cp * 4          # output f32 row slabs
            + 2 * 4 * (cp * cp + cp) * 4   # one layer's weights + biases
            + tm * cp * 4)             # f32 accumulator scratch
    # Generous headroom, but capped so the plan stays v7x (64 MiB VMEM) safe.
    return int(min(max(2 * need, 16 * 1024 * 1024), 48 * 1024 * 1024))


def _conv_call(x, adj_bf16, layer_w, tm, tk):
    n_p, cp = x.shape
    (w1a, b1a, w1b, b1b, w2a, b2a, w2b, b2b) = layer_w
    grid = (n_p // tm, n_p // tk)
    full = lambda i, k: (0, 0)
    flops = 2 * n_p * n_p * cp + 8 * n_p * cp * cp
    bytes_accessed = (n_p * n_p * 2              # adj (bf16)
                      + n_p * cp * (2 + 4 + 4)   # x bf16 in, x0 f32 in, out f32
                      + 4 * cp * cp * 4)         # weights
    return pl.pallas_call(
        _conv_kernel,
        out_shape=jax.ShapeDtypeStruct((n_p, cp), jnp.float32),
        grid_spec=pltpu.PrefetchScalarGridSpec(
            num_scalar_prefetch=0,
            grid=grid,
            in_specs=[
                pl.BlockSpec((tm, tk), lambda i, k: (i, k)),   # adj tile (bf16)
                pl.BlockSpec((tk, cp), lambda i, k: (k, 0)),   # x bf16 k-slab
                pl.BlockSpec((tm, cp), lambda i, k: (i, 0)),   # x0 f32 row slab
                pl.BlockSpec((cp, cp), full), pl.BlockSpec((1, cp), full),
                pl.BlockSpec((cp, cp), full), pl.BlockSpec((1, cp), full),
                pl.BlockSpec((cp, cp), full), pl.BlockSpec((1, cp), full),
                pl.BlockSpec((cp, cp), full), pl.BlockSpec((1, cp), full),
            ],
            out_specs=pl.BlockSpec((tm, cp), lambda i, k: (i, 0)),
            scratch_shapes=[pltpu.VMEM((tm, cp), jnp.float32)],
        ),
        compiler_params=pltpu.CompilerParams(
            dimension_semantics=("parallel", "arbitrary"),
            vmem_limit_bytes=_conv_vmem_limit(tm, tk, cp)),
        cost_estimate=pl.CostEstimate(
            flops=flops, transcendentals=0, bytes_accessed=bytes_accessed),
    )(adj_bf16, x.astype(jnp.bfloat16), x,
      w1a, b1a, w1b, b1b, w2a, b2a, w2b, b2b)


# ---------------------------------------------------------------------------
# Full forward pass
# ---------------------------------------------------------------------------

def _pad_w(w, rows, cols):
    return jnp.zeros((rows, cols), jnp.float32).at[:w.shape[0], :w.shape[1]].set(w)


def _pad_b(b, cols):
    return jnp.zeros((1, cols), jnp.float32).at[:, :b.shape[1]].set(b)


@functools.partial(jax.jit, static_argnames=("tile_m", "tile_k"))
def net_forward(x, adj, params, *, tile_m=256, tile_k=512):
    (w0a, b0a, w0b, b0b,
     c1w1, c1b1, c1w2, c1b2,
     c2w1, c2b1, c2w2, c2b2,
     wf, bf) = params

    n = x.shape[0]
    c = w0a.shape[1]
    cp = max(LANE, _round_up(c, LANE))    # lane-dense channel width
    kin = LANE                            # pad Linear(2, C) contraction dim

    n_p = _round_up(max(n, LANE), LANE)
    tm = _pick_tile(n_p, tile_m)
    tk = _pick_tile(n_p, tile_k)

    # Zero-padded (exact) inputs.
    x_p = jnp.zeros((n_p, kin), jnp.float32).at[:n, :2].set(x)
    adj_p = (jnp.zeros((n_p, n_p), jnp.float32)
             .at[:n, :n].set(adj)).astype(jnp.bfloat16)

    # Zero-padded weights (exact: padded channels stay 0 through ReLU MLPs).
    w0a_p, b0a_p = _pad_w(w0a, kin, cp), _pad_b(b0a, cp)
    w0b_p, b0b_p = _pad_w(w0b, cp, cp), _pad_b(b0b, cp)
    wf_p, bf_p = _pad_w(wf, cp, LANE), _pad_b(bf, LANE)
    conv_w = []
    for i in range(N_LAYERS):
        conv_w.append((
            _pad_w(c1w1[i], cp, cp), _pad_b(c1b1[i], cp),
            _pad_w(c1w2[i], cp, cp), _pad_b(c1b2[i], cp),
            _pad_w(c2w1[i], cp, cp), _pad_b(c2b1[i], cp),
            _pad_w(c2w2[i], cp, cp), _pad_b(c2b2[i], cp),
        ))

    # lin0
    h = _row_mlp_call(x_p, w0a_p, b0a_p, w0b_p, b0b_p, tm)
    # 5 GraphConv layers, one tiled pallas_call each (weights streamed per layer).
    for i in range(N_LAYERS):
        h = _conv_call(h, adj_p, conv_w[i], tm, tk)
    # final Linear(C, 2) + sigmoid, lane-padded output.
    out_p = _head_call(h, wf_p, bf_p, tm)
    return out_p[:n, :2]


# ---------------------------------------------------------------------------
# Params + references
# ---------------------------------------------------------------------------

def init_params(key, channels):
    """Deterministic PyTorch-Linear-style init; weights stored as (in, out)."""
    def linear_init(key, fan_in, fan_out):
        k_w, k_b = jax.random.split(key)
        bound = 1.0 / (fan_in ** 0.5)
        w = jax.random.uniform(k_w, (fan_in, fan_out), jnp.float32, -bound, bound)
        b = jax.random.uniform(k_b, (1, fan_out), jnp.float32, -bound, bound)
        return w, b

    keys = jax.random.split(key, 2 + 4 * N_LAYERS + 1)
    ki = iter(keys)

    w0a, b0a = linear_init(next(ki), 2, channels)
    w0b, b0b = linear_init(next(ki), channels, channels)

    def stack_layers():
        w1s, b1s, w2s, b2s = [], [], [], []
        for _ in range(N_LAYERS):
            w1, b1 = linear_init(next(ki), channels, channels)
            w2, b2 = linear_init(next(ki), channels, channels)
            w1s.append(w1); b1s.append(b1); w2s.append(w2); b2s.append(b2)
        return (jnp.stack(w1s), jnp.stack(b1s), jnp.stack(w2s), jnp.stack(b2s))

    c1w1, c1b1, c1w2, c1b2 = stack_layers()   # lin1 of each conv
    c2w1, c2b1, c2w2, c2b2 = stack_layers()   # lin2 of each conv

    wf, bf = linear_init(next(ki), channels, 2)

    return (w0a, b0a, w0b, b0b,
            c1w1, c1b1, c1w2, c1b2,
            c2w1, c2b1, c2w2, c2b2,
            wf, bf)


def _ref_forward(x, adj, params, spmm_bf16):
    (w0a, b0a, w0b, b0b,
     c1w1, c1b1, c1w2, c1b2,
     c2w1, c2b1, c2w2, c2b2,
     wf, bf) = params

    def mlp(x, w1, b1, w2, b2):
        h = jnp.maximum(x @ w1 + b1, 0.0)
        return jnp.maximum(h @ w2 + b2, 0.0)

    adj_m = adj.astype(jnp.bfloat16) if spmm_bf16 else adj
    x = mlp(x, w0a, b0a, w0b, b0b)
    for i in range(N_LAYERS):
        x0 = x
        lhs = x.astype(jnp.bfloat16) if spmm_bf16 else x
        xa = jnp.dot(adj_m, lhs, preferred_element_type=jnp.float32)
        xa = mlp(xa, c1w1[i], c1b1[i], c1w2[i], c1b2[i])
        x = mlp(x0 + xa, c2w1[i], c2b1[i], c2w2[i], c2b2[i])
    return jax.nn.sigmoid(x @ wf + bf)


def net_forward_ref_f32(x, adj, params):
    """Pure-f32 JAX reference (PyTorch semantics)."""
    return _ref_forward(x, adj, params, spmm_bf16=False)


def net_forward_ref_matched(x, adj, params):
    """Reference mirroring the kernel numerics (bf16 spmm, f32 elsewhere)."""
    return _ref_forward(x, adj, params, spmm_bf16=True)


# TODO(synk): training path (sigmoid_focal_loss) and the sparse-COO `batch`
# path of Net.forward are not implemented; only the eval / dense-adj path is.

if __name__ == "__main__":
    channels = 32
    n_nodes = 300   # exercises padding (-> 384) and a (3, 3) row/k grid

    key = jax.random.PRNGKey(0)
    k_x, k_adj, k_p = jax.random.split(key, 3)

    # Node features: 2 input channels per node (MLP(2, channels)).
    x = jax.random.normal(k_x, (n_nodes, 2), jnp.float32)

    # Dense symmetric adjacency with self loops, row-normalized.
    a = (jax.random.uniform(k_adj, (n_nodes, n_nodes)) < 0.05).astype(jnp.float32)
    a = jnp.maximum(a, a.T) + jnp.eye(n_nodes, dtype=jnp.float32)
    adj = a / jnp.sum(a, axis=1, keepdims=True)

    params = init_params(k_p, channels)

    out = net_forward(x, adj, params, tile_m=128, tile_k=128)
    out = jax.block_until_ready(out)

    assert out.shape == (n_nodes, 2)
    assert bool(jnp.all(jnp.isfinite(out)))

    # Tight check against a reference that mirrors the kernel's bf16 spmm.
    ref_m = net_forward_ref_matched(x, adj, params)
    assert jnp.allclose(out, ref_m, rtol=2e-3, atol=2e-3)

    # Loose check against the pure-f32 PyTorch-semantics reference.
    ref_f = net_forward_ref_f32(x, adj, params)
    assert jnp.allclose(out, ref_f, rtol=5e-2, atol=5e-2)

    print("KERNEL_OK")
</pallas_src>

<mosaic_0001>
module attributes {stable_mosaic.version = 11 : i64} {
  func.func @_mlp_kernel(%arg0: i32, %arg1: memref<128x128xf32, #tpu.memory_space<vmem>>, %arg2: memref<128x128xf32, #tpu.memory_space<vmem>>, %arg3: memref<1x128xf32, #tpu.memory_space<vmem>>, %arg4: memref<128x128xf32, #tpu.memory_space<vmem>>, %arg5: memref<1x128xf32, #tpu.memory_space<vmem>>, %arg6: memref<128x128xf32, #tpu.memory_space<vmem>>) attributes {dimension_semantics = [#tpu.dimension_semantics<parallel>], iteration_bounds = array<i64: 3>, scalar_prefetch = 0 : i64, scratch_operands = 0 : i64, tpu.core_type = #tpu.core_type<tc>, window_params = [{transform_indices = @transform_0, window_bounds = array<i64: 128, 128>}, {pipeline_mode = #tpu.pipeline_mode<synchronous>, transform_indices = @transform_1, window_bounds = array<i64: 128, 128>}, {pipeline_mode = #tpu.pipeline_mode<synchronous>, transform_indices = @transform_2, window_bounds = array<i64: 1, 128>}, {pipeline_mode = #tpu.pipeline_mode<synchronous>, transform_indices = @transform_3, window_bounds = array<i64: 128, 128>}, {pipeline_mode = #tpu.pipeline_mode<synchronous>, transform_indices = @transform_4, window_bounds = array<i64: 1, 128>}, {transform_indices = @transform_5, window_bounds = array<i64: 128, 128>}]} {
    %c0 = arith.constant 0 : index
    %c0_0 = arith.constant 0 : index
    %0 = vector.load %arg1[%c0, %c0_0] : memref<128x128xf32, #tpu.memory_space<vmem>>, vector<128x128xf32>
    %c0_1 = arith.constant 0 : index
    %c0_2 = arith.constant 0 : index
    %1 = vector.load %arg2[%c0_1, %c0_2] : memref<128x128xf32, #tpu.memory_space<vmem>>, vector<128x128xf32>
    %c0_3 = arith.constant 0 : index
    %c0_4 = arith.constant 0 : index
    %2 = vector.load %arg3[%c0_3, %c0_4] : memref<1x128xf32, #tpu.memory_space<vmem>>, vector<1x128xf32>
    %c0_5 = arith.constant 0 : index
    %c0_6 = arith.constant 0 : index
    %3 = vector.load %arg4[%c0_5, %c0_6] : memref<128x128xf32, #tpu.memory_space<vmem>>, vector<128x128xf32>
    %c0_7 = arith.constant 0 : index
    %c0_8 = arith.constant 0 : index
    %4 = vector.load %arg5[%c0_7, %c0_8] : memref<1x128xf32, #tpu.memory_space<vmem>>, vector<1x128xf32>
    %cst = arith.constant dense<0.000000e+00> : vector<128x128xf32>
    %5 = tpu.matmul %0, %1, %cst {dimension_numbers = #tpu.dot_dimension_numbers<[1], [0], [0], [1], [0, 0, 1, 1], [], []>} : vector<128x128xf32>, vector<128x128xf32>, vector<128x128xf32> -> vector<128x128xf32>
    %6 = vector.broadcast %2 : vector<1x128xf32> to vector<128x128xf32>
    %7 = arith.addf %5, %6 : vector<128x128xf32>
    %cst_9 = arith.constant 0.000000e+00 : f32
    %8 = vector.broadcast %cst_9 : f32 to vector<128x128xf32>
    %9 = arith.maximumf %7, %8 : vector<128x128xf32>
    %cst_10 = arith.constant dense<0.000000e+00> : vector<128x128xf32>
    %10 = tpu.matmul %9, %3, %cst_10 {dimension_numbers = #tpu.dot_dimension_numbers<[1], [0], [0], [1], [0, 0, 1, 1], [], []>} : vector<128x128xf32>, vector<128x128xf32>, vector<128x128xf32> -> vector<128x128xf32>
    %11 = vector.broadcast %4 : vector<1x128xf32> to vector<128x128xf32>
    %12 = arith.addf %10, %11 : vector<128x128xf32>
    %cst_11 = arith.constant 0.000000e+00 : f32
    %13 = vector.broadcast %cst_11 : f32 to vector<128x128xf32>
    %14 = arith.maximumf %12, %13 : vector<128x128xf32>
    %c0_12 = arith.constant 0 : index
    %c0_13 = arith.constant 0 : index
    %15 = vector.load %arg6[%c0_12, %c0_13] : memref<128x128xf32, #tpu.memory_space<vmem>>, vector<128x128xf32>
    tpu.vector_store %arg6[%c0_12, %c0_13], %14 {strides = array<i32>} : memref<128x128xf32, #tpu.memory_space<vmem>>, vector<128x128xf32>,
    return
  }
  func.func @transform_0(%arg0: i32) -> (i32, i32) {
    %c0_i32 = arith.constant 0 : i32
    %c0_i32_0 = arith.constant 0 : i32
    return %arg0, %c0_i32 : i32, i32
  }
  func.func @transform_1(%arg0: i32) -> (i32, i32) {
    %c0_i32 = arith.constant 0 : i32
    %c0_i32_0 = arith.constant 0 : i32
    %c0_i32_1 = arith.constant 0 : i32
    return %c0_i32, %c0_i32_0 : i32, i32
  }
  func.func @transform_2(%arg0: i32) -> (i32, i32) {
    %c0_i32 = arith.constant 0 : i32
    %c0_i32_0 = arith.constant 0 : i32
    %c0_i32_1 = arith.constant 0 : i32
    return %c0_i32, %c0_i32_0 : i32, i32
  }
  func.func @transform_3(%arg0: i32) -> (i32, i32) {
    %c0_i32 = arith.constant 0 : i32
    %c0_i32_0 = arith.constant 0 : i32
    %c0_i32_1 = arith.constant 0 : i32
    return %c0_i32, %c0_i32_0 : i32, i32
  }
  func.func @transform_4(%arg0: i32) -> (i32, i32) {
    %c0_i32 = arith.constant 0 : i32
    %c0_i32_0 = arith.constant 0 : i32
    %c0_i32_1 = arith.constant 0 : i32
    return %c0_i32, %c0_i32_0 : i32, i32
  }
  func.func @transform_5(%arg0: i32) -> (i32, i32) {
    %c0_i32 = arith.constant 0 : i32
    %c0_i32_0 = arith.constant 0 : i32
    return %arg0, %c0_i32 : i32, i32
  }
}

module attributes {stable_mosaic.version = 11 : i64} {
  func.func @_conv_kernel(%arg0: i32, %arg1: i32, %arg2: memref<128x128xbf16, #tpu.memory_space<vmem>>, %arg3: memref<128x128xbf16, #tpu.memory_space<vmem>>, %arg4: memref<128x128xf32, #tpu.memory_space<vmem>>, %arg5: memref<128x128xf32, #tpu.memory_space<vmem>>, %arg6: memref<1x128xf32, #tpu.memory_space<vmem>>, %arg7: memref<128x128xf32, #tpu.memory_space<vmem>>, %arg8: memref<1x128xf32, #tpu.memory_space<vmem>>, %arg9: memref<128x128xf32, #tpu.memory_space<vmem>>, %arg10: memref<1x128xf32, #tpu.memory_space<vmem>>, %arg11: memref<128x128xf32, #tpu.memory_space<vmem>>, %arg12: memref<1x128xf32, #tpu.memory_space<vmem>>, %arg13: memref<128x128xf32, #tpu.memory_space<vmem>>, %arg14: memref<128x128xf32, #tpu.memory_space<vmem>>) attributes {dimension_semantics = [#tpu.dimension_semantics<parallel>, #tpu.dimension_semantics<arbitrary>], iteration_bounds = array<i64: 3, 3>, scalar_prefetch = 0 : i64, scratch_operands = 1 : i64, tpu.core_type = #tpu.core_type<tc>, window_params = [{transform_indices = @transform_0, window_bounds = array<i64: 128, 128>}, {transform_indices = @transform_1, window_bounds = array<i64: 128, 128>}, {transform_indices = @transform_2, window_bounds = array<i64: 128, 128>}, {pipeline_mode = #tpu.pipeline_mode<synchronous>, transform_indices = @transform_3, window_bounds = array<i64: 128, 128>}, {pipeline_mode = #tpu.pipeline_mode<synchronous>, transform_indices = @transform_4, window_bounds = array<i64: 1, 128>}, {pipeline_mode = #tpu.pipeline_mode<synchronous>, transform_indices = @transform_5, window_bounds = array<i64: 128, 128>}, {pipeline_mode = #tpu.pipeline_mode<synchronous>, transform_indices = @transform_6, window_bounds = array<i64: 1, 128>}, {pipeline_mode = #tpu.pipeline_mode<synchronous>, transform_indices = @transform_7, window_bounds = array<i64: 128, 128>}, {pipeline_mode = #tpu.pipeline_mode<synchronous>, transform_indices = @transform_8, window_bounds = array<i64: 1, 128>}, {pipeline_mode = #tpu.pipeline_mode<synchronous>, transform_indices = @transform_9, window_bounds = array<i64: 128, 128>}, {pipeline_mode = #tpu.pipeline_mode<synchronous>, transform_indices = @transform_10, window_bounds = array<i64: 1, 128>}, {transform_indices = @transform_11, window_bounds = array<i64: 128, 128>}]} {
    %c0_i32 = arith.constant 0 : i32
    %0 = arith.cmpi eq, %arg1, %c0_i32 : i32
    %1 = arith.extui %0 : i1 to i32
    %c0_i32_0 = arith.constant 0 : i32
    %2 = arith.cmpi ne, %1, %c0_i32_0 : i32
    scf.if %2 {
      %cst_9 = arith.constant 0.000000e+00 : f32
      %12 = vector.broadcast %cst_9 : f32 to vector<128x128xf32>
      %c0_10 = arith.constant 0 : index
      %c0_11 = arith.constant 0 : index
      %13 = vector.load %arg14[%c0_10, %c0_11] : memref<128x128xf32, #tpu.memory_space<vmem>>, vector<128x128xf32>
      tpu.vector_store %arg14[%c0_10, %c0_11], %12 {strides = array<i32>} : memref<128x128xf32, #tpu.memory_space<vmem>>, vector<128x128xf32>,
    } else {
    }
    %c0 = arith.constant 0 : index
    %c0_1 = arith.constant 0 : index
    %3 = vector.load %arg14[%c0, %c0_1] : memref<128x128xf32, #tpu.memory_space<vmem>>, vector<128x128xf32>
    %c0_2 = arith.constant 0 : index
    %c0_3 = arith.constant 0 : index
    %4 = vector.load %arg2[%c0_2, %c0_3] : memref<128x128xbf16, #tpu.memory_space<vmem>>, vector<128x128xbf16>
    %c0_4 = arith.constant 0 : index
    %c0_5 = arith.constant 0 : index
    %5 = vector.load %arg3[%c0_4, %c0_5] : memref<128x128xbf16, #tpu.memory_space<vmem>>, vector<128x128xbf16>
    %cst = arith.constant dense<0.000000e+00> : vector<128x128xf32>
    %6 = tpu.matmul %4, %5, %cst {dimension_numbers = #tpu.dot_dimension_numbers<[1], [0], [0], [1], [0, 0, 1, 1], [], []>} : vector<128x128xbf16>, vector<128x128xbf16>, vector<128x128xf32> -> vector<128x128xf32>
    %7 = arith.addf %3, %6 : vector<128x128xf32>
    %c0_6 = arith.constant 0 : index
    %c0_7 = arith.constant 0 : index
    %8 = vector.load %arg14[%c0_6, %c0_7] : memref<128x128xf32, #tpu.memory_space<vmem>>, vector<128x128xf32>
    tpu.vector_store %arg14[%c0_6, %c0_7], %7 {strides = array<i32>} : memref<128x128xf32, #tpu.memory_space<vmem>>, vector<128x128xf32>,
    %c2_i32 = arith.constant 2 : i32
    %9 = arith.cmpi eq, %arg1, %c2_i32 : i32
    %10 = arith.extui %9 : i1 to i32
    %c0_i32_8 = arith.constant 0 : i32
    %11 = arith.cmpi ne, %10, %c0_i32_8 : i32
    scf.if %11 {
      %c0_9 = arith.constant 0 : index
      %c0_10 = arith.constant 0 : index
      %12 = vector.load %arg14[%c0_9, %c0_10] : memref<128x128xf32, #tpu.memory_space<vmem>>, vector<128x128xf32>
      %c0_11 = arith.constant 0 : index
      %c0_12 = arith.constant 0 : index
      %13 = vector.load %arg5[%c0_11, %c0_12] : memref<128x128xf32, #tpu.memory_space<vmem>>, vector<128x128xf32>
      %c0_13 = arith.constant 0 : index
      %c0_14 = arith.constant 0 : index
      %14 = vector.load %arg6[%c0_13, %c0_14] : memref<1x128xf32, #tpu.memory_space<vmem>>, vector<1x128xf32>
      %c0_15 = arith.constant 0 : index
      %c0_16 = arith.constant 0 : index
      %15 = vector.load %arg7[%c0_15, %c0_16] : memref<128x128xf32, #tpu.memory_space<vmem>>, vector<128x128xf32>
      %c0_17 = arith.constant 0 : index
      %c0_18 = arith.constant 0 : index
      %16 = vector.load %arg8[%c0_17, %c0_18] : memref<1x128xf32, #tpu.memory_space<vmem>>, vector<1x128xf32>
      %cst_19 = arith.constant dense<0.000000e+00> : vector<128x128xf32>
      %17 = tpu.matmul %12, %13, %cst_19 {dimension_numbers = #tpu.dot_dimension_numbers<[1], [0], [0], [1], [0, 0, 1, 1], [], []>} : vector<128x128xf32>, vector<128x128xf32>, vector<128x128xf32> -> vector<128x128xf32>
      %18 = vector.broadcast %14 : vector<1x128xf32> to vector<128x128xf32>
      %19 = arith.addf %17, %18 : vector<128x128xf32>
      %cst_20 = arith.constant 0.000000e+00 : f32
      %20 = vector.broadcast %cst_20 : f32 to vector<128x128xf32>
      %21 = arith.maximumf %19, %20 : vector<128x128xf32>
      %cst_21 = arith.constant dense<0.000000e+00> : vector<128x128xf32>
      %22 = tpu.matmul %21, %15, %cst_21 {dimension_numbers = #tpu.dot_dimension_numbers<[1], [0], [0], [1], [0, 0, 1, 1], [], []>} : vector<128x128xf32>, vector<128x128xf32>, vector<128x128xf32> -> vector<128x128xf32>
      %23 = vector.broadcast %16 : vector<1x128xf32> to vector<128x128xf32>
      %24 = arith.addf %22, %23 : vector<128x128xf32>
      %cst_22 = arith.constant 0.000000e+00 : f32
      %25 = vector.broadcast %cst_22 : f32 to vector<128x128xf32>
      %26 = arith.maximumf %24, %25 : vector<128x128xf32>
      %c0_23 = arith.constant 0 : index
      %c0_24 = arith.constant 0 : index
      %27 = vector.load %arg4[%c0_23, %c0_24] : memref<128x128xf32, #tpu.memory_space<vmem>>, vector<128x128xf32>
      %28 = arith.addf %27, %26 : vector<128x128xf32>
      %c0_25 = arith.constant 0 : index
      %c0_26 = arith.constant 0 : index
      %29 = vector.load %arg9[%c0_25, %c0_26] : memref<128x128xf32, #tpu.memory_space<vmem>>, vector<128x128xf32>
      %c0_27 = arith.constant 0 : index
      %c0_28 = arith.constant 0 : index
      %30 = vector.load %arg10[%c0_27, %c0_28] : memref<1x128xf32, #tpu.memory_space<vmem>>, vector<1x128xf32>
      %c0_29 = arith.constant 0 : index
      %c0_30 = arith.constant 0 : index
      %31 = vector.load %arg11[%c0_29, %c0_30] : memref<128x128xf32, #tpu.memory_space<vmem>>, vector<128x128xf32>
      %c0_31 = arith.constant 0 : index
      %c0_32 = arith.constant 0 : index
      %32 = vector.load %arg12[%c0_31, %c0_32] : memref<1x128xf32, #tpu.memory_space<vmem>>, vector<1x128xf32>
      %cst_33 = arith.constant dense<0.000000e+00> : vector<128x128xf32>
      %33 = tpu.matmul %28, %29, %cst_33 {dimension_numbers = #tpu.dot_dimension_numbers<[1], [0], [0], [1], [0, 0, 1, 1], [], []>} : vector<128x128xf32>, vector<128x128xf32>, vector<128x128xf32> -> vector<128x128xf32>
      %34 = vector.broadcast %30 : vector<1x128xf32> to vector<128x128xf32>
      %35 = arith.addf %33, %34 : vector<128x128xf32>
      %cst_34 = arith.constant 0.000000e+00 : f32
      %36 = vector.broadcast %cst_34 : f32 to vector<128x128xf32>
      %37 = arith.maximumf %35, %36 : vector<128x128xf32>
      %cst_35 = arith.constant dense<0.000000e+00> : vector<128x128xf32>
      %38 = tpu.matmul %37, %31, %cst_35 {dimension_numbers = #tpu.dot_dimension_numbers<[1], [0], [0], [1], [0, 0, 1, 1], [], []>} : vector<128x128xf32>, vector<128x128xf32>, vector<128x128xf32> -> vector<128x128xf32>
      %39 = vector.broadcast %32 : vector<1x128xf32> to vector<128x128xf32>
      %40 = arith.addf %38, %39 : vector<128x128xf32>
      %cst_36 = arith.constant 0.000000e+00 : f32
      %41 = vector.broadcast %cst_36 : f32 to vector<128x128xf32>
      %42 = arith.maximumf %40, %41 : vector<128x128xf32>
      %c0_37 = arith.constant 0 : index
      %c0_38 = arith.constant 0 : index
      %43 = vector.load %arg13[%c0_37, %c0_38] : memref<128x128xf32, #tpu.memory_space<vmem>>, vector<128x128xf32>
      tpu.vector_store %arg13[%c0_37, %c0_38], %42 {strides = array<i32>} : memref<128x128xf32, #tpu.memory_space<vmem>>, vector<128x128xf32>,
    } else {
    }
    return
  }
  func.func @transform_0(%arg0: i32, %arg1: i32) -> (i32, i32) {
    %c0_i32 = arith.constant 0 : i32
    return %arg0, %arg1 : i32, i32
  }
  func.func @transform_1(%arg0: i32, %arg1: i32) -> (i32, i32) {
    %c0_i32 = arith.constant 0 : i32
    %c0_i32_0 = arith.constant 0 : i32
    return %arg1, %c0_i32 : i32, i32
  }
  func.func @transform_2(%arg0: i32, %arg1: i32) -> (i32, i32) {
    %c0_i32 = arith.constant 0 : i32
    %c0_i32_0 = arith.constant 0 : i32
    return %arg0, %c0_i32 : i32, i32
  }
  func.func @transform_3(%arg0: i32, %arg1: i32) -> (i32, i32) {
    %c0_i32 = arith.constant 0 : i32
    %c0_i32_0 = arith.constant 0 : i32
    %c0_i32_1 = arith.constant 0 : i32
    return %c0_i32, %c0_i32_0 : i32, i32
  }
  func.func @transform_4(%arg0: i32, %arg1: i32) -> (i32, i32) {
    %c0_i32 = arith.constant 0 : i32
    %c0_i32_0 = arith.constant 0 : i32
    %c0_i32_1 = arith.constant 0 : i32
    return %c0_i32, %c0_i32_0 : i32, i32
  }
  func.func @transform_5(%arg0: i32, %arg1: i32) -> (i32, i32) {
    %c0_i32 = arith.constant 0 : i32
    %c0_i32_0 = arith.constant 0 : i32
    %c0_i32_1 = arith.constant 0 : i32
    return %c0_i32, %c0_i32_0 : i32, i32
  }
  func.func @transform_6(%arg0: i32, %arg1: i32) -> (i32, i32) {
    %c0_i32 = arith.constant 0 : i32
    %c0_i32_0 = arith.constant 0 : i32
    %c0_i32_1 = arith.constant 0 : i32
    return %c0_i32, %c0_i32_0 : i32, i32
  }
  func.func @transform_7(%arg0: i32, %arg1: i32) -> (i32, i32) {
    %c0_i32 = arith.constant 0 : i32
    %c0_i32_0 = arith.constant 0 : i32
    %c0_i32_1 = arith.constant 0 : i32
    return %c0_i32, %c0_i32_0 : i32, i32
  }
  func.func @transform_8(%arg0: i32, %arg1: i32) -> (i32, i32) {
    %c0_i32 = arith.constant 0 : i32
    %c0_i32_0 = arith.constant 0 : i32
    %c0_i32_1 = arith.constant 0 : i32
    return %c0_i32, %c0_i32_0 : i32, i32
  }
  func.func @transform_9(%arg0: i32, %arg1: i32) -> (i32, i32) {
    %c0_i32 = arith.constant 0 : i32
    %c0_i32_0 = arith.constant 0 : i32
    %c0_i32_1 = arith.constant 0 : i32
    return %c0_i32, %c0_i32_0 : i32, i32
  }
  func.func @transform_10(%arg0: i32, %arg1: i32) -> (i32, i32) {
    %c0_i32 = arith.constant 0 : i32
    %c0_i32_0 = arith.constant 0 : i32
    %c0_i32_1 = arith.constant 0 : i32
    return %c0_i32, %c0_i32_0 : i32, i32
  }
  func.func @transform_11(%arg0: i32, %arg1: i32) -> (i32, i32) {
    %c0_i32 = arith.constant 0 : i32
    %c0_i32_0 = arith.constant 0 : i32
    return %arg0, %c0_i32 : i32, i32
  }
}

module attributes {stable_mosaic.version = 11 : i64} {
  func.func @_head_kernel(%arg0: i32, %arg1: memref<128x128xf32, #tpu.memory_space<vmem>>, %arg2: memref<128x128xf32, #tpu.memory_space<vmem>>, %arg3: memref<1x128xf32, #tpu.memory_space<vmem>>, %arg4: memref<128x128xf32, #tpu.memory_space<vmem>>) attributes {dimension_semantics = [#tpu.dimension_semantics<parallel>], iteration_bounds = array<i64: 3>, scalar_prefetch = 0 : i64, scratch_operands = 0 : i64, tpu.core_type = #tpu.core_type<tc>, window_params = [{transform_indices = @transform_0, window_bounds = array<i64: 128, 128>}, {pipeline_mode = #tpu.pipeline_mode<synchronous>, transform_indices = @transform_1, window_bounds = array<i64: 128, 128>}, {pipeline_mode = #tpu.pipeline_mode<synchronous>, transform_indices = @transform_2, window_bounds = array<i64: 1, 128>}, {transform_indices = @transform_3, window_bounds = array<i64: 128, 128>}]} {
    %c0 = arith.constant 0 : index
    %c0_0 = arith.constant 0 : index
    %0 = vector.load %arg1[%c0, %c0_0] : memref<128x128xf32, #tpu.memory_space<vmem>>, vector<128x128xf32>
    %c0_1 = arith.constant 0 : index
    %c0_2 = arith.constant 0 : index
    %1 = vector.load %arg2[%c0_1, %c0_2] : memref<128x128xf32, #tpu.memory_space<vmem>>, vector<128x128xf32>
    %c0_3 = arith.constant 0 : index
    %c0_4 = arith.constant 0 : index
    %2 = vector.load %arg3[%c0_3, %c0_4] : memref<1x128xf32, #tpu.memory_space<vmem>>, vector<1x128xf32>
    %cst = arith.constant dense<0.000000e+00> : vector<128x128xf32>
    %3 = tpu.matmul %0, %1, %cst {dimension_numbers = #tpu.dot_dimension_numbers<[1], [0], [0], [1], [0, 0, 1, 1], [], []>} : vector<128x128xf32>, vector<128x128xf32>, vector<128x128xf32> -> vector<128x128xf32>
    %4 = vector.broadcast %2 : vector<1x128xf32> to vector<128x128xf32>
    %5 = arith.addf %3, %4 : vector<128x128xf32>
    %6 = arith.negf %5 : vector<128x128xf32>
    %7 = math.exp %6 : vector<128x128xf32>
    %cst_5 = arith.constant 1.000000e+00 : f32
    %8 = vector.broadcast %cst_5 : f32 to vector<128x128xf32>
    %9 = arith.addf %8, %7 : vector<128x128xf32>
    %10 = arith.divf %8, %9 : vector<128x128xf32>
    %c0_6 = arith.constant 0 : index
    %c0_7 = arith.constant 0 : index
    %11 = vector.load %arg4[%c0_6, %c0_7] : memref<128x128xf32, #tpu.memory_space<vmem>>, vector<128x128xf32>
    tpu.vector_store %arg4[%c0_6, %c0_7], %10 {strides = array<i32>} : memref<128x128xf32, #tpu.memory_space<vmem>>, vector<128x128xf32>,
    return
  }
  func.func @transform_0(%arg0: i32) -> (i32, i32) {
    %c0_i32 = arith.constant 0 : i32
    %c0_i32_0 = arith.constant 0 : i32
    return %arg0, %c0_i32 : i32, i32
  }
  func.func @transform_1(%arg0: i32) -> (i32, i32) {
    %c0_i32 = arith.constant 0 : i32
    %c0_i32_0 = arith.constant 0 : i32
    %c0_i32_1 = arith.constant 0 : i32
    return %c0_i32, %c0_i32_0 : i32, i32
  }
  func.func @transform_2(%arg0: i32) -> (i32, i32) {
    %c0_i32 = arith.constant 0 : i32
    %c0_i32_0 = arith.constant 0 : i32
    %c0_i32_1 = arith.constant 0 : i32
    return %c0_i32, %c0_i32_0 : i32, i32
  }
  func.func @transform_3(%arg0: i32) -> (i32, i32) {
    %c0_i32 = arith.constant 0 : i32
    %c0_i32_0 = arith.constant 0 : i32
    return %arg0, %c0_i32 : i32, i32
  }
}

</mosaic_0001>

<llo_original>
// kernel: net_forward.7
$region0: #{net_forward.7}
  #allocation0 [shape = 'u32[]', space=smem, size = 0x4, offset = 0x4, fixed_abs, tag = 'smem constant byte address 0x4 - core index']
  #allocation1 [shape = 'u32[144,128]{1,0:T(1,128)}', space=vmem, size = 0x12000, scoped, tag = 'internal scratch']
  %s0 = inlined_call_operand.vmem [shape: f32[384,128], index: 0, kind: input, shape index: {}]
  %s1 = inlined_call_operand.vmem [shape: f32[128,128], index: 1, kind: input, shape index: {}]
  %s2 = inlined_call_operand.vmem [shape: f32[1,128], index: 2, kind: input, shape index: {}]
  %s3 = inlined_call_operand.vmem [shape: f32[128,128], index: 3, kind: input, shape index: {}]
  %s4 = inlined_call_operand.vmem [shape: f32[1,128], index: 4, kind: input, shape index: {}]
  %s5 = inlined_call_operand.vmem [shape: f32[384,128], index: 5, kind: output, shape index: {}]
  %s6 = sld [smem:[#allocation0]]
  $region53: #{net_forward.7} parent=0
    _
  %s8 = ssub.s32 1, %s6
  %s9 = scalar_select 0, %s8, %s6
  loop: start=0, step=1, limit=5
  $region2: #{net_forward.7} parent=0 // loop_pre_header
    _
  $region3: #{net_forward.7} parent=0 // loop_header
    %s11 = sphi 0, %s15
    %p12 = scmp.ge.s32.totalorder %s11, 5
    %s21 = sphi 0, %s23
    %s24 = sphi 0, %s21
    %s25 = sphi 0, %s24
    %s41 = sphi 0, %s25
    %s45 = sphi 0, %s45
    %s47 = sphi 0, %s45
    %s48 = sphi 0, %s47
    %s62 = sphi 0, %s48
    %s66 = sphi 0, %s66
    %s68 = sphi 0, %s66
    %s69 = sphi 0, %s68
    %s83 = sphi 0, %s69
    %s87 = sphi 0, %s87
    %s89 = sphi 0, %s87
    %s90 = sphi 0, %s89
    %s104 = sphi 0, %s90
    %s108 = sphi 0, %s108
    %s110 = sphi 0, %s108
    %s111 = sphi 0, %s110
    %s125 = sphi 0, %s111
    %s131 = sphi 0, %s133
    %s134 = sphi 0, %s131
    %s135 = sphi 0, %s134
    %s151 = sphi 0, %s135
  $region4: #{net_forward.7} parent=0 // loop_header_branch
    %14 = sbr.rel (%p12) target = $region8
  $region5: #{net_forward.7} parent=0 // loop_body
    %s16 = ssub.s32 %s11, 1
    %s17 = ssub.s32 %s11, 2
    %s18 = sadd.s32 %s11, 1
    %s19 = ssub.s32 %s11, %s18
    %p20 = scmp.eq.s32.totalorder %s19, 0
    %s22 = sadd.s32 %s21, 1
    %s23 = scalar_select %p20, %s21, %s22
    %p26 = pneg %p20
    %p27 = scmp.eq.s32.totalorder %s11, 2
    %p28 = por %p26, %p27
    %p29 = scmp.ne.s32.totalorder %s21, %s24
    %p30 = scmp.eq.s32.totalorder %s11, 0
    %p31 = por %p29, %p30
    %p32 = scmp.ne.s32.totalorder %s21, %s24
    %p33 = scmp.eq.s32.totalorder %s16, 2
    %p34 = por %p32, %p33
    %p35 = scmp.ne.s32.totalorder %s24, %s25
    %p36 = scmp.eq.s32.totalorder %s16, 0
    %p37 = por %p35, %p36
    %p38 = scmp.ne.s32.totalorder %s24, %s25
    %p39 = scmp.eq.s32.totalorder %s17, 2
    %p40 = por %p38, %p39
    %p42 = scmp.ne.s32.totalorder %s25, %s41
    %p43 = scmp.eq.s32.totalorder %s17, 0
    %p44 = por %p42, %p43
    %s46 = sadd.s32 %s45, 1
    %p49 = scmp.eq.s32.totalorder %s11, 2
    %p50 = scmp.ne.s32.totalorder %s45, %s47
    %p51 = scmp.eq.s32.totalorder %s11, 0
    %p52 = por %p50, %p51
    %p53 = scmp.ne.s32.totalorder %s45, %s47
    %p54 = scmp.eq.s32.totalorder %s16, 2
    %p55 = por %p53, %p54
    %p56 = scmp.ne.s32.totalorder %s47, %s48
    %p57 = scmp.eq.s32.totalorder %s16, 0
    %p58 = por %p56, %p57
    %p59 = scmp.ne.s32.totalorder %s47, %s48
    %p60 = scmp.eq.s32.totalorder %s17, 2
    %p61 = por %p59, %p60
    %p63 = scmp.ne.s32.totalorder %s48, %s62
    %p64 = scmp.eq.s32.totalorder %s17, 0
    %p65 = por %p63, %p64
    %s67 = sadd.s32 %s66, 1
    %p70 = scmp.eq.s32.totalorder %s11, 2
    %p71 = scmp.ne.s32.totalorder %s66, %s68
    %p72 = scmp.eq.s32.totalorder %s11, 0
    %p73 = por %p71, %p72
    %p74 = scmp.ne.s32.totalorder %s66, %s68
    %p75 = scmp.eq.s32.totalorder %s16, 2
    %p76 = por %p74, %p75
    %p77 = scmp.ne.s32.totalorder %s68, %s69
    %p78 = scmp.eq.s32.totalorder %s16, 0
    %p79 = por %p77, %p78
    %p80 = scmp.ne.s32.totalorder %s68, %s69
    %p81 = scmp.eq.s32.totalorder %s17, 2
    %p82 = por %p80, %p81
    %p84 = scmp.ne.s32.totalorder %s69, %s83
    %p85 = scmp.eq.s32.totalorder %s17, 0
    %p86 = por %p84, %p85
    %s88 = sadd.s32 %s87, 1
    %p91 = scmp.eq.s32.totalorder %s11, 2
    %p92 = scmp.ne.s32.totalorder %s87, %s89
    %p93 = scmp.eq.s32.totalorder %s11, 0
    %p94 = por %p92, %p93
    %p95 = scmp.ne.s32.totalorder %s87, %s89
    %p96 = scmp.eq.s32.totalorder %s16, 2
    %p97 = por %p95, %p96
    %p98 = scmp.ne.s32.totalorder %s89, %s90
    %p99 = scmp.eq.s32.totalorder %s16, 0
    %p100 = por %p98, %p99
    %p101 = scmp.ne.s32.totalorder %s89, %s90
    %p102 = scmp.eq.s32.totalorder %s17, 2
    %p103 = por %p101, %p102
    %p105 = scmp.ne.s32.totalorder %s90, %s104
    %p106 = scmp.eq.s32.totalorder %s17, 0
    %p107 = por %p105, %p106
    %s109 = sadd.s32 %s108, 1
    %p112 = scmp.eq.s32.totalorder %s11, 2
    %p113 = scmp.ne.s32.totalorder %s108, %s110
    %p114 = scmp.eq.s32.totalorder %s11, 0
    %p115 = por %p113, %p114
    %p116 = scmp.ne.s32.totalorder %s108, %s110
    %p117 = scmp.eq.s32.totalorder %s16, 2
    %p118 = por %p116, %p117
    %p119 = scmp.ne.s32.totalorder %s110, %s111
    %p120 = scmp.eq.s32.totalorder %s16, 0
    %p121 = por %p119, %p120
    %p122 = scmp.ne.s32.totalorder %s110, %s111
    %p123 = scmp.eq.s32.totalorder %s17, 2
    %p124 = por %p122, %p123
    %p126 = scmp.ne.s32.totalorder %s111, %s125
    %p127 = scmp.eq.s32.totalorder %s17, 0
    %p128 = por %p126, %p127
    %s129 = ssub.s32 %s11, %s18
    %p130 = scmp.eq.s32.totalorder %s129, 0
    %s132 = sadd.s32 %s131, 1
    %s133 = scalar_select %p130, %s131, %s132
    %p136 = pneg %p130
    %p137 = scmp.eq.s32.totalorder %s11, 2
    %p138 = por %p136, %p137
    %p139 = scmp.ne.s32.totalorder %s131, %s134
    %p140 = scmp.eq.s32.totalorder %s11, 0
    %p141 = por %p139, %p140
    %p142 = scmp.ne.s32.totalorder %s131, %s134
    %p143 = scmp.eq.s32.totalorder %s16, 2
    %p144 = por %p142, %p143
    %p145 = scmp.ne.s32.totalorder %s134, %s135
    %p146 = scmp.eq.s32.totalorder %s16, 0
    %p147 = por %p145, %p146
    %p148 = scmp.ne.s32.totalorder %s134, %s135
    %p149 = scmp.eq.s32.totalorder %s17, 2
    %p150 = por %p148, %p149
    %p152 = scmp.ne.s32.totalorder %s135, %s151
    %p153 = scmp.eq.s32.totalorder %s17, 0
    %p154 = por %p152, %p153
    %p155 = scmp.le.s32.totalorder 1, %s11
    %p156 = scmp.lt.s32.totalorder %s11, 4
    %p157 = pnand %p155, %p156
    %p158 = pneg %p157
    // Predicated region
    $region9: #{net_forward.7} parent=5 // pred_check
      _
    $region10: #{net_forward.7} parent=5 // pred_check_branch
      %160 = sbr.rel (%p157) target = $region12
    $region11: #{net_forward.7} parent=5 // pred_region
      %s161 = ssub.s32 %s11, 1
      // Predicated region
      $region13: #{net_forward.7} parent=11 // pred_check
        %p162 = pneg %p58
      $region14: #{net_forward.7} parent=11 // pred_check_branch
        %164 = sbr.rel (%p162) target = $region16
      $region15: #{net_forward.7} parent=11 // pred_region
        _
      $region16: #{net_forward.7} parent=11 // pred_fallthru
        _
      // Predicated region
      $region17: #{net_forward.7} parent=11 // pred_check
        %p165 = pneg %p79
      $region18: #{net_forward.7} parent=11 // pred_check_branch
        %167 = sbr.rel (%p165) target = $region20
      $region19: #{net_forward.7} parent=11 // pred_region
        _
      $region20: #{net_forward.7} parent=11 // pred_fallthru
        _
      // Predicated region
      $region21: #{net_forward.7} parent=11 // pred_check
        %p168 = pneg %p100
      $region22: #{net_forward.7} parent=11 // pred_check_branch
        %170 = sbr.rel (%p168) target = $region24
      $region23: #{net_forward.7} parent=11 // pred_region
        _
      $region24: #{net_forward.7} parent=11 // pred_fallthru
        _
      // Predicated region
      $region25: #{net_forward.7} parent=11 // pred_check
        %p171 = pneg %p121
      $region26: #{net_forward.7} parent=11 // pred_check_branch
        %173 = sbr.rel (%p171) target = $region28
      $region27: #{net_forward.7} parent=11 // pred_region
        _
      $region28: #{net_forward.7} parent=11 // pred_fallthru
        _
    $region12: #{net_forward.7} parent=5 // pred_fallthru
      _
    %p174 = scmp.lt.s32.totalorder %s11, 3
    // Predicated region
    $region29: #{net_forward.7} parent=5 // pred_check
      %p175 = pneg %p174
    $region30: #{net_forward.7} parent=5 // pred_check_branch
      %177 = sbr.rel (%p175) target = $region32
    $region31: #{net_forward.7} parent=5 // pred_region
      // Predicated region
      $region33: #{net_forward.7} parent=31 // pred_check
        %p178 = pneg %p31
      $region34: #{net_forward.7} parent=31 // pred_check_branch
        %180 = sbr.rel (%p178) target = $region36
      $region35: #{net_forward.7} parent=31 // pred_region
        %s181 = smul.u32 16, %s11
        %p182 = scmp.lt.s32.totalorder %s181, 47
        %s183 = scalar_select %p182, %s181, 47
        %s184 = smul.addr %s183, 8
        %s185 = scalar_lea.vmem %s0, %s184
        %s186 = smul.u32 16, %s11
      $region36: #{net_forward.7} parent=31 // pred_fallthru
        _
    $region32: #{net_forward.7} parent=5 // pred_fallthru
      _
    %p187 = scmp.le.s32.totalorder 1, %s11
    %p188 = scmp.lt.s32.totalorder %s11, 4
    %p189 = pnand %p187, %p188
    %p190 = pneg %p189
    // Predicated region
    $region37: #{net_forward.7} parent=5 // pred_check
      _
    $region38: #{net_forward.7} parent=5 // pred_check_branch
      %192 = sbr.rel (%p189) target = $region40
    $region39: #{net_forward.7} parent=5 // pred_region
      %s193 = ssub.s32 %s11, 1
      %s194 = smul.u32 16, %s16
      %p195 = scmp.lt.s32.totalorder %s194, 47
      %s196 = scalar_select %p195, %s194, 47
      %s197 = smul.addr %s196, 8
      %s198 = scalar_lea.vmem %s0, %s197
      %p199 = pneg %p37
      %p200 = pneg %p34
      %p201 = pneg %p58
      %p202 = pneg %p55
      %p203 = pneg %p79
      %p204 = pneg %p76
      %p205 = pneg %p100
      %p206 = pneg %p97
      %p207 = pneg %p121
      %p208 = pneg %p118
      %p209 = pneg %p147
      %p210 = pneg %p144
      %s211 = smul.u32 16, %s16
      %p212 = scmp.lt.s32.totalorder %s211, 47
      %s213 = scalar_select %p212, %s211, 47
      %s214 = smul.addr %s213, 8
      %s215 = scalar_lea.vmem %s5, %s214
      %s216 = smul.u32 16, %s16
      %p217 = scmp.lt.s32.totalorder %s216, 47
      %s218 = scalar_select %p217, %s216, 47
      %s219 = smul.addr %s218, 8
      %s220 = scalar_lea.vmem %s0, %s219
      %s221 = smul.u32 16, %s16
      %s222 = smul.u32 16, %s16
      %p223 = scmp.lt.s32.totalorder %s222, 47
      %s224 = scalar_select %p223, %s222, 47
      %s225 = smul.addr %s224, 8
      %s226 = scalar_lea.vmem %s5, %s225
      %s227 = smul.u32 16, %s16
      %v228 = vld [vmem:[%s220] sm:$0xff]
      %v229 = vld [vmem:[%s220 + $0x8] sm:$0xff]
      %v230 = vld [vmem:[%s220 + $0x10] sm:$0xff]
      %v231 = vld [vmem:[%s220 + $0x18] sm:$0xff]
      %v232 = vld [vmem:[%s220 + $0x20] sm:$0xff]
      %v233 = vld [vmem:[%s220 + $0x28] sm:$0xff]
      %v234 = vld [vmem:[%s220 + $0x30] sm:$0xff]
      %v235 = vld [vmem:[%s220 + $0x38] sm:$0xff]
      %v236 = vld [vmem:[%s220 + $0x40] sm:$0xff]
      %v237 = vld [vmem:[%s220 + $0x48] sm:$0xff]
      %v238 = vld [vmem:[%s220 + $0x50] sm:$0xff]
      %v239 = vld [vmem:[%s220 + $0x58] sm:$0xff]
      %v240 = vld [vmem:[%s220 + $0x60] sm:$0xff]
      %v241 = vld [vmem:[%s220 + $0x68] sm:$0xff]
      %v242 = vld [vmem:[%s220 + $0x70] sm:$0xff]
      %v243 = vld [vmem:[%s220 + $0x78] sm:$0xff]
      %v244 = vld [vmem:[%s1] sm:$0xff]
      %v245 = vld [vmem:[%s1 + $0x8] sm:$0xff]
      %v246 = vld [vmem:[%s1 + $0x10] sm:$0xff]
      %v247 = vld [vmem:[%s1 + $0x18] sm:$0xff]
      %v248 = vld [vmem:[%s1 + $0x20] sm:$0xff]
      %v249 = vld [vmem:[%s1 + $0x28] sm:$0xff]
      %v250 = vld [vmem:[%s1 + $0x30] sm:$0xff]
      %v251 = vld [vmem:[%s1 + $0x38] sm:$0xff]
      %v252 = vld [vmem:[%s1 + $0x40] sm:$0xff]
      %v253 = vld [vmem:[%s1 + $0x48] sm:$0xff]
      %v254 = vld [vmem:[%s1 + $0x50] sm:$0xff]
      %v255 = vld [vmem:[%s1 + $0x58] sm:$0xff]
      %v256 = vld [vmem:[%s1 + $0x60] sm:$0xff]
      %v257 = vld [vmem:[%s1 + $0x68] sm:$0xff]
      %v258 = vld [vmem:[%s1 + $0x70] sm:$0xff]
      %v259 = vld [vmem:[%s1 + $0x78] sm:$0xff]
      %v260 = vld [vmem:[%s2] sm:$0x1]
      %v261 = vld [vmem:[%s3] sm:$0xff]
      %v262 = vld [vmem:[%s3 + $0x8] sm:$0xff]
      %v263 = vld [vmem:[%s3 + $0x10] sm:$0xff]
      %v264 = vld [vmem:[%s3 + $0x18] sm:$0xff]
      %v265 = vld [vmem:[%s3 + $0x20] sm:$0xff]
      %v266 = vld [vmem:[%s3 + $0x28] sm:$0xff]
      %v267 = vld [vmem:[%s3 + $0x30] sm:$0xff]
      %v268 = vld [vmem:[%s3 + $0x38] sm:$0xff]
      %v269 = vld [vmem:[%s3 + $0x40] sm:$0xff]
      %v270 = vld [vmem:[%s3 + $0x48] sm:$0xff]
      %v271 = vld [vmem:[%s3 + $0x50] sm:$0xff]
      %v272 = vld [vmem:[%s3 + $0x58] sm:$0xff]
      %v273 = vld [vmem:[%s3 + $0x60] sm:$0xff]
      %v274 = vld [vmem:[%s3 + $0x68] sm:$0xff]
      %v275 = vld [vmem:[%s3 + $0x70] sm:$0xff]
      %v276 = vld [vmem:[%s3 + $0x78] sm:$0xff]
      %v277 = vld [vmem:[%s4] sm:$0x1]
      %v279 = vlaneseq
      %v280 = vshrl.u32 %v279, 7
      %v281 = vsub.s32 0, %v280
      %v282 = vrot.slane %v260, %v281
      %284 = vmatprep.subr.mxu0 0.0
      %285 = vmatpush1.msra.mxu0 %v244
      %286 = vmatprep.subr.mxu0 0.0
      %287 = vmatpush1.msra.mxu0 %v245
      %288 = vmatprep.subr.mxu0 0.0
      %289 = vmatpush1.msra.mxu0 %v246
      %290 = vmatprep.subr.mxu0 0.0
      %291 = vmatpush1.msra.mxu0 %v247
      %292 = vmatprep.subr.mxu0 0.0
      %293 = vmatpush1.msra.mxu0 %v248
      %294 = vmatprep.subr.mxu0 0.0
      %295 = vmatpush1.msra.mxu0 %v249
      %296 = vmatprep.subr.mxu0 0.0
      %297 = vmatpush1.msra.mxu0 %v250
      %298 = vmatprep.subr.mxu0 0.0
      %299 = vmatpush1.msra.mxu0 %v251
      %300 = vmatprep.subr.mxu0 0.0
      %301 = vmatpush1.msra.mxu0 %v252
      %302 = vmatprep.subr.mxu0 0.0
      %303 = vmatpush1.msra.mxu0 %v253
      %304 = vmatprep.subr.mxu0 0.0
      %305 = vmatpush1.msra.mxu0 %v254
      %306 = vmatprep.subr.mxu0 0.0
      %307 = vmatpush1.msra.mxu0 %v255
      %308 = vmatprep.subr.mxu0 0.0
      %309 = vmatpush1.msra.mxu0 %v256
      %310 = vmatprep.subr.mxu0 0.0
      %311 = vmatpush1.msra.mxu0 %v257
      %312 = vmatprep.subr.mxu0 0.0
      %313 = vmatpush1.msra.mxu0 %v258
      %314 = vmatprep.subr.mxu0 0.0
      %315 = vmatpush1.msra.mxu0 %v259
      %316 = vmatprep.subr.mxu0 0.0
      %317 = vmatpush1.msra.mxu0 0.0
      %318 = vmatprep.subr.mxu0 0.0
      %319 = vmatpush1.msra.mxu0 0.0
      %320 = vmatprep.subr.mxu0 0.0
      %321 = vmatpush1.msra.mxu0 0.0
      %322 = vmatprep.subr.mxu0 0.0
      %323 = vmatpush1.msra.mxu0 0.0
      %324 = vmatprep.subr.mxu0 0.0
      %325 = vmatpush1.msra.mxu0 0.0
      %326 = vmatprep.subr.mxu0 0.0
      %327 = vmatpush1.msra.mxu0 0.0
      %328 = vmatprep.subr.mxu0 0.0
      %329 = vmatpush1.msra.mxu0 0.0
      %330 = vmatprep.subr.mxu0 0.0
      %331 = vmatpush1.msra.mxu0 0.0
      %332 = vmatprep.subr.mxu0 0.0
      %333 = vmatpush1.msra.mxu0 0.0
      %334 = vmatprep.subr.mxu0 0.0
      %335 = vmatpush1.msra.mxu0 0.0
      %336 = vmatprep.subr.mxu0 0.0
      %337 = vmatpush1.msra.mxu0 0.0
      %338 = vmatprep.subr.mxu0 0.0
      %339 = vmatpush1.msra.mxu0 0.0
      %340 = vmatprep.subr.mxu0 0.0
      %341 = vmatpush1.msra.mxu0 0.0
      %342 = vmatprep.subr.mxu0 0.0
      %343 = vmatpush1.msra.mxu0 0.0
      %344 = vmatprep.subr.mxu0 0.0
      %345 = vmatpush1.msra.mxu0 0.0
      %346 = vmatprep.subr.mxu0 0.0
      %347 = vmatpush1.msra.mxu0 0.0
      %348 = vmatprep.mubr.f32.mxu0 0.0
      %349 = vmatmul.mubr.f32.gmra.mrb[0].mxu0 %v228
      %v350 = vpop.f32.mrb[0].mxu0
      %v351 = vadd.f32 %v282, %v350
      %v352 = vpop.f32.mrb[0].mxu0
      %353 = vmatprep.mubr.f32.mxu0 0.0
      %354 = vmatmul.mubr.f32.gmra.mrb[0].mxu0 %v229
      %v355 = vpop.f32.mrb[0].mxu0
      %v356 = vadd.f32 %v282, %v355
      %v357 = vpop.f32.mrb[0].mxu0
      %358 = vmatprep.mubr.f32.mxu0 0.0
      %359 = vmatmul.mubr.f32.gmra.mrb[0].mxu0 %v230
      %v360 = vpop.f32.mrb[0].mxu0
      %v361 = vadd.f32 %v282, %v360
      %v362 = vpop.f32.mrb[0].mxu0
      %363 = vmatprep.mubr.f32.mxu0 0.0
      %364 = vmatmul.mubr.f32.gmra.mrb[0].mxu0 %v231
      %v365 = vpop.f32.mrb[0].mxu0
      %v366 = vadd.f32 %v282, %v365
      %v367 = vpop.f32.mrb[0].mxu0
      %368 = vmatprep.mubr.f32.mxu0 0.0
      %369 = vmatmul.mubr.f32.gmra.mrb[0].mxu0 %v232
      %v370 = vpop.f32.mrb[0].mxu0
      %v371 = vadd.f32 %v282, %v370
      %v372 = vpop.f32.mrb[0].mxu0
      %373 = vmatprep.mubr.f32.mxu0 0.0
      %374 = vmatmul.mubr.f32.gmra.mrb[0].mxu0 %v233
      %v375 = vpop.f32.mrb[0].mxu0
      %v376 = vadd.f32 %v282, %v375
      %v377 = vpop.f32.mrb[0].mxu0
      %378 = vmatprep.mubr.f32.mxu0 0.0
      %379 = vmatmul.mubr.f32.gmra.mrb[0].mxu0 %v234
      %v380 = vpop.f32.mrb[0].mxu0
      %v381 = vadd.f32 %v282, %v380
      %v382 = vpop.f32.mrb[0].mxu0
      %383 = vmatprep.mubr.f32.mxu0 0.0
      %384 = vmatmul.mubr.f32.gmra.mrb[0].mxu0 %v235
      %v385 = vpop.f32.mrb[0].mxu0
      %v386 = vadd.f32 %v282, %v385
      %v387 = vpop.f32.mrb[0].mxu0
      %388 = vmatprep.mubr.f32.mxu0 0.0
      %389 = vmatmul.mubr.f32.gmra.mrb[0].mxu0 %v236
      %v390 = vpop.f32.mrb[0].mxu0
      %v391 = vadd.f32 %v282, %v390
      %v392 = vpop.f32.mrb[0].mxu0
      %393 = vmatprep.mubr.f32.mxu0 0.0
      %394 = vmatmul.mubr.f32.gmra.mrb[0].mxu0 %v237
      %v395 = vpop.f32.mrb[0].mxu0
      %v396 = vadd.f32 %v282, %v395
      %v397 = vpop.f32.mrb[0].mxu0
      %398 = vmatprep.mubr.f32.mxu0 0.0
      %399 = vmatmul.mubr.f32.gmra.mrb[0].mxu0 %v238
      %v400 = vpop.f32.mrb[0].mxu0
      %v401 = vadd.f32 %v282, %v400
      %v402 = vpop.f32.mrb[0].mxu0
      %403 = vmatprep.mubr.f32.mxu0 0.0
      %404 = vmatmul.mubr.f32.gmra.mrb[0].mxu0 %v239
      %v405 = vpop.f32.mrb[0].mxu0
      %v406 = vadd.f32 %v282, %v405
      %v407 = vpop.f32.mrb[0].mxu0
      %408 = vmatprep.mubr.f32.mxu0 0.0
      %409 = vmatmul.mubr.f32.gmra.mrb[0].mxu0 %v240
      %v410 = vpop.f32.mrb[0].mxu0
      %v411 = vadd.f32 %v282, %v410
      %v412 = vpop.f32.mrb[0].mxu0
      %413 = vmatprep.mubr.f32.mxu0 0.0
      %414 = vmatmul.mubr.f32.gmra.mrb[0].mxu0 %v241
      %v415 = vpop.f32.mrb[0].mxu0
      %v416 = vadd.f32 %v282, %v415
      %v417 = vpop.f32.mrb[0].mxu0
      %418 = vmatprep.mubr.f32.mxu0 0.0
      %419 = vmatmul.mubr.f32.gmra.mrb[0].mxu0 %v242
      %v420 = vpop.f32.mrb[0].mxu0
      %v421 = vadd.f32 %v282, %v420
      %v422 = vpop.f32.mrb[0].mxu0
      %423 = vmatprep.mubr.f32.mxu0 0.0
      %424 = vmatmul.mubr.f32.gmra.mrb[0].mxu0 %v243
      %v425 = vpop.f32.mrb[0].mxu0
      %v426 = vadd.f32 %v282, %v425
      %v427 = vpop.f32.mrb[0].mxu0
      %428 = vdwg.mxu0
      %v429 = vmax.f32 %v351, 0.0
      %v430 = vmax.f32 %v356, 0.0
      %v431 = vmax.f32 %v361, 0.0
      %v432 = vmax.f32 %v366, 0.0
      %v433 = vmax.f32 %v371, 0.0
      %v434 = vmax.f32 %v376, 0.0
      %v435 = vmax.f32 %v381, 0.0
      %v436 = vmax.f32 %v386, 0.0
      %v437 = vmax.f32 %v391, 0.0
      %v438 = vmax.f32 %v396, 0.0
      %v439 = vmax.f32 %v401, 0.0
      %v440 = vmax.f32 %v406, 0.0
      %v441 = vmax.f32 %v411, 0.0
      %v442 = vmax.f32 %v416, 0.0
      %v443 = vmax.f32 %v421, 0.0
      %v444 = vmax.f32 %v426, 0.0
      %v446 = vlaneseq
      %v447 = vshrl.u32 %v446, 7
      %v448 = vsub.s32 0, %v447
      %v449 = vrot.slane %v277, %v448
      %451 = vmatprep.subr.mxu0 0.0
      %452 = vmatpush1.msra.mxu0 %v261
      %453 = vmatprep.subr.mxu0 0.0
      %454 = vmatpush1.msra.mxu0 %v262
      %455 = vmatprep.subr.mxu0 0.0
      %456 = vmatpush1.msra.mxu0 %v263
      %457 = vmatprep.subr.mxu0 0.0
      %458 = vmatpush1.msra.mxu0 %v264
      %459 = vmatprep.subr.mxu0 0.0
      %460 = vmatpush1.msra.mxu0 %v265
      %461 = vmatprep.subr.mxu0 0.0
      %462 = vmatpush1.msra.mxu0 %v266
      %463 = vmatprep.subr.mxu0 0.0
      %464 = vmatpush1.msra.mxu0 %v267
      %465 = vmatprep.subr.mxu0 0.0
      %466 = vmatpush1.msra.mxu0 %v268
      %467 = vmatprep.subr.mxu0 0.0
      %468 = vmatpush1.msra.mxu0 %v269
      %469 = vmatprep.subr.mxu0 0.0
      %470 = vmatpush1.msra.mxu0 %v270
      %471 = vmatprep.subr.mxu0 0.0
      %472 = vmatpush1.msra.mxu0 %v271
      %473 = vmatprep.subr.mxu0 0.0
      %474 = vmatpush1.msra.mxu0 %v272
      %475 = vmatprep.subr.mxu0 0.0
      %476 = vmatpush1.msra.mxu0 %v273
      %477 = vmatprep.subr.mxu0 0.0
      %478 = vmatpush1.msra.mxu0 %v274
      %479 = vmatprep.subr.mxu0 0.0
      %480 = vmatpush1.msra.mxu0 %v275
      %481 = vmatprep.subr.mxu0 0.0
      %482 = vmatpush1.msra.mxu0 %v276
      %483 = vmatprep.subr.mxu0 0.0
      %484 = vmatpush1.msra.mxu0 0.0
      %485 = vmatprep.subr.mxu0 0.0
      %486 = vmatpush1.msra.mxu0 0.0
      %487 = vmatprep.subr.mxu0 0.0
      %488 = vmatpush1.msra.mxu0 0.0
      %489 = vmatprep.subr.mxu0 0.0
      %490 = vmatpush1.msra.mxu0 0.0
      %491 = vmatprep.subr.mxu0 0.0
      %492 = vmatpush1.msra.mxu0 0.0
      %493 = vmatprep.subr.mxu0 0.0
      %494 = vmatpush1.msra.mxu0 0.0
      %495 = vmatprep.subr.mxu0 0.0
      %496 = vmatpush1.msra.mxu0 0.0
      %497 = vmatprep.subr.mxu0 0.0
      %498 = vmatpush1.msra.mxu0 0.0
      %499 = vmatprep.subr.mxu0 0.0
      %500 = vmatpush1.msra.mxu0 0.0
      %501 = vmatprep.subr.mxu0 0.0
      %502 = vmatpush1.msra.mxu0 0.0
      %503 = vmatprep.subr.mxu0 0.0
      %504 = vmatpush1.msra.mxu0 0.0
      %505 = vmatprep.subr.mxu0 0.0
      %506 = vmatpush1.msra.mxu0 0.0
      %507 = vmatprep.subr.mxu0 0.0
      %508 = vmatpush1.msra.mxu0 0.0
      %509 = vmatprep.subr.mxu0 0.0
      %510 = vmatpush1.msra.mxu0 0.0
      %511 = vmatprep.subr.mxu0 0.0
      %512 = vmatpush1.msra.mxu0 0.0
      %513 = vmatprep.subr.mxu0 0.0
      %514 = vmatpush1.msra.mxu0 0.0
      %515 = vmatprep.mubr.f32.mxu0 0.0
      %516 = vmatmul.mubr.f32.gmra.mrb[0].mxu0 %v429
      %v517 = vpop.f32.mrb[0].mxu0
      %v518 = vadd.f32 %v449, %v517
      %v519 = vpop.f32.mrb[0].mxu0
      %520 = vmatprep.mubr.f32.mxu0 0.0
      %521 = vmatmul.mubr.f32.gmra.mrb[0].mxu0 %v430
      %v522 = vpop.f32.mrb[0].mxu0
      %v523 = vadd.f32 %v449, %v522
      %v524 = vpop.f32.mrb[0].mxu0
      %525 = vmatprep.mubr.f32.mxu0 0.0
      %526 = vmatmul.mubr.f32.gmra.mrb[0].mxu0 %v431
      %v527 = vpop.f32.mrb[0].mxu0
      %v528 = vadd.f32 %v449, %v527
      %v529 = vpop.f32.mrb[0].mxu0
      %530 = vmatprep.mubr.f32.mxu0 0.0
      %531 = vmatmul.mubr.f32.gmra.mrb[0].mxu0 %v432
      %v532 = vpop.f32.mrb[0].mxu0
      %v533 = vadd.f32 %v449, %v532
      %v534 = vpop.f32.mrb[0].mxu0
      %535 = vmatprep.mubr.f32.mxu0 0.0
      %536 = vmatmul.mubr.f32.gmra.mrb[0].mxu0 %v433
      %v537 = vpop.f32.mrb[0].mxu0
      %v538 = vadd.f32 %v449, %v537
      %v539 = vpop.f32.mrb[0].mxu0
      %540 = vmatprep.mubr.f32.mxu0 0.0
      %541 = vmatmul.mubr.f32.gmra.mrb[0].mxu0 %v434
      %v542 = vpop.f32.mrb[0].mxu0
      %v543 = vadd.f32 %v449, %v542
      %v544 = vpop.f32.mrb[0].mxu0
      %545 = vmatprep.mubr.f32.mxu0 0.0
      %546 = vmatmul.mubr.f32.gmra.mrb[0].mxu0 %v435
      %v547 = vpop.f32.mrb[0].mxu0
      %v548 = vadd.f32 %v449, %v547
      %v549 = vpop.f32.mrb[0].mxu0
      %550 = vmatprep.mubr.f32.mxu0 0.0
      %551 = vmatmul.mubr.f32.gmra.mrb[0].mxu0 %v436
      %v552 = vpop.f32.mrb[0].mxu0
      %v553 = vadd.f32 %v449, %v552
      %v554 = vpop.f32.mrb[0].mxu0
      %555 = vmatprep.mubr.f32.mxu0 0.0
      %556 = vmatmul.mubr.f32.gmra.mrb[0].mxu0 %v437
      %v557 = vpop.f32.mrb[0].mxu0
      %v558 = vadd.f32 %v449, %v557
      %v559 = vpop.f32.mrb[0].mxu0
      %560 = vmatprep.mubr.f32.mxu0 0.0
      %561 = vmatmul.mubr.f32.gmra.mrb[0].mxu0 %v438
      %v562 = vpop.f32.mrb[0].mxu0
      %v563 = vadd.f32 %v449, %v562
      %v564 = vpop.f32.mrb[0].mxu0
      %565 = vmatprep.mubr.f32.mxu0 0.0
      %566 = vmatmul.mubr.f32.gmra.mrb[0].mxu0 %v439
      %v567 = vpop.f32.mrb[0].mxu0
      %v568 = vadd.f32 %v449, %v567
      %v569 = vpop.f32.mrb[0].mxu0
      %570 = vmatprep.mubr.f32.mxu0 0.0
      %571 = vmatmul.mubr.f32.gmra.mrb[0].mxu0 %v440
      %v572 = vpop.f32.mrb[0].mxu0
      %v573 = vadd.f32 %v449, %v572
      %v574 = vpop.f32.mrb[0].mxu0
      %575 = vmatprep.mubr.f32.mxu0 0.0
      %576 = vmatmul.mubr.f32.gmra.mrb[0].mxu0 %v441
      %v577 = vpop.f32.mrb[0].mxu0
      %v578 = vadd.f32 %v449, %v577
      %v579 = vpop.f32.mrb[0].mxu0
      %580 = vmatprep.mubr.f32.mxu0 0.0
      %581 = vmatmul.mubr.f32.gmra.mrb[0].mxu0 %v442
      %v582 = vpop.f32.mrb[0].mxu0
      %v583 = vadd.f32 %v449, %v582
      %v584 = vpop.f32.mrb[0].mxu0
      %585 = vmatprep.mubr.f32.mxu0 0.0
      %586 = vmatmul.mubr.f32.gmra.mrb[0].mxu0 %v443
      %v587 = vpop.f32.mrb[0].mxu0
      %v588 = vadd.f32 %v449, %v587
      %v589 = vpop.f32.mrb[0].mxu0
      %590 = vmatprep.mubr.f32.mxu0 0.0
      %591 = vmatmul.mubr.f32.gmra.mrb[0].mxu0 %v444
      %v592 = vpop.f32.mrb[0].mxu0
      %v593 = vadd.f32 %v449, %v592
      %v594 = vpop.f32.mrb[0].mxu0
      %595 = vdwg.mxu0
      %v596 = vmax.f32 %v518, 0.0
      %v597 = vmax.f32 %v523, 0.0
      %v598 = vmax.f32 %v528, 0.0
      %v599 = vmax.f32 %v533, 0.0
      %v600 = vmax.f32 %v538, 0.0
      %v601 = vmax.f32 %v543, 0.0
      %v602 = vmax.f32 %v548, 0.0
      %v603 = vmax.f32 %v553, 0.0
      %v604 = vmax.f32 %v558, 0.0
      %v605 = vmax.f32 %v563, 0.0
      %v606 = vmax.f32 %v568, 0.0
      %v607 = vmax.f32 %v573, 0.0
      %v608 = vmax.f32 %v578, 0.0
      %v609 = vmax.f32 %v583, 0.0
      %v610 = vmax.f32 %v588, 0.0
      %v611 = vmax.f32 %v593, 0.0
      %612 = vst [vmem:[%s226] sm:$0xff] %v596
      %613 = vst [vmem:[%s226 + $0x8] sm:$0xff] %v597
      %614 = vst [vmem:[%s226 + $0x10] sm:$0xff] %v598
      %615 = vst [vmem:[%s226 + $0x18] sm:$0xff] %v599
      %616 = vst [vmem:[%s226 + $0x20] sm:$0xff] %v600
      %617 = vst [vmem:[%s226 + $0x28] sm:$0xff] %v601
      %618 = vst [vmem:[%s226 + $0x30] sm:$0xff] %v602
      %619 = vst [vmem:[%s226 + $0x38] sm:$0xff] %v603
      %620 = vst [vmem:[%s226 + $0x40] sm:$0xff] %v604
      %621 = vst [vmem:[%s226 + $0x48] sm:$0xff] %v605
      %622 = vst [vmem:[%s226 + $0x50] sm:$0xff] %v606
      %623 = vst [vmem:[%s226 + $0x58] sm:$0xff] %v607
      %624 = vst [vmem:[%s226 + $0x60] sm:$0xff] %v608
      %625 = vst [vmem:[%s226 + $0x68] sm:$0xff] %v609
      %626 = vst [vmem:[%s226 + $0x70] sm:$0xff] %v610
      %627 = vst [vmem:[%s226 + $0x78] sm:$0xff] %v611
      %s628 = smul.u32 16, %s16
      %p629 = scmp.lt.s32.totalorder %s628, 47
      %s630 = scalar_select %p629, %s628, 47
      %s631 = smul.addr %s630, 8
      %s632 = scalar_lea.vmem %s5, %s631
      // Predicated region
      $region41: #{net_forward.7} parent=39 // pred_check
        %p633 = pneg %p144
      $region42: #{net_forward.7} parent=39 // pred_check_branch
        %635 = sbr.rel (%p633) target = $region44
      $region43: #{net_forward.7} parent=39 // pred_region
        %s636 = smul.u32 16, %s16
      $region44: #{net_forward.7} parent=39 // pred_fallthru
        _
    $region40: #{net_forward.7} parent=5 // pred_fallthru
      _
    %p637 = scmp.le.s32.totalorder 2, %s11
    // Predicated region
    $region45: #{net_forward.7} parent=5 // pred_check
      %p638 = pneg %p637
    $region46: #{net_forward.7} parent=5 // pred_check_branch
      %640 = sbr.rel (%p638) target = $region48
    $region47: #{net_forward.7} parent=5 // pred_region
      %s641 = ssub.s32 %s11, 2
      // Predicated region
      $region49: #{net_forward.7} parent=47 // pred_check
        %p642 = pneg %p150
      $region50: #{net_forward.7} parent=47 // pred_check_branch
        %644 = sbr.rel (%p642) target = $region52
      $region51: #{net_forward.7} parent=47 // pred_region
        %s645 = smul.u32 16, %s17
        %p646 = scmp.lt.s32.totalorder %s645, 47
        %s647 = scalar_select %p646, %s645, 47
        %s648 = smul.addr %s647, 8
        %s649 = scalar_lea.vmem %s5, %s648
      $region52: #{net_forward.7} parent=47 // pred_fallthru
        _
    $region48: #{net_forward.7} parent=5 // pred_fallthru
      _
  $region6: #{net_forward.7} parent=0 // loop_footer
    %s15 = sadd.s32 1, %s11
  $region7: #{net_forward.7} parent=0 // loop_footer_branch
    %10 = sbr.rel target = $region3
  $region8: #{net_forward.7} parent=0 // loop_exit
    _

// kernel: net_forward.13
$region0: #{net_forward.13}
  #allocation0 [shape = 'u32[]', space=smem, size = 0x4, offset = 0x4, fixed_abs, tag = 'smem constant byte address 0x4 - core index']
  #allocation1 [shape = 'u32[144,128]{1,0:T(1,128)}', space=vmem, size = 0x12000, scoped, tag = 'internal scratch']
  %s0 = inlined_call_operand.vmem [shape: f32[384,128], index: 0, kind: input, shape index: {}]
  %s1 = inlined_call_operand.vmem [shape: f32[128,128], index: 1, kind: input, shape index: {}]
  %s2 = inlined_call_operand.vmem [shape: f32[1,128], index: 2, kind: input, shape index: {}]
  %s3 = inlined_call_operand.vmem [shape: f32[384,128], index: 3, kind: output, shape index: {}]
  %s4 = sld [smem:[#allocation0]]
  $region45: #{net_forward.13} parent=0
    _
  %s6 = ssub.s32 1, %s4
  %s7 = scalar_select 0, %s6, %s4
  loop: start=0, step=1, limit=5
  $region2: #{net_forward.13} parent=0 // loop_pre_header
    _
  $region3: #{net_forward.13} parent=0 // loop_header
    %s9 = sphi 0, %s13
    %p10 = scmp.ge.s32.totalorder %s9, 5
    %s19 = sphi 0, %s21
    %s22 = sphi 0, %s19
    %s23 = sphi 0, %s22
    %s39 = sphi 0, %s23
    %s43 = sphi 0, %s43
    %s45 = sphi 0, %s43
    %s46 = sphi 0, %s45
    %s60 = sphi 0, %s46
    %s64 = sphi 0, %s64
    %s66 = sphi 0, %s64
    %s67 = sphi 0, %s66
    %s81 = sphi 0, %s67
    %s87 = sphi 0, %s89
    %s90 = sphi 0, %s87
    %s91 = sphi 0, %s90
    %s107 = sphi 0, %s91
  $region4: #{net_forward.13} parent=0 // loop_header_branch
    %12 = sbr.rel (%p10) target = $region8
  $region5: #{net_forward.13} parent=0 // loop_body
    %s14 = ssub.s32 %s9, 1
    %s15 = ssub.s32 %s9, 2
    %s16 = sadd.s32 %s9, 1
    %s17 = ssub.s32 %s9, %s16
    %p18 = scmp.eq.s32.totalorder %s17, 0
    %s20 = sadd.s32 %s19, 1
    %s21 = scalar_select %p18, %s19, %s20
    %p24 = pneg %p18
    %p25 = scmp.eq.s32.totalorder %s9, 2
    %p26 = por %p24, %p25
    %p27 = scmp.ne.s32.totalorder %s19, %s22
    %p28 = scmp.eq.s32.totalorder %s9, 0
    %p29 = por %p27, %p28
    %p30 = scmp.ne.s32.totalorder %s19, %s22
    %p31 = scmp.eq.s32.totalorder %s14, 2
    %p32 = por %p30, %p31
    %p33 = scmp.ne.s32.totalorder %s22, %s23
    %p34 = scmp.eq.s32.totalorder %s14, 0
    %p35 = por %p33, %p34
    %p36 = scmp.ne.s32.totalorder %s22, %s23
    %p37 = scmp.eq.s32.totalorder %s15, 2
    %p38 = por %p36, %p37
    %p40 = scmp.ne.s32.totalorder %s23, %s39
    %p41 = scmp.eq.s32.totalorder %s15, 0
    %p42 = por %p40, %p41
    %s44 = sadd.s32 %s43, 1
    %p47 = scmp.eq.s32.totalorder %s9, 2
    %p48 = scmp.ne.s32.totalorder %s43, %s45
    %p49 = scmp.eq.s32.totalorder %s9, 0
    %p50 = por %p48, %p49
    %p51 = scmp.ne.s32.totalorder %s43, %s45
    %p52 = scmp.eq.s32.totalorder %s14, 2
    %p53 = por %p51, %p52
    %p54 = scmp.ne.s32.totalorder %s45, %s46
    %p55 = scmp.eq.s32.totalorder %s14, 0
    %p56 = por %p54, %p55
    %p57 = scmp.ne.s32.totalorder %s45, %s46
    %p58 = scmp.eq.s32.totalorder %s15, 2
    %p59 = por %p57, %p58
    %p61 = scmp.ne.s32.totalorder %s46, %s60
    %p62 = scmp.eq.s32.totalorder %s15, 0
    %p63 = por %p61, %p62
    %s65 = sadd.s32 %s64, 1
    %p68 = scmp.eq.s32.totalorder %s9, 2
    %p69 = scmp.ne.s32.totalorder %s64, %s66
    %p70 = scmp.eq.s32.totalorder %s9, 0
    %p71 = por %p69, %p70
    %p72 = scmp.ne.s32.totalorder %s64, %s66
    %p73 = scmp.eq.s32.totalorder %s14, 2
    %p74 = por %p72, %p73
    %p75 = scmp.ne.s32.totalorder %s66, %s67
    %p76 = scmp.eq.s32.totalorder %s14, 0
    %p77 = por %p75, %p76
    %p78 = scmp.ne.s32.totalorder %s66, %s67
    %p79 = scmp.eq.s32.totalorder %s15, 2
    %p80 = por %p78, %p79
    %p82 = scmp.ne.s32.totalorder %s67, %s81
    %p83 = scmp.eq.s32.totalorder %s15, 0
    %p84 = por %p82, %p83
    %s85 = ssub.s32 %s9, %s16
    %p86 = scmp.eq.s32.totalorder %s85, 0
    %s88 = sadd.s32 %s87, 1
    %s89 = scalar_select %p86, %s87, %s88
    %p92 = pneg %p86
    %p93 = scmp.eq.s32.totalorder %s9, 2
    %p94 = por %p92, %p93
    %p95 = scmp.ne.s32.totalorder %s87, %s90
    %p96 = scmp.eq.s32.totalorder %s9, 0
    %p97 = por %p95, %p96
    %p98 = scmp.ne.s32.totalorder %s87, %s90
    %p99 = scmp.eq.s32.totalorder %s14, 2
    %p100 = por %p98, %p99
    %p101 = scmp.ne.s32.totalorder %s90, %s91
    %p102 = scmp.eq.s32.totalorder %s14, 0
    %p103 = por %p101, %p102
    %p104 = scmp.ne.s32.totalorder %s90, %s91
    %p105 = scmp.eq.s32.totalorder %s15, 2
    %p106 = por %p104, %p105
    %p108 = scmp.ne.s32.totalorder %s91, %s107
    %p109 = scmp.eq.s32.totalorder %s15, 0
    %p110 = por %p108, %p109
    %p111 = scmp.le.s32.totalorder 1, %s9
    %p112 = scmp.lt.s32.totalorder %s9, 4
    %p113 = pnand %p111, %p112
    %p114 = pneg %p113
    // Predicated region
    $region9: #{net_forward.13} parent=5 // pred_check
      _
    $region10: #{net_forward.13} parent=5 // pred_check_branch
      %116 = sbr.rel (%p113) target = $region12
    $region11: #{net_forward.13} parent=5 // pred_region
      %s117 = ssub.s32 %s9, 1
      // Predicated region
      $region13: #{net_forward.13} parent=11 // pred_check
        %p118 = pneg %p56
      $region14: #{net_forward.13} parent=11 // pred_check_branch
        %120 = sbr.rel (%p118) target = $region16
      $region15: #{net_forward.13} parent=11 // pred_region
        _
      $region16: #{net_forward.13} parent=11 // pred_fallthru
        _
      // Predicated region
      $region17: #{net_forward.13} parent=11 // pred_check
        %p121 = pneg %p77
      $region18: #{net_forward.13} parent=11 // pred_check_branch
        %123 = sbr.rel (%p121) target = $region20
      $region19: #{net_forward.13} parent=11 // pred_region
        _
      $region20: #{net_forward.13} parent=11 // pred_fallthru
        _
    $region12: #{net_forward.13} parent=5 // pred_fallthru
      _
    %p124 = scmp.lt.s32.totalorder %s9, 3
    // Predicated region
    $region21: #{net_forward.13} parent=5 // pred_check
      %p125 = pneg %p124
    $region22: #{net_forward.13} parent=5 // pred_check_branch
      %127 = sbr.rel (%p125) target = $region24
    $region23: #{net_forward.13} parent=5 // pred_region
      // Predicated region
      $region25: #{net_forward.13} parent=23 // pred_check
        %p128 = pneg %p29
      $region26: #{net_forward.13} parent=23 // pred_check_branch
        %130 = sbr.rel (%p128) target = $region28
      $region27: #{net_forward.13} parent=23 // pred_region
        %s131 = smul.u32 16, %s9
        %p132 = scmp.lt.s32.totalorder %s131, 47
        %s133 = scalar_select %p132, %s131, 47
        %s134 = smul.addr %s133, 8
        %s135 = scalar_lea.vmem %s0, %s134
        %s136 = smul.u32 16, %s9
      $region28: #{net_forward.13} parent=23 // pred_fallthru
        _
    $region24: #{net_forward.13} parent=5 // pred_fallthru
      _
    %p137 = scmp.le.s32.totalorder 1, %s9
    %p138 = scmp.lt.s32.totalorder %s9, 4
    %p139 = pnand %p137, %p138
    %p140 = pneg %p139
    // Predicated region
    $region29: #{net_forward.13} parent=5 // pred_check
      _
    $region30: #{net_forward.13} parent=5 // pred_check_branch
      %142 = sbr.rel (%p139) target = $region32
    $region31: #{net_forward.13} parent=5 // pred_region
      %s143 = ssub.s32 %s9, 1
      %s144 = smul.u32 16, %s14
      %p145 = scmp.lt.s32.totalorder %s144, 47
      %s146 = scalar_select %p145, %s144, 47
      %s147 = smul.addr %s146, 8
      %s148 = scalar_lea.vmem %s0, %s147
      %p149 = pneg %p35
      %p150 = pneg %p32
      %p151 = pneg %p56
      %p152 = pneg %p53
      %p153 = pneg %p77
      %p154 = pneg %p74
      %p155 = pneg %p103
      %p156 = pneg %p100
      %s157 = smul.u32 16, %s14
      %p158 = scmp.lt.s32.totalorder %s157, 47
      %s159 = scalar_select %p158, %s157, 47
      %s160 = smul.addr %s159, 8
      %s161 = scalar_lea.vmem %s3, %s160
      %s162 = smul.u32 16, %s14
      %p163 = scmp.lt.s32.totalorder %s162, 47
      %s164 = scalar_select %p163, %s162, 47
      %s165 = smul.addr %s164, 8
      %s166 = scalar_lea.vmem %s0, %s165
      %s167 = smul.u32 16, %s14
      %s168 = smul.u32 16, %s14
      %p169 = scmp.lt.s32.totalorder %s168, 47
      %s170 = scalar_select %p169, %s168, 47
      %s171 = smul.addr %s170, 8
      %s172 = scalar_lea.vmem %s3, %s171
      %s173 = smul.u32 16, %s14
      %v174 = vld [vmem:[%s166] sm:$0xff]
      %v175 = vld [vmem:[%s166 + $0x8] sm:$0xff]
      %v176 = vld [vmem:[%s166 + $0x10] sm:$0xff]
      %v177 = vld [vmem:[%s166 + $0x18] sm:$0xff]
      %v178 = vld [vmem:[%s166 + $0x20] sm:$0xff]
      %v179 = vld [vmem:[%s166 + $0x28] sm:$0xff]
      %v180 = vld [vmem:[%s166 + $0x30] sm:$0xff]
      %v181 = vld [vmem:[%s166 + $0x38] sm:$0xff]
      %v182 = vld [vmem:[%s166 + $0x40] sm:$0xff]
      %v183 = vld [vmem:[%s166 + $0x48] sm:$0xff]
      %v184 = vld [vmem:[%s166 + $0x50] sm:$0xff]
      %v185 = vld [vmem:[%s166 + $0x58] sm:$0xff]
      %v186 = vld [vmem:[%s166 + $0x60] sm:$0xff]
      %v187 = vld [vmem:[%s166 + $0x68] sm:$0xff]
      %v188 = vld [vmem:[%s166 + $0x70] sm:$0xff]
      %v189 = vld [vmem:[%s166 + $0x78] sm:$0xff]
      %v190 = vld [vmem:[%s1] sm:$0xff]
      %v191 = vld [vmem:[%s1 + $0x8] sm:$0xff]
      %v192 = vld [vmem:[%s1 + $0x10] sm:$0xff]
      %v193 = vld [vmem:[%s1 + $0x18] sm:$0xff]
      %v194 = vld [vmem:[%s1 + $0x20] sm:$0xff]
      %v195 = vld [vmem:[%s1 + $0x28] sm:$0xff]
      %v196 = vld [vmem:[%s1 + $0x30] sm:$0xff]
      %v197 = vld [vmem:[%s1 + $0x38] sm:$0xff]
      %v198 = vld [vmem:[%s1 + $0x40] sm:$0xff]
      %v199 = vld [vmem:[%s1 + $0x48] sm:$0xff]
      %v200 = vld [vmem:[%s1 + $0x50] sm:$0xff]
      %v201 = vld [vmem:[%s1 + $0x58] sm:$0xff]
      %v202 = vld [vmem:[%s1 + $0x60] sm:$0xff]
      %v203 = vld [vmem:[%s1 + $0x68] sm:$0xff]
      %v204 = vld [vmem:[%s1 + $0x70] sm:$0xff]
      %v205 = vld [vmem:[%s1 + $0x78] sm:$0xff]
      %v206 = vld [vmem:[%s2] sm:$0x1]
      %v208 = vlaneseq
      %v209 = vshrl.u32 %v208, 7
      %v210 = vsub.s32 0, %v209
      %v211 = vrot.slane %v206, %v210
      %213 = vmatprep.subr.mxu0 0.0
      %214 = vmatpush1.msra.mxu0 %v190
      %215 = vmatprep.subr.mxu0 0.0
      %216 = vmatpush1.msra.mxu0 %v191
      %217 = vmatprep.subr.mxu0 0.0
      %218 = vmatpush1.msra.mxu0 %v192
      %219 = vmatprep.subr.mxu0 0.0
      %220 = vmatpush1.msra.mxu0 %v193
      %221 = vmatprep.subr.mxu0 0.0
      %222 = vmatpush1.msra.mxu0 %v194
      %223 = vmatprep.subr.mxu0 0.0
      %224 = vmatpush1.msra.mxu0 %v195
      %225 = vmatprep.subr.mxu0 0.0
      %226 = vmatpush1.msra.mxu0 %v196
      %227 = vmatprep.subr.mxu0 0.0
      %228 = vmatpush1.msra.mxu0 %v197
      %229 = vmatprep.subr.mxu0 0.0
      %230 = vmatpush1.msra.mxu0 %v198
      %231 = vmatprep.subr.mxu0 0.0
      %232 = vmatpush1.msra.mxu0 %v199
      %233 = vmatprep.subr.mxu0 0.0
      %234 = vmatpush1.msra.mxu0 %v200
      %235 = vmatprep.subr.mxu0 0.0
      %236 = vmatpush1.msra.mxu0 %v201
      %237 = vmatprep.subr.mxu0 0.0
      %238 = vmatpush1.msra.mxu0 %v202
      %239 = vmatprep.subr.mxu0 0.0
      %240 = vmatpush1.msra.mxu0 %v203
      %241 = vmatprep.subr.mxu0 0.0
      %242 = vmatpush1.msra.mxu0 %v204
      %243 = vmatprep.subr.mxu0 0.0
      %244 = vmatpush1.msra.mxu0 %v205
      %245 = vmatprep.subr.mxu0 0.0
      %246 = vmatpush1.msra.mxu0 0.0
      %247 = vmatprep.subr.mxu0 0.0
      %248 = vmatpush1.msra.mxu0 0.0
      %249 = vmatprep.subr.mxu0 0.0
      %250 = vmatpush1.msra.mxu0 0.0
      %251 = vmatprep.subr.mxu0 0.0
      %252 = vmatpush1.msra.mxu0 0.0
      %253 = vmatprep.subr.mxu0 0.0
      %254 = vmatpush1.msra.mxu0 0.0
      %255 = vmatprep.subr.mxu0 0.0
      %256 = vmatpush1.msra.mxu0 0.0
      %257 = vmatprep.subr.mxu0 0.0
      %258 = vmatpush1.msra.mxu0 0.0
      %259 = vmatprep.subr.mxu0 0.0
      %260 = vmatpush1.msra.mxu0 0.0
      %261 = vmatprep.subr.mxu0 0.0
      %262 = vmatpush1.msra.mxu0 0.0
      %263 = vmatprep.subr.mxu0 0.0
      %264 = vmatpush1.msra.mxu0 0.0
      %265 = vmatprep.subr.mxu0 0.0
      %266 = vmatpush1.msra.mxu0 0.0
      %267 = vmatprep.subr.mxu0 0.0
      %268 = vmatpush1.msra.mxu0 0.0
      %269 = vmatprep.subr.mxu0 0.0
      %270 = vmatpush1.msra.mxu0 0.0
      %271 = vmatprep.subr.mxu0 0.0
      %272 = vmatpush1.msra.mxu0 0.0
      %273 = vmatprep.subr.mxu0 0.0
      %274 = vmatpush1.msra.mxu0 0.0
      %275 = vmatprep.subr.mxu0 0.0
      %276 = vmatpush1.msra.mxu0 0.0
      %277 = vmatprep.mubr.f32.mxu0 0.0
      %278 = vmatmul.mubr.f32.gmra.mrb[0].mxu0 %v174
      %v279 = vpop.f32.mrb[0].mxu0
      %v280 = vadd.f32 %v211, %v279
      %v281 = vpop.f32.mrb[0].mxu0
      %282 = vmatprep.mubr.f32.mxu0 0.0
      %283 = vmatmul.mubr.f32.gmra.mrb[0].mxu0 %v175
      %v284 = vpop.f32.mrb[0].mxu0
      %v285 = vadd.f32 %v211, %v284
      %v286 = vpop.f32.mrb[0].mxu0
      %287 = vmatprep.mubr.f32.mxu0 0.0
      %288 = vmatmul.mubr.f32.gmra.mrb[0].mxu0 %v176
      %v289 = vpop.f32.mrb[0].mxu0
      %v290 = vadd.f32 %v211, %v289
      %v291 = vpop.f32.mrb[0].mxu0
      %292 = vmatprep.mubr.f32.mxu0 0.0
      %293 = vmatmul.mubr.f32.gmra.mrb[0].mxu0 %v177
      %v294 = vpop.f32.mrb[0].mxu0
      %v295 = vadd.f32 %v211, %v294
      %v296 = vpop.f32.mrb[0].mxu0
      %297 = vmatprep.mubr.f32.mxu0 0.0
      %298 = vmatmul.mubr.f32.gmra.mrb[0].mxu0 %v178
      %v299 = vpop.f32.mrb[0].mxu0
      %v300 = vadd.f32 %v211, %v299
      %v301 = vpop.f32.mrb[0].mxu0
      %302 = vmatprep.mubr.f32.mxu0 0.0
      %303 = vmatmul.mubr.f32.gmra.mrb[0].mxu0 %v179
      %v304 = vpop.f32.mrb[0].mxu0
      %v305 = vadd.f32 %v211, %v304
      %v306 = vpop.f32.mrb[0].mxu0
      %307 = vmatprep.mubr.f32.mxu0 0.0
      %308 = vmatmul.mubr.f32.gmra.mrb[0].mxu0 %v180
      %v309 = vpop.f32.mrb[0].mxu0
      %v310 = vadd.f32 %v211, %v309
      %v311 = vpop.f32.mrb[0].mxu0
      %312 = vmatprep.mubr.f32.mxu0 0.0
      %313 = vmatmul.mubr.f32.gmra.mrb[0].mxu0 %v181
      %v314 = vpop.f32.mrb[0].mxu0
      %v315 = vadd.f32 %v211, %v314
      %v316 = vpop.f32.mrb[0].mxu0
      %317 = vmatprep.mubr.f32.mxu0 0.0
      %318 = vmatmul.mubr.f32.gmra.mrb[0].mxu0 %v182
      %v319 = vpop.f32.mrb[0].mxu0
      %v320 = vadd.f32 %v211, %v319
      %v321 = vpop.f32.mrb[0].mxu0
      %322 = vmatprep.mubr.f32.mxu0 0.0
      %323 = vmatmul.mubr.f32.gmra.mrb[0].mxu0 %v183
      %v324 = vpop.f32.mrb[0].mxu0
      %v325 = vadd.f32 %v211, %v324
      %v326 = vpop.f32.mrb[0].mxu0
      %327 = vmatprep.mubr.f32.mxu0 0.0
      %328 = vmatmul.mubr.f32.gmra.mrb[0].mxu0 %v184
      %v329 = vpop.f32.mrb[0].mxu0
      %v330 = vadd.f32 %v211, %v329
      %v331 = vpop.f32.mrb[0].mxu0
      %332 = vmatprep.mubr.f32.mxu0 0.0
      %333 = vmatmul.mubr.f32.gmra.mrb[0].mxu0 %v185
      %v334 = vpop.f32.mrb[0].mxu0
      %v335 = vadd.f32 %v211, %v334
      %v336 = vpop.f32.mrb[0].mxu0
      %337 = vmatprep.mubr.f32.mxu0 0.0
      %338 = vmatmul.mubr.f32.gmra.mrb[0].mxu0 %v186
      %v339 = vpop.f32.mrb[0].mxu0
      %v340 = vadd.f32 %v211, %v339
      %v341 = vpop.f32.mrb[0].mxu0
      %342 = vmatprep.mubr.f32.mxu0 0.0
      %343 = vmatmul.mubr.f32.gmra.mrb[0].mxu0 %v187
      %v344 = vpop.f32.mrb[0].mxu0
      %v345 = vadd.f32 %v211, %v344
      %v346 = vpop.f32.mrb[0].mxu0
      %347 = vmatprep.mubr.f32.mxu0 0.0
      %348 = vmatmul.mubr.f32.gmra.mrb[0].mxu0 %v188
      %v349 = vpop.f32.mrb[0].mxu0
      %v350 = vadd.f32 %v211, %v349
      %v351 = vpop.f32.mrb[0].mxu0
      %352 = vmatprep.mubr.f32.mxu0 0.0
      %353 = vmatmul.mubr.f32.gmra.mrb[0].mxu0 %v189
      %v354 = vpop.f32.mrb[0].mxu0
      %v355 = vadd.f32 %v211, %v354
      %v356 = vpop.f32.mrb[0].mxu0
      %357 = vdwg.mxu0
      %v358 = vxor.u32 %v280, 2147483648
      %v359 = vxor.u32 %v285, 2147483648
      %v360 = vxor.u32 %v290, 2147483648
      %v361 = vxor.u32 %v295, 2147483648
      %v362 = vxor.u32 %v300, 2147483648
      %v363 = vxor.u32 %v305, 2147483648
      %v364 = vxor.u32 %v310, 2147483648
      %v365 = vxor.u32 %v315, 2147483648
      %v366 = vxor.u32 %v320, 2147483648
      %v367 = vxor.u32 %v325, 2147483648
      %v368 = vxor.u32 %v330, 2147483648
      %v369 = vxor.u32 %v335, 2147483648
      %v370 = vxor.u32 %v340, 2147483648
      %v371 = vxor.u32 %v345, 2147483648
      %v372 = vxor.u32 %v350, 2147483648
      %v373 = vxor.u32 %v355, 2147483648
      %v374 = vmul.f32 %v358, 1.442695
      %v375 = vpow.pop %v374
      %v376 = vmul.f32 %v359, 1.442695
      %v377 = vpow.pop %v376
      %v378 = vmul.f32 %v360, 1.442695
      %v379 = vpow.pop %v378
      %v380 = vmul.f32 %v361, 1.442695
      %v381 = vpow.pop %v380
      %v382 = vmul.f32 %v362, 1.442695
      %v383 = vpow.pop %v382
      %v384 = vmul.f32 %v363, 1.442695
      %v385 = vpow.pop %v384
      %v386 = vmul.f32 %v364, 1.442695
      %v387 = vpow.pop %v386
      %v388 = vmul.f32 %v365, 1.442695
      %v389 = vpow.pop %v388
      %v390 = vmul.f32 %v366, 1.442695
      %v391 = vpow.pop %v390
      %v392 = vmul.f32 %v367, 1.442695
      %v393 = vpow.pop %v392
      %v394 = vmul.f32 %v368, 1.442695
      %v395 = vpow.pop %v394
      %v396 = vmul.f32 %v369, 1.442695
      %v397 = vpow.pop %v396
      %v398 = vmul.f32 %v370, 1.442695
      %v399 = vpow.pop %v398
      %v400 = vmul.f32 %v371, 1.442695
      %v401 = vpow.pop %v400
      %v402 = vmul.f32 %v372, 1.442695
      %v403 = vpow.pop %v402
      %v404 = vmul.f32 %v373, 1.442695
      %v405 = vpow.pop %v404
      %v406 = vadd.f32 %v375, 1.0
      %v407 = vadd.f32 %v377, 1.0
      %v408 = vadd.f32 %v379, 1.0
      %v409 = vadd.f32 %v381, 1.0
      %v410 = vadd.f32 %v383, 1.0
      %v411 = vadd.f32 %v385, 1.0
      %v412 = vadd.f32 %v387, 1.0
      %v413 = vadd.f32 %v389, 1.0
      %v414 = vadd.f32 %v391, 1.0
      %v415 = vadd.f32 %v393, 1.0
      %v416 = vadd.f32 %v395, 1.0
      %v417 = vadd.f32 %v397, 1.0
      %v418 = vadd.f32 %v399, 1.0
      %v419 = vadd.f32 %v401, 1.0
      %v420 = vadd.f32 %v403, 1.0
      %v421 = vadd.f32 %v405, 1.0
      %v422 = vrcp.pop %v406
      %v423 = vmul.f32 1.0, %v422
      %v424 = vrcp.pop %v407
      %v425 = vmul.f32 1.0, %v424
      %v426 = vrcp.pop %v408
      %v427 = vmul.f32 1.0, %v426
      %v428 = vrcp.pop %v409
      %v429 = vmul.f32 1.0, %v428
      %v430 = vrcp.pop %v410
      %v431 = vmul.f32 1.0, %v430
      %v432 = vrcp.pop %v411
      %v433 = vmul.f32 1.0, %v432
      %v434 = vrcp.pop %v412
      %v435 = vmul.f32 1.0, %v434
      %v436 = vrcp.pop %v413
      %v437 = vmul.f32 1.0, %v436
      %v438 = vrcp.pop %v414
      %v439 = vmul.f32 1.0, %v438
      %v440 = vrcp.pop %v415
      %v441 = vmul.f32 1.0, %v440
      %v442 = vrcp.pop %v416
      %v443 = vmul.f32 1.0, %v442
      %v444 = vrcp.pop %v417
      %v445 = vmul.f32 1.0, %v444
      %v446 = vrcp.pop %v418
      %v447 = vmul.f32 1.0, %v446
      %v448 = vrcp.pop %v419
      %v449 = vmul.f32 1.0, %v448
      %v450 = vrcp.pop %v420
      %v451 = vmul.f32 1.0, %v450
      %v452 = vrcp.pop %v421
      %v453 = vmul.f32 1.0, %v452
      %454 = vst [vmem:[%s172] sm:$0xff] %v423
      %455 = vst [vmem:[%s172 + $0x8] sm:$0xff] %v425
      %456 = vst [vmem:[%s172 + $0x10] sm:$0xff] %v427
      %457 = vst [vmem:[%s172 + $0x18] sm:$0xff] %v429
      %458 = vst [vmem:[%s172 + $0x20] sm:$0xff] %v431
      %459 = vst [vmem:[%s172 + $0x28] sm:$0xff] %v433
      %460 = vst [vmem:[%s172 + $0x30] sm:$0xff] %v435
      %461 = vst [vmem:[%s172 + $0x38] sm:$0xff] %v437
      %462 = vst [vmem:[%s172 + $0x40] sm:$0xff] %v439
      %463 = vst [vmem:[%s172 + $0x48] sm:$0xff] %v441
      %464 = vst [vmem:[%s172 + $0x50] sm:$0xff] %v443
      %465 = vst [vmem:[%s172 + $0x58] sm:$0xff] %v445
      %466 = vst [vmem:[%s172 + $0x60] sm:$0xff] %v447
      %467 = vst [vmem:[%s172 + $0x68] sm:$0xff] %v449
      %468 = vst [vmem:[%s172 + $0x70] sm:$0xff] %v451
      %469 = vst [vmem:[%s172 + $0x78] sm:$0xff] %v453
      %s470 = smul.u32 16, %s14
      %p471 = scmp.lt.s32.totalorder %s470, 47
      %s472 = scalar_select %p471, %s470, 47
      %s473 = smul.addr %s472, 8
      %s474 = scalar_lea.vmem %s3, %s473
      // Predicated region
      $region33: #{net_forward.13} parent=31 // pred_check
        %p475 = pneg %p100
      $region34: #{net_forward.13} parent=31 // pred_check_branch
        %477 = sbr.rel (%p475) target = $region36
      $region35: #{net_forward.13} parent=31 // pred_region
        %s478 = smul.u32 16, %s14
      $region36: #{net_forward.13} parent=31 // pred_fallthru
        _
    $region32: #{net_forward.13} parent=5 // pred_fallthru
      _
    %p479 = scmp.le.s32.totalorder 2, %s9
    // Predicated region
    $region37: #{net_forward.13} parent=5 // pred_check
      %p480 = pneg %p479
    $region38: #{net_forward.13} parent=5 // pred_check_branch
      %482 = sbr.rel (%p480) target = $region40
    $region39: #{net_forward.13} parent=5 // pred_region
      %s483 = ssub.s32 %s9, 2
      // Predicated region
      $region41: #{net_forward.13} parent=39 // pred_check
        %p484 = pneg %p106
      $region42: #{net_forward.13} parent=39 // pred_check_branch
        %486 = sbr.rel (%p484) target = $region44
      $region43: #{net_forward.13} parent=39 // pred_region
        %s487 = smul.u32 16, %s15
        %p488 = scmp.lt.s32.totalorder %s487, 47
        %s489 = scalar_select %p488, %s487, 47
        %s490 = smul.addr %s489, 8
        %s491 = scalar_lea.vmem %s3, %s490
      $region44: #{net_forward.13} parent=39 // pred_fallthru
        _
    $region40: #{net_forward.13} parent=5 // pred_fallthru
      _
  $region6: #{net_forward.13} parent=0 // loop_footer
    %s13 = sadd.s32 1, %s9
  $region7: #{net_forward.13} parent=0 // loop_footer_branch
    %8 = sbr.rel target = $region3
  $region8: #{net_forward.13} parent=0 // loop_exit
    _

// kernel: net_forward.8
$region0: #{net_forward.8}
  #allocation0 [shape = 'u32[]', space=smem, size = 0x4, offset = 0x4, fixed_abs, tag = 'smem constant byte address 0x4 - core index']
  #allocation1 [shape = 'u32[144,128]{1,0:T(1,128)}', space=vmem, size = 0x12000, scoped, tag = 'internal scratch']
  #allocation2 [shape = 'f32[128,128]{1,0:T(8,128)}', space=vmem, size = 0x10000, scoped, tag = 'scratch operand']
  %s0 = inlined_call_operand.vmem [shape: bf16[384,384], index: 0, kind: input, shape index: {}]
  %s1 = inlined_call_operand.vmem [shape: bf16[384,128], index: 1, kind: input, shape index: {}]
  %s2 = inlined_call_operand.vmem [shape: f32[384,128], index: 2, kind: input, shape index: {}]
  %s3 = inlined_call_operand.vmem [shape: f32[128,128], index: 3, kind: input, shape index: {}]
  %s4 = inlined_call_operand.vmem [shape: f32[1,128], index: 4, kind: input, shape index: {}]
  %s5 = inlined_call_operand.vmem [shape: f32[128,128], index: 5, kind: input, shape index: {}]
  %s6 = inlined_call_operand.vmem [shape: f32[1,128], index: 6, kind: input, shape index: {}]
  %s7 = inlined_call_operand.vmem [shape: f32[128,128], index: 7, kind: input, shape index: {}]
  %s8 = inlined_call_operand.vmem [shape: f32[1,128], index: 8, kind: input, shape index: {}]
  %s9 = inlined_call_operand.vmem [shape: f32[128,128], index: 9, kind: input, shape index: {}]
  %s10 = inlined_call_operand.vmem [shape: f32[1,128], index: 10, kind: input, shape index: {}]
  %s11 = inlined_call_operand.vmem [shape: f32[384,128], index: 11, kind: output, shape index: {}]
  %s12 = sld [smem:[#allocation0]]
  $region126: #{net_forward.8} parent=0
    _
  %s14 = ssub.s32 1, %s12
  %s15 = scalar_select 0, %s14, %s12
  $region1: #{net_forward.8} parent=0
    #allocation3 [shape = 'u8[65536]{0}', space=vmem, size = 0x10000, scoped, tag = 'input window, operand 0']
    loop: start=0, step=1, limit=11
    $region2: #{net_forward.8} parent=1 // loop_pre_header
      _
    $region3: #{net_forward.8} parent=1 // loop_header
      %s17 = sphi 0, %s21
      %p18 = scmp.ge.s32.totalorder %s17, 11
      %s24 = sphi 0, %s36
      %s25 = sphi 0, %s32
      %s26 = sphi 0, %s24
      %s27 = sphi 0, %s25
      %s28 = sphi 0, %s26
      %s29 = sphi 0, %s27
      %s41 = sphi 0, %s43
      %s44 = sphi 0, %s41
      %s45 = sphi 0, %s44
      %s61 = sphi 0, %s45
      %s67 = sphi 0, %s69
      %s70 = sphi 0, %s67
      %s71 = sphi 0, %s70
      %s87 = sphi 0, %s71
      %s93 = sphi 0, %s95
      %s96 = sphi 0, %s93
      %s97 = sphi 0, %s96
      %s113 = sphi 0, %s97
      %s117 = sphi 0, %s117
      %s119 = sphi 0, %s117
      %s120 = sphi 0, %s119
      %s134 = sphi 0, %s120
      %s138 = sphi 0, %s138
      %s140 = sphi 0, %s138
      %s141 = sphi 0, %s140
      %s155 = sphi 0, %s141
      %s159 = sphi 0, %s159
      %s161 = sphi 0, %s159
      %s162 = sphi 0, %s161
      %s176 = sphi 0, %s162
      %s180 = sphi 0, %s180
      %s182 = sphi 0, %s180
      %s183 = sphi 0, %s182
      %s197 = sphi 0, %s183
      %s201 = sphi 0, %s201
      %s203 = sphi 0, %s201
      %s204 = sphi 0, %s203
      %s218 = sphi 0, %s204
      %s222 = sphi 0, %s222
      %s224 = sphi 0, %s222
      %s225 = sphi 0, %s224
      %s239 = sphi 0, %s225
      %s243 = sphi 0, %s243
      %s245 = sphi 0, %s243
      %s246 = sphi 0, %s245
      %s260 = sphi 0, %s246
      %s264 = sphi 0, %s264
      %s266 = sphi 0, %s264
      %s267 = sphi 0, %s266
      %s281 = sphi 0, %s267
      %s287 = sphi 0, %s289
      %s290 = sphi 0, %s287
      %s291 = sphi 0, %s290
      %s307 = sphi 0, %s291
    $region4: #{net_forward.8} parent=1 // loop_header_branch
      %20 = sbr.rel (%p18) target = $region8
    $region5: #{net_forward.8} parent=1 // loop_body
      %s22 = ssub.s32 %s17, 1
      %s23 = ssub.s32 %s17, 2
      %s30 = sadd.s32 1, %s25
      %p31 = scmp.ge.s32.totalorder %s30, 3
      %s32 = scalar_select %p31, 0, %s30
      %s33 = sadd.s32 1, %s24
      %s34 = scalar_select %p31, %s33, %s24
      %p35 = scmp.ge.s32.totalorder %s34, 3
      %s36 = scalar_select %p35, 0, %s34
      %s37 = ssub.s32 %s24, %s36
      %s38 = ssub.s32 %s25, %s32
      %s39 = sor.u32 %s37, %s38
      %p40 = scmp.eq.s32.totalorder %s39, 0
      %s42 = sadd.s32 %s41, 1
      %s43 = scalar_select %p40, %s41, %s42
      %p46 = pneg %p40
      %p47 = scmp.eq.s32.totalorder %s17, 8
      %p48 = por %p46, %p47
      %p49 = scmp.ne.s32.totalorder %s41, %s44
      %p50 = scmp.eq.s32.totalorder %s17, 0
      %p51 = por %p49, %p50
      %p52 = scmp.ne.s32.totalorder %s41, %s44
      %p53 = scmp.eq.s32.totalorder %s22, 8
      %p54 = por %p52, %p53
      %p55 = scmp.ne.s32.totalorder %s44, %s45
      %p56 = scmp.eq.s32.totalorder %s22, 0
      %p57 = por %p55, %p56
      %p58 = scmp.ne.s32.totalorder %s44, %s45
      %p59 = scmp.eq.s32.totalorder %s23, 8
      %p60 = por %p58, %p59
      %p62 = scmp.ne.s32.totalorder %s45, %s61
      %p63 = scmp.eq.s32.totalorder %s23, 0
      %p64 = por %p62, %p63
      %s65 = ssub.s32 %s25, %s32
      %p66 = scmp.eq.s32.totalorder %s65, 0
      %s68 = sadd.s32 %s67, 1
      %s69 = scalar_select %p66, %s67, %s68
      %p72 = pneg %p66
      %p73 = scmp.eq.s32.totalorder %s17, 8
      %p74 = por %p72, %p73
      %p75 = scmp.ne.s32.totalorder %s67, %s70
      %p76 = scmp.eq.s32.totalorder %s17, 0
      %p77 = por %p75, %p76
      %p78 = scmp.ne.s32.totalorder %s67, %s70
      %p79 = scmp.eq.s32.totalorder %s22, 8
      %p80 = por %p78, %p79
      %p81 = scmp.ne.s32.totalorder %s70, %s71
      %p82 = scmp.eq.s32.totalorder %s22, 0
      %p83 = por %p81, %p82
      %p84 = scmp.ne.s32.totalorder %s70, %s71
      %p85 = scmp.eq.s32.totalorder %s23, 8
      %p86 = por %p84, %p85
      %p88 = scmp.ne.s32.totalorder %s71, %s87
      %p89 = scmp.eq.s32.totalorder %s23, 0
      %p90 = por %p88, %p89
      %s91 = ssub.s32 %s24, %s36
      %p92 = scmp.eq.s32.totalorder %s91, 0
      %s94 = sadd.s32 %s93, 1
      %s95 = scalar_select %p92, %s93, %s94
      %p98 = pneg %p92
      %p99 = scmp.eq.s32.totalorder %s17, 8
      %p100 = por %p98, %p99
      %p101 = scmp.ne.s32.totalorder %s93, %s96
      %p102 = scmp.eq.s32.totalorder %s17, 0
      %p103 = por %p101, %p102
      %p104 = scmp.ne.s32.totalorder %s93, %s96
      %p105 = scmp.eq.s32.totalorder %s22, 8
      %p106 = por %p104, %p105
      %p107 = scmp.ne.s32.totalorder %s96, %s97
      %p108 = scmp.eq.s32.totalorder %s22, 0
      %p109 = por %p107, %p108
      %p110 = scmp.ne.s32.totalorder %s96, %s97
      %p111 = scmp.eq.s32.totalorder %s23, 8
      %p112 = por %p110, %p111
      %p114 = scmp.ne.s32.totalorder %s97, %s113
      %p115 = scmp.eq.s32.totalorder %s23, 0
      %p116 = por %p114, %p115
      %s118 = sadd.s32 %s117, 1
      %p121 = scmp.eq.s32.totalorder %s17, 8
      %p122 = scmp.ne.s32.totalorder %s117, %s119
      %p123 = scmp.eq.s32.totalorder %s17, 0
      %p124 = por %p122, %p123
      %p125 = scmp.ne.s32.totalorder %s117, %s119
      %p126 = scmp.eq.s32.totalorder %s22, 8
      %p127 = por %p125, %p126
      %p128 = scmp.ne.s32.totalorder %s119, %s120
      %p129 = scmp.eq.s32.totalorder %s22, 0
      %p130 = por %p128, %p129
      %p131 = scmp.ne.s32.totalorder %s119, %s120
      %p132 = scmp.eq.s32.totalorder %s23, 8
      %p133 = por %p131, %p132
      %p135 = scmp.ne.s32.totalorder %s120, %s134
      %p136 = scmp.eq.s32.totalorder %s23, 0
      %p137 = por %p135, %p136
      %s139 = sadd.s32 %s138, 1
      %p142 = scmp.eq.s32.totalorder %s17, 8
      %p143 = scmp.ne.s32.totalorder %s138, %s140
      %p144 = scmp.eq.s32.totalorder %s17, 0
      %p145 = por %p143, %p144
      %p146 = scmp.ne.s32.totalorder %s138, %s140
      %p147 = scmp.eq.s32.totalorder %s22, 8
      %p148 = por %p146, %p147
      %p149 = scmp.ne.s32.totalorder %s140, %s141
      %p150 = scmp.eq.s32.totalorder %s22, 0
      %p151 = por %p149, %p150
      %p152 = scmp.ne.s32.totalorder %s140, %s141
      %p153 = scmp.eq.s32.totalorder %s23, 8
      %p154 = por %p152, %p153
      %p156 = scmp.ne.s32.totalorder %s141, %s155
      %p157 = scmp.eq.s32.totalorder %s23, 0
      %p158 = por %p156, %p157
      %s160 = sadd.s32 %s159, 1
      %p163 = scmp.eq.s32.totalorder %s17, 8
      %p164 = scmp.ne.s32.totalorder %s159, %s161
      %p165 = scmp.eq.s32.totalorder %s17, 0
      %p166 = por %p164, %p165
      %p167 = scmp.ne.s32.totalorder %s159, %s161
      %p168 = scmp.eq.s32.totalorder %s22, 8
      %p169 = por %p167, %p168
      %p170 = scmp.ne.s32.totalorder %s161, %s162
      %p171 = scmp.eq.s32.totalorder %s22, 0
      %p172 = por %p170, %p171
      %p173 = scmp.ne.s32.totalorder %s161, %s162
      %p174 = scmp.eq.s32.totalorder %s23, 8
      %p175 = por %p173, %p174
      %p177 = scmp.ne.s32.totalorder %s162, %s176
      %p178 = scmp.eq.s32.totalorder %s23, 0
      %p179 = por %p177, %p178
      %s181 = sadd.s32 %s180, 1
      %p184 = scmp.eq.s32.totalorder %s17, 8
      %p185 = scmp.ne.s32.totalorder %s180, %s182
      %p186 = scmp.eq.s32.totalorder %s17, 0
      %p187 = por %p185, %p186
      %p188 = scmp.ne.s32.totalorder %s180, %s182
      %p189 = scmp.eq.s32.totalorder %s22, 8
      %p190 = por %p188, %p189
      %p191 = scmp.ne.s32.totalorder %s182, %s183
      %p192 = scmp.eq.s32.totalorder %s22, 0
      %p193 = por %p191, %p192
      %p194 = scmp.ne.s32.totalorder %s182, %s183
      %p195 = scmp.eq.s32.totalorder %s23, 8
      %p196 = por %p194, %p195
      %p198 = scmp.ne.s32.totalorder %s183, %s197
      %p199 = scmp.eq.s32.totalorder %s23, 0
      %p200 = por %p198, %p199
      %s202 = sadd.s32 %s201, 1
      %p205 = scmp.eq.s32.totalorder %s17, 8
      %p206 = scmp.ne.s32.totalorder %s201, %s203
      %p207 = scmp.eq.s32.totalorder %s17, 0
      %p208 = por %p206, %p207
      %p209 = scmp.ne.s32.totalorder %s201, %s203
      %p210 = scmp.eq.s32.totalorder %s22, 8
      %p211 = por %p209, %p210
      %p212 = scmp.ne.s32.totalorder %s203, %s204
      %p213 = scmp.eq.s32.totalorder %s22, 0
      %p214 = por %p212, %p213
      %p215 = scmp.ne.s32.totalorder %s203, %s204
      %p216 = scmp.eq.s32.totalorder %s23, 8
      %p217 = por %p215, %p216
      %p219 = scmp.ne.s32.totalorder %s204, %s218
      %p220 = scmp.eq.s32.totalorder %s23, 0
      %p221 = por %p219, %p220
      %s223 = sadd.s32 %s222, 1
      %p226 = scmp.eq.s32.totalorder %s17, 8
      %p227 = scmp.ne.s32.totalorder %s222, %s224
      %p228 = scmp.eq.s32.totalorder %s17, 0
      %p229 = por %p227, %p228
      %p230 = scmp.ne.s32.totalorder %s222, %s224
      %p231 = scmp.eq.s32.totalorder %s22, 8
      %p232 = por %p230, %p231
      %p233 = scmp.ne.s32.totalorder %s224, %s225
      %p234 = scmp.eq.s32.totalorder %s22, 0
      %p235 = por %p233, %p234
      %p236 = scmp.ne.s32.totalorder %s224, %s225
      %p237 = scmp.eq.s32.totalorder %s23, 8
      %p238 = por %p236, %p237
      %p240 = scmp.ne.s32.totalorder %s225, %s239
      %p241 = scmp.eq.s32.totalorder %s23, 0
      %p242 = por %p240, %p241
      %s244 = sadd.s32 %s243, 1
      %p247 = scmp.eq.s32.totalorder %s17, 8
      %p248 = scmp.ne.s32.totalorder %s243, %s245
      %p249 = scmp.eq.s32.totalorder %s17, 0
      %p250 = por %p248, %p249
      %p251 = scmp.ne.s32.totalorder %s243, %s245
      %p252 = scmp.eq.s32.totalorder %s22, 8
      %p253 = por %p251, %p252
      %p254 = scmp.ne.s32.totalorder %s245, %s246
      %p255 = scmp.eq.s32.totalorder %s22, 0
      %p256 = por %p254, %p255
      %p257 = scmp.ne.s32.totalorder %s245, %s246
      %p258 = scmp.eq.s32.totalorder %s23, 8
      %p259 = por %p257, %p258
      %p261 = scmp.ne.s32.totalorder %s246, %s260
      %p262 = scmp.eq.s32.totalorder %s23, 0
      %p263 = por %p261, %p262
      %s265 = sadd.s32 %s264, 1
      %p268 = scmp.eq.s32.totalorder %s17, 8
      %p269 = scmp.ne.s32.totalorder %s264, %s266
      %p270 = scmp.eq.s32.totalorder %s17, 0
      %p271 = por %p269, %p270
      %p272 = scmp.ne.s32.totalorder %s264, %s266
      %p273 = scmp.eq.s32.totalorder %s22, 8
      %p274 = por %p272, %p273
      %p275 = scmp.ne.s32.totalorder %s266, %s267
      %p276 = scmp.eq.s32.totalorder %s22, 0
      %p277 = por %p275, %p276
      %p278 = scmp.ne.s32.totalorder %s266, %s267
      %p279 = scmp.eq.s32.totalorder %s23, 8
      %p280 = por %p278, %p279
      %p282 = scmp.ne.s32.totalorder %s267, %s281
      %p283 = scmp.eq.s32.totalorder %s23, 0
      %p284 = por %p282, %p283
      %s285 = ssub.s32 %s24, %s36
      %p286 = scmp.eq.s32.totalorder %s285, 0
      %s288 = sadd.s32 %s287, 1
      %s289 = scalar_select %p286, %s287, %s288
      %p292 = pneg %p286
      %p293 = scmp.eq.s32.totalorder %s17, 8
      %p294 = por %p292, %p293
      %p295 = scmp.ne.s32.totalorder %s287, %s290
      %p296 = scmp.eq.s32.totalorder %s17, 0
      %p297 = por %p295, %p296
      %p298 = scmp.ne.s32.totalorder %s287, %s290
      %p299 = scmp.eq.s32.totalorder %s22, 8
      %p300 = por %p298, %p299
      %p301 = scmp.ne.s32.totalorder %s290, %s291
      %p302 = scmp.eq.s32.totalorder %s22, 0
      %p303 = por %p301, %p302
      %p304 = scmp.ne.s32.totalorder %s290, %s291
      %p305 = scmp.eq.s32.totalorder %s23, 8
      %p306 = por %p304, %p305
      %p308 = scmp.ne.s32.totalorder %s291, %s307
      %p309 = scmp.eq.s32.totalorder %s23, 0
      %p310 = por %p308, %p309
      %p311 = scmp.le.s32.totalorder 1, %s17
      %p312 = scmp.lt.s32.totalorder %s17, 10
      %p313 = pnand %p311, %p312
      %p314 = pneg %p313
      // Predicated region
      $region9: #{net_forward.8} parent=5 // pred_check
        _
      $region10: #{net_forward.8} parent=5 // pred_check_branch
        %316 = sbr.rel (%p313) target = $region12
      $region11: #{net_forward.8} parent=5 // pred_region
        %s317 = ssub.s32 %s17, 1
        // Predicated region
        $region13: #{net_forward.8} parent=11 // pred_check
          %p318 = pneg %p130
        $region14: #{net_forward.8} parent=11 // pred_check_branch
          %320 = sbr.rel (%p318) target = $region16
        $region15: #{net_forward.8} parent=11 // pred_region
          _
        $region16: #{net_forward.8} parent=11 // pred_fallthru
          _
        // Predicated region
        $region17: #{net_forward.8} parent=11 // pred_check
          %p321 = pneg %p151
        $region18: #{net_forward.8} parent=11 // pred_check_branch
          %323 = sbr.rel (%p321) target = $region20
        $region19: #{net_forward.8} parent=11 // pred_region
          _
        $region20: #{net_forward.8} parent=11 // pred_fallthru
          _
        // Predicated region
        $region21: #{net_forward.8} parent=11 // pred_check
          %p324 = pneg %p172
        $region22: #{net_forward.8} parent=11 // pred_check_branch
          %326 = sbr.rel (%p324) target = $region24
        $region23: #{net_forward.8} parent=11 // pred_region
          _
        $region24: #{net_forward.8} parent=11 // pred_fallthru
          _
        // Predicated region
        $region25: #{net_forward.8} parent=11 // pred_check
          %p327 = pneg %p193
        $region26: #{net_forward.8} parent=11 // pred_check_branch
          %329 = sbr.rel (%p327) target = $region28
        $region27: #{net_forward.8} parent=11 // pred_region
          _
        $region28: #{net_forward.8} parent=11 // pred_fallthru
          _
        // Predicated region
        $region29: #{net_forward.8} parent=11 // pred_check
          %p330 = pneg %p214
        $region30: #{net_forward.8} parent=11 // pred_check_branch
          %332 = sbr.rel (%p330) target = $region32
        $region31: #{net_forward.8} parent=11 // pred_region
          _
        $region32: #{net_forward.8} parent=11 // pred_fallthru
          _
        // Predicated region
        $region33: #{net_forward.8} parent=11 // pred_check
          %p333 = pneg %p235
        $region34: #{net_forward.8} parent=11 // pred_check_branch
          %335 = sbr.rel (%p333) target = $region36
        $region35: #{net_forward.8} parent=11 // pred_region
          _
        $region36: #{net_forward.8} parent=11 // pred_fallthru
          _
        // Predicated region
        $region37: #{net_forward.8} parent=11 // pred_check
          %p336 = pneg %p256
        $region38: #{net_forward.8} parent=11 // pred_check_branch
          %338 = sbr.rel (%p336) target = $region40
        $region39: #{net_forward.8} parent=11 // pred_region
          _
        $region40: #{net_forward.8} parent=11 // pred_fallthru
          _
        // Predicated region
        $region41: #{net_forward.8} parent=11 // pred_check
          %p339 = pneg %p277
        $region42: #{net_forward.8} parent=11 // pred_check_branch
          %341 = sbr.rel (%p339) target = $region44
        $region43: #{net_forward.8} parent=11 // pred_region
          _
        $region44: #{net_forward.8} parent=11 // pred_fallthru
          _
      $region12: #{net_forward.8} parent=5 // pred_fallthru
        _
      %p342 = scmp.lt.s32.totalorder %s17, 9
      // Predicated region
      $region45: #{net_forward.8} parent=5 // pred_check
        %p343 = pneg %p342
      $region46: #{net_forward.8} parent=5 // pred_check_branch
        %345 = sbr.rel (%p343) target = $region48
      $region47: #{net_forward.8} parent=5 // pred_region
        // Predicated region
        $region49: #{net_forward.8} parent=47 // pred_check
          %p346 = pneg %p51
        $region50: #{net_forward.8} parent=47 // pred_check_branch
          %348 = sbr.rel (%p346) target = $region52
        $region51: #{net_forward.8} parent=47 // pred_region
          %s349 = sand.u32 %s41, 1
          %s350 = sand.u32 %s41, 1
          %s351 = smul.addr %s350, 64
          %s352 = scalar_lea.vmem [#allocation3], %s351
          %s353 = smul.u32 16, %s24
          %s354 = smul.addr %s353, 3
          %s355 = sadd.s32 %s25, %s354
          %s356 = smul.addr %s355, 4
          %s357 = scalar_lea.vmem %s0, %s356
          // Predicated region
          $region53: #{net_forward.8} parent=51 // pred_check
            _
          $region54: #{net_forward.8} parent=51 // pred_check_branch
            %359 = sbr.rel (0) target = $region56
          $region55: #{net_forward.8} parent=51 // pred_region
            // Predicated region
            $region57: #{net_forward.8} parent=55 // pred_check
              _
            $region58: #{net_forward.8} parent=55 // pred_check_branch
              %361 = sbr.rel target = $region60
            $region59: #{net_forward.8} parent=55 // pred_region
              // Predicated region
              $region72: #{net_forward.8} parent=59 // pred_check
                _
              $region73: #{net_forward.8} parent=59 // pred_check_branch
                %406 = sbr.rel (0) target = $region75
              $region74: #{net_forward.8} parent=59 // pred_region
                loop: start=0, step=1, limit=1
                $region76: #{net_forward.8} parent=74 // loop_pre_header
                  _
                $region77: #{net_forward.8} parent=74 // loop_header
                  %s408 = sphi 0, %s412
                  %p409 = scmp.ge.s32.totalorder %s408, 1
                  %s413 = sphi %s357, %s357
                  %s414 = sphi %s352, %s352
                $region78: #{net_forward.8} parent=74 // loop_header_branch
                  %411 = sbr.rel (%p409) target = $region82
                $region79: #{net_forward.8} parent=74 // loop_body
                  _
                $region80: #{net_forward.8} parent=74 // loop_footer
                  %s412 = sadd.s32 1, %s408
                $region81: #{net_forward.8} parent=74 // loop_footer_branch
                  %407 = sbr.rel target = $region77
                $region82: #{net_forward.8} parent=74 // loop_exit
                  _
                loop: start=0, step=1, limit=1
                $region83: #{net_forward.8} parent=74 // loop_pre_header
                  _
                $region84: #{net_forward.8} parent=74 // loop_header
                  %s417 = sphi 0, %s421
                  %p418 = scmp.ge.s32.totalorder %s417, 1
                  %s422 = sphi %s357, %s357
                  %s423 = sphi %s352, %s352
                $region85: #{net_forward.8} parent=74 // loop_header_branch
                  %420 = sbr.rel (%p418) target = $region89
                $region86: #{net_forward.8} parent=74 // loop_body
                  %v424 = vld [vmem:[%s422] sm:$0xf]
                  %425 = vst [vmem:[%s423] sm:$0xf] %v424
                  %v426 = vld [vmem:[%s422 + $0xc] sm:$0xf]
                  %427 = vst [vmem:[%s423 + $0x4] sm:$0xf] %v426
                  %v428 = vld [vmem:[%s422 + $0x18] sm:$0xf]
                  %429 = vst [vmem:[%s423 + $0x8] sm:$0xf] %v428
                  %v430 = vld [vmem:[%s422 + $0x24] sm:$0xf]
                  %431 = vst [vmem:[%s423 + $0xc] sm:$0xf] %v430
                  %v432 = vld [vmem:[%s422 + $0x30] sm:$0xf]
                  %433 = vst [vmem:[%s423 + $0x10] sm:$0xf] %v432
                  %v434 = vld [vmem:[%s422 + $0x3c] sm:$0xf]
                  %435 = vst [vmem:[%s423 + $0x14] sm:$0xf] %v434
                  %v436 = vld [vmem:[%s422 + $0x48] sm:$0xf]
                  %437 = vst [vmem:[%s423 + $0x18] sm:$0xf] %v436
                  %v438 = vld [vmem:[%s422 + $0x54] sm:$0xf]
                  %439 = vst [vmem:[%s423 + $0x1c] sm:$0xf] %v438
                  %v440 = vld [vmem:[%s422 + $0x60] sm:$0xf]
                  %441 = vst [vmem:[%s423 + $0x20] sm:$0xf] %v440
                  %v442 = vld [vmem:[%s422 + $0x6c] sm:$0xf]
                  %443 = vst [vmem:[%s423 + $0x24] sm:$0xf] %v442
                  %v444 = vld [vmem:[%s422 + $0x78] sm:$0xf]
                  %445 = vst [vmem:[%s423 + $0x28] sm:$0xf] %v444
                  %v446 = vld [vmem:[%s422 + $0x84] sm:$0xf]
                  %447 = vst [vmem:[%s423 + $0x2c] sm:$0xf] %v446
                  %v448 = vld [vmem:[%s422 + $0x90] sm:$0xf]
                  %449 = vst [vmem:[%s423 + $0x30] sm:$0xf] %v448
                  %v450 = vld [vmem:[%s422 + $0x9c] sm:$0xf]
                  %451 = vst [vmem:[%s423 + $0x34] sm:$0xf] %v450
                  %v452 = vld [vmem:[%s422 + $0xa8] sm:$0xf]
                  %453 = vst [vmem:[%s423 + $0x38] sm:$0xf] %v452
                  %v454 = vld [vmem:[%s422 + $0xb4] sm:$0xf]
                  %455 = vst [vmem:[%s423 + $0x3c] sm:$0xf] %v454
                $region87: #{net_forward.8} parent=74 // loop_footer
                  %s421 = sadd.s32 1, %s417
                $region88: #{net_forward.8} parent=74 // loop_footer_branch
                  %416 = sbr.rel target = $region84
                $region89: #{net_forward.8} parent=74 // loop_exit
                  _
              $region75: #{net_forward.8} parent=59 // pred_fallthru
                _
            $region60: #{net_forward.8} parent=55 // pred_fallthru
              _
            // Predicated region
            $region61: #{net_forward.8} parent=55 // pred_check
              _
            $region62: #{net_forward.8} parent=55 // pred_check_branch
              %363 = sbr.rel (0) target = $region64
            $region63: #{net_forward.8} parent=55 // pred_region
              loop: start=0, step=1, limit=1
              $region65: #{net_forward.8} parent=63 // loop_pre_header
                _
              $region66: #{net_forward.8} parent=63 // loop_header
                %s366 = sphi 0, %s370
                %p367 = scmp.ge.s32.totalorder %s366, 1
                %s371 = sphi %s357, %s357
                %s372 = sphi %s352, %s352
              $region67: #{net_forward.8} parent=63 // loop_header_branch
                %369 = sbr.rel (%p367) target = $region71
              $region68: #{net_forward.8} parent=63 // loop_body
                %v373 = vld [vmem:[%s371] sm:$0xf]
                %374 = vst [vmem:[%s372] sm:$0xf] %v373
                %v375 = vld [vmem:[%s371 + $0xc] sm:$0xf]
                %376 = vst [vmem:[%s372 + $0x4] sm:$0xf] %v375
                %v377 = vld [vmem:[%s371 + $0x18] sm:$0xf]
                %378 = vst [vmem:[%s372 + $0x8] sm:$0xf] %v377
                %v379 = vld [vmem:[%s371 + $0x24] sm:$0xf]
                %380 = vst [vmem:[%s372 + $0xc] sm:$0xf] %v379
                %v381 = vld [vmem:[%s371 + $0x30] sm:$0xf]
                %382 = vst [vmem:[%s372 + $0x10] sm:$0xf] %v381
                %v383 = vld [vmem:[%s371 + $0x3c] sm:$0xf]
                %384 = vst [vmem:[%s372 + $0x14] sm:$0xf] %v383
                %v385 = vld [vmem:[%s371 + $0x48] sm:$0xf]
                %386 = vst [vmem:[%s372 + $0x18] sm:$0xf] %v385
                %v387 = vld [vmem:[%s371 + $0x54] sm:$0xf]
                %388 = vst [vmem:[%s372 + $0x1c] sm:$0xf] %v387
                %v389 = vld [vmem:[%s371 + $0x60] sm:$0xf]
                %390 = vst [vmem:[%s372 + $0x20] sm:$0xf] %v389
                %v391 = vld [vmem:[%s371 + $0x6c] sm:$0xf]
                %392 = vst [vmem:[%s372 + $0x24] sm:$0xf] %v391
                %v393 = vld [vmem:[%s371 + $0x78] sm:$0xf]
                %394 = vst [vmem:[%s372 + $0x28] sm:$0xf] %v393
                %v395 = vld [vmem:[%s371 + $0x84] sm:$0xf]
                %396 = vst [vmem:[%s372 + $0x2c] sm:$0xf] %v395
                %v397 = vld [vmem:[%s371 + $0x90] sm:$0xf]
                %398 = vst [vmem:[%s372 + $0x30] sm:$0xf] %v397
                %v399 = vld [vmem:[%s371 + $0x9c] sm:$0xf]
                %400 = vst [vmem:[%s372 + $0x34] sm:$0xf] %v399
                %v401 = vld [vmem:[%s371 + $0xa8] sm:$0xf]
                %402 = vst [vmem:[%s372 + $0x38] sm:$0xf] %v401
                %v403 = vld [vmem:[%s371 + $0xb4] sm:$0xf]
                %404 = vst [vmem:[%s372 + $0x3c] sm:$0xf] %v403
              $region69: #{net_forward.8} parent=63 // loop_footer
                %s370 = sadd.s32 1, %s366
              $region70: #{net_forward.8} parent=63 // loop_footer_branch
                %365 = sbr.rel target = $region66
              $region71: #{net_forward.8} parent=63 // loop_exit
                _
            $region64: #{net_forward.8} parent=55 // pred_fallthru
              _
          $region56: #{net_forward.8} parent=51 // pred_fallthru
            _
          %456 = vnop
        $region52: #{net_forward.8} parent=47 // pred_fallthru
          _
        // Predicated region
        $region90: #{net_forward.8} parent=47 // pred_check
          %p457 = pneg %p77
        $region91: #{net_forward.8} parent=47 // pred_check_branch
          %459 = sbr.rel (%p457) target = $region93
        $region92: #{net_forward.8} parent=47 // pred_region
          %s460 = smul.u32 16, %s25
          %p461 = scmp.lt.s32.totalorder %s460, 47
          %s462 = scalar_select %p461, %s460, 47
          %s463 = smul.addr %s462, 4
          %s464 = scalar_lea.vmem %s1, %s463
          %s465 = smul.u32 16, %s25
        $region93: #{net_forward.8} parent=47 // pred_fallthru
          _
        // Predicated region
        $region94: #{net_forward.8} parent=47 // pred_check
          %p466 = pneg %p103
        $region95: #{net_forward.8} parent=47 // pred_check_branch
          %468 = sbr.rel (%p466) target = $region97
        $region96: #{net_forward.8} parent=47 // pred_region
          %s469 = smul.u32 16, %s24
          %p470 = scmp.lt.s32.totalorder %s469, 47
          %s471 = scalar_select %p470, %s469, 47
          %s472 = smul.addr %s471, 8
          %s473 = scalar_lea.vmem %s2, %s472
          %s474 = smul.u32 16, %s24
        $region97: #{net_forward.8} parent=47 // pred_fallthru
          _
      $region48: #{net_forward.8} parent=5 // pred_fallthru
        _
      %p475 = scmp.le.s32.totalorder 1, %s17
      %p476 = scmp.lt.s32.totalorder %s17, 10
      %p477 = pnand %p475, %p476
      %p478 = pneg %p477
      // Predicated region
      $region98: #{net_forward.8} parent=5 // pred_check
        _
      $region99: #{net_forward.8} parent=5 // pred_check_branch
        %480 = sbr.rel (%p477) target = $region101
      $region100: #{net_forward.8} parent=5 // pred_region
        %s481 = ssub.s32 %s17, 1
        %s482 = sand.u32 %s44, 1
        %s483 = sand.u32 %s44, 1
        %s484 = smul.addr %s483, 64
        %s485 = scalar_lea.vmem [#allocation3], %s484
        // Predicated region
        $region102: #{net_forward.8} parent=100 // pred_check
          %p486 = pneg %p57
        $region103: #{net_forward.8} parent=100 // pred_check_branch
          %488 = sbr.rel (%p486) target = $region105
        $region104: #{net_forward.8} parent=100 // pred_region
          _
        $region105: #{net_forward.8} parent=100 // pred_fallthru
          _
        %s489 = sand.u32 %s44, 1
        %s490 = sand.u32 %s44, 1
        %s491 = smul.addr %s490, 64
        %s492 = scalar_lea.vmem [#allocation3], %s491
        %p493 = pneg %p57
        %p494 = pneg %p54
        %s495 = smul.u32 16, %s27
        %p496 = scmp.lt.s32.totalorder %s495, 47
        %s497 = scalar_select %p496, %s495, 47
        %s498 = smul.addr %s497, 4
        %s499 = scalar_lea.vmem %s1, %s498
        %p500 = pneg %p83
        %p501 = pneg %p80
        %s502 = smul.u32 16, %s26
        %p503 = scmp.lt.s32.totalorder %s502, 47
        %s504 = scalar_select %p503, %s502, 47
        %s505 = smul.addr %s504, 8
        %s506 = scalar_lea.vmem %s2, %s505
        %p507 = pneg %p109
        %p508 = pneg %p106
        %p509 = pneg %p130
        %p510 = pneg %p127
        %p511 = pneg %p151
        %p512 = pneg %p148
        %p513 = pneg %p172
        %p514 = pneg %p169
        %p515 = pneg %p193
        %p516 = pneg %p190
        %p517 = pneg %p214
        %p518 = pneg %p211
        %p519 = pneg %p235
        %p520 = pneg %p232
        %p521 = pneg %p256
        %p522 = pneg %p253
        %p523 = pneg %p277
        %p524 = pneg %p274
        %p525 = pneg %p303
        %p526 = pneg %p300
        %s527 = smul.u32 16, %s26
        %p528 = scmp.lt.s32.totalorder %s527, 47
        %s529 = scalar_select %p528, %s527, 47
        %s530 = smul.addr %s529, 8
        %s531 = scalar_lea.vmem %s11, %s530
        %s532 = smul.u32 16, %s26
        %s533 = smul.u32 16, %s27
        %p534 = scmp.lt.s32.totalorder %s533, 47
        %s535 = scalar_select %p534, %s533, 47
        %s536 = smul.addr %s535, 4
        %s537 = scalar_lea.vmem %s1, %s536
        %s538 = smul.u32 16, %s27
        %s539 = smul.u32 16, %s26
        %p540 = scmp.lt.s32.totalorder %s539, 47
        %s541 = scalar_select %p540, %s539, 47
        %s542 = smul.addr %s541, 8
        %s543 = scalar_lea.vmem %s2, %s542
        %s544 = smul.u32 16, %s26
        %s545 = smul.u32 16, %s26
        %p546 = scmp.lt.s32.totalorder %s545, 47
        %s547 = scalar_select %p546, %s545, 47
        %s548 = smul.addr %s547, 8
        %s549 = scalar_lea.vmem %s11, %s548
        %s550 = smul.u32 16, %s26
        %p552 = scmp.eq.s32.totalorder %s27, 0
        // Predicated region
        $region106: #{net_forward.8} parent=100 // pred_check
          %p553 = pneg %p552
        $region107: #{net_forward.8} parent=100 // pred_check_branch
          %555 = sbr.rel (%p553) target = $region109
        $region108: #{net_forward.8} parent=100 // pred_region
          %556 = vst [vmem:[#allocation2] sm:$0xff] 0.0
          %557 = vst [vmem:[#allocation2 + $0x8] sm:$0xff] 0.0
          %558 = vst [vmem:[#allocation2 + $0x10] sm:$0xff] 0.0
          %559 = vst [vmem:[#allocation2 + $0x18] sm:$0xff] 0.0
          %560 = vst [vmem:[#allocation2 + $0x20] sm:$0xff] 0.0
          %561 = vst [vmem:[#allocation2 + $0x28] sm:$0xff] 0.0
          %562 = vst [vmem:[#allocation2 + $0x30] sm:$0xff] 0.0
          %563 = vst [vmem:[#allocation2 + $0x38] sm:$0xff] 0.0
          %564 = vst [vmem:[#allocation2 + $0x40] sm:$0xff] 0.0
          %565 = vst [vmem:[#allocation2 + $0x48] sm:$0xff] 0.0
          %566 = vst [vmem:[#allocation2 + $0x50] sm:$0xff] 0.0
          %567 = vst [vmem:[#allocation2 + $0x58] sm:$0xff] 0.0
          %568 = vst [vmem:[#allocation2 + $0x60] sm:$0xff] 0.0
          %569 = vst [vmem:[#allocation2 + $0x68] sm:$0xff] 0.0
          %570 = vst [vmem:[#allocation2 + $0x70] sm:$0xff] 0.0
          %571 = vst [vmem:[#allocation2 + $0x78] sm:$0xff] 0.0
        $region109: #{net_forward.8} parent=100 // pred_fallthru
          _
        %v572 = vld [vmem:[#allocation2] sm:$0xff]
        %v573 = vld [vmem:[#allocation2 + $0x8] sm:$0xff]
        %v574 = vld [vmem:[#allocation2 + $0x10] sm:$0xff]
        %v575 = vld [vmem:[#allocation2 + $0x18] sm:$0xff]
        %v576 = vld [vmem:[#allocation2 + $0x20] sm:$0xff]
        %v577 = vld [vmem:[#allocation2 + $0x28] sm:$0xff]
        %v578 = vld [vmem:[#allocation2 + $0x30] sm:$0xff]
        %v579 = vld [vmem:[#allocation2 + $0x38] sm:$0xff]
        %v580 = vld [vmem:[#allocation2 + $0x40] sm:$0xff]
        %v581 = vld [vmem:[#allocation2 + $0x48] sm:$0xff]
        %v582 = vld [vmem:[#allocation2 + $0x50] sm:$0xff]
        %v583 = vld [vmem:[#allocation2 + $0x58] sm:$0xff]
        %v584 = vld [vmem:[#allocation2 + $0x60] sm:$0xff]
        %v585 = vld [vmem:[#allocation2 + $0x68] sm:$0xff]
        %v586 = vld [vmem:[#allocation2 + $0x70] sm:$0xff]
        %v587 = vld [vmem:[#allocation2 + $0x78] sm:$0xff]
        %v588 = vld [vmem:[%s485] sm:$0xf]
        %v589 = vld [vmem:[%s485 + $0x4] sm:$0xf]
        %v590 = vld [vmem:[%s485 + $0x8] sm:$0xf]
        %v591 = vld [vmem:[%s485 + $0xc] sm:$0xf]
        %v592 = vld [vmem:[%s485 + $0x10] sm:$0xf]
        %v593 = vld [vmem:[%s485 + $0x14] sm:$0xf]
        %v594 = vld [vmem:[%s485 + $0x18] sm:$0xf]
        %v595 = vld [vmem:[%s485 + $0x1c] sm:$0xf]
        %v596 = vld [vmem:[%s485 + $0x20] sm:$0xf]
        %v597 = vld [vmem:[%s485 + $0x24] sm:$0xf]
        %v598 = vld [vmem:[%s485 + $0x28] sm:$0xf]
        %v599 = vld [vmem:[%s485 + $0x2c] sm:$0xf]
        %v600 = vld [vmem:[%s485 + $0x30] sm:$0xf]
        %v601 = vld [vmem:[%s485 + $0x34] sm:$0xf]
        %v602 = vld [vmem:[%s485 + $0x38] sm:$0xf]
        %v603 = vld [vmem:[%s485 + $0x3c] sm:$0xf]
        %v604 = vld [vmem:[%s537] sm:$0xf]
        %v605 = vld [vmem:[%s537 + $0x4] sm:$0xf]
        %v606 = vld [vmem:[%s537 + $0x8] sm:$0xf]
        %v607 = vld [vmem:[%s537 + $0xc] sm:$0xf]
        %v608 = vld [vmem:[%s537 + $0x10] sm:$0xf]
        %v609 = vld [vmem:[%s537 + $0x14] sm:$0xf]
        %v610 = vld [vmem:[%s537 + $0x18] sm:$0xf]
        %v611 = vld [vmem:[%s537 + $0x1c] sm:$0xf]
        %v612 = vld [vmem:[%s537 + $0x20] sm:$0xf]
        %v613 = vld [vmem:[%s537 + $0x24] sm:$0xf]
        %v614 = vld [vmem:[%s537 + $0x28] sm:$0xf]
        %v615 = vld [vmem:[%s537 + $0x2c] sm:$0xf]
        %v616 = vld [vmem:[%s537 + $0x30] sm:$0xf]
        %v617 = vld [vmem:[%s537 + $0x34] sm:$0xf]
        %v618 = vld [vmem:[%s537 + $0x38] sm:$0xf]
        %v619 = vld [vmem:[%s537 + $0x3c] sm:$0xf]
        %v636 = vunpack.c.l.b16 %v588
        %v637 = vunpack.c.l.b16 %v589
        %v638 = vunpack.c.l.b16 %v590
        %v639 = vunpack.c.l.b16 %v591
        %v640 = vunpack.c.l.b16 %v592
        %v641 = vunpack.c.l.b16 %v593
        %v642 = vunpack.c.l.b16 %v594
        %v643 = vunpack.c.l.b16 %v595
        %v644 = vunpack.c.l.b16 %v596
        %v645 = vunpack.c.l.b16 %v597
        %v646 = vunpack.c.l.b16 %v598
        %v647 = vunpack.c.l.b16 %v599
        %v648 = vunpack.c.l.b16 %v600
        %v649 = vunpack.c.l.b16 %v601
        %v650 = vunpack.c.l.b16 %v602
        %v651 = vunpack.c.l.b16 %v603
        %v652 = vpack.c.b16 %v637, %v636
        %v653 = vpack.c.b16 %v639, %v638
        %v654 = vpack.c.b16 %v641, %v640
        %v655 = vpack.c.b16 %v643, %v642
        %v656 = vpack.c.b16 %v645, %v644
        %v657 = vpack.c.b16 %v647, %v646
        %v658 = vpack.c.b16 %v649, %v648
        %v659 = vpack.c.b16 %v651, %v650
        %v684 = vunpack.c.l.b16 %v604
        %v685 = vunpack.c.l.b16 %v605
        %v686 = vunpack.c.l.b16 %v606
        %v687 = vunpack.c.l.b16 %v607
        %v688 = vunpack.c.l.b16 %v608
        %v689 = vunpack.c.l.b16 %v609
        %v690 = vunpack.c.l.b16 %v610
        %v691 = vunpack.c.l.b16 %v611
        %v692 = vunpack.c.l.b16 %v612
        %v693 = vunpack.c.l.b16 %v613
        %v694 = vunpack.c.l.b16 %v614
        %v695 = vunpack.c.l.b16 %v615
        %v696 = vunpack.c.l.b16 %v616
        %v697 = vunpack.c.l.b16 %v617
        %v698 = vunpack.c.l.b16 %v618
        %v699 = vunpack.c.l.b16 %v619
        %v700 = vpack.c.b16 %v685, %v684
        %v701 = vpack.c.b16 %v687, %v686
        %v702 = vpack.c.b16 %v689, %v688
        %v703 = vpack.c.b16 %v691, %v690
        %v704 = vpack.c.b16 %v693, %v692
        %v705 = vpack.c.b16 %v695, %v694
        %v706 = vpack.c.b16 %v697, %v696
        %v707 = vpack.c.b16 %v699, %v698
        %716 = vmatprep.subr.bf16.mxu0 0
        %717 = vmatpush1.bf16.msra.mxu0 %v700
        %718 = vmatprep.subr.bf16.mxu0 0
        %719 = vmatpush1.bf16.msra.mxu0 %v701
        %720 = vmatprep.subr.bf16.mxu0 0
        %721 = vmatpush1.bf16.msra.mxu0 %v702
        %722 = vmatprep.subr.bf16.mxu0 0
        %723 = vmatpush1.bf16.msra.mxu0 %v703
        %724 = vmatprep.subr.bf16.mxu0 0
        %725 = vmatpush1.bf16.msra.mxu0 %v704
        %726 = vmatprep.subr.bf16.mxu0 0
        %727 = vmatpush1.bf16.msra.mxu0 %v705
        %728 = vmatprep.subr.bf16.mxu0 0
        %729 = vmatpush1.bf16.msra.mxu0 %v706
        %730 = vmatprep.subr.bf16.mxu0 0
        %731 = vmatpush1.bf16.msra.mxu0 %v707
        %732 = vmatprep.subr.bf16.mxu0 0
        %733 = vmatpush1.bf16.msra.mxu0 0
        %734 = vmatprep.subr.bf16.mxu0 0
        %735 = vmatpush1.bf16.msra.mxu0 0
        %736 = vmatprep.subr.bf16.mxu0 0
        %737 = vmatpush1.bf16.msra.mxu0 0
        %738 = vmatprep.subr.bf16.mxu0 0
        %739 = vmatpush1.bf16.msra.mxu0 0
        %740 = vmatprep.subr.bf16.mxu0 0
        %741 = vmatpush1.bf16.msra.mxu0 0
        %742 = vmatprep.subr.bf16.mxu0 0
        %743 = vmatpush1.bf16.msra.mxu0 0
        %744 = vmatprep.subr.bf16.mxu0 0
        %745 = vmatpush1.bf16.msra.mxu0 0
        %746 = vmatprep.subr.bf16.mxu0 0
        %747 = vmatpush1.bf16.msra.mxu0 0
        %748 = vmatprep.mubr.bf16.mxu0 0
        %749 = vmatmul.mubr.bf16.gmra.mrb[0].mxu0 %v652
        %v750 = vpop.f32.mrb[0].mxu0
        %v751 = vadd.f32 0.0, %v750
        %v752 = vpop.f32.mrb[0].mxu0
        %v753 = vpop.f32.mrb[0].mxu0
        %v754 = vadd.f32 0.0, %v753
        %v755 = vpop.f32.mrb[0].mxu0
        %756 = vmatprep.mubr.bf16.mxu0 0
        %757 = vmatmul.mubr.bf16.gmra.mrb[0].mxu0 %v653
        %v758 = vpop.f32.mrb[0].mxu0
        %v759 = vadd.f32 0.0, %v758
        %v760 = vpop.f32.mrb[0].mxu0
        %v761 = vpop.f32.mrb[0].mxu0
        %v762 = vadd.f32 0.0, %v761
        %v763 = vpop.f32.mrb[0].mxu0
        %764 = vmatprep.mubr.bf16.mxu0 0
        %765 = vmatmul.mubr.bf16.gmra.mrb[0].mxu0 %v654
        %v766 = vpop.f32.mrb[0].mxu0
        %v767 = vadd.f32 0.0, %v766
        %v768 = vpop.f32.mrb[0].mxu0
        %v769 = vpop.f32.mrb[0].mxu0
        %v770 = vadd.f32 0.0, %v769
        %v771 = vpop.f32.mrb[0].mxu0
        %772 = vmatprep.mubr.bf16.mxu0 0
        %773 = vmatmul.mubr.bf16.gmra.mrb[0].mxu0 %v655
        %v774 = vpop.f32.mrb[0].mxu0
        %v775 = vadd.f32 0.0, %v774
        %v776 = vpop.f32.mrb[0].mxu0
        %v777 = vpop.f32.mrb[0].mxu0
        %v778 = vadd.f32 0.0, %v777
        %v779 = vpop.f32.mrb[0].mxu0
        %780 = vmatprep.mubr.bf16.mxu0 0
        %781 = vmatmul.mubr.bf16.gmra.mrb[0].mxu0 %v656
        %v782 = vpop.f32.mrb[0].mxu0
        %v783 = vadd.f32 0.0, %v782
        %v784 = vpop.f32.mrb[0].mxu0
        %v785 = vpop.f32.mrb[0].mxu0
        %v786 = vadd.f32 0.0, %v785
        %v787 = vpop.f32.mrb[0].mxu0
        %788 = vmatprep.mubr.bf16.mxu0 0
        %789 = vmatmul.mubr.bf16.gmra.mrb[0].mxu0 %v657
        %v790 = vpop.f32.mrb[0].mxu0
        %v791 = vadd.f32 0.0, %v790
        %v792 = vpop.f32.mrb[0].mxu0
        %v793 = vpop.f32.mrb[0].mxu0
        %v794 = vadd.f32 0.0, %v793
        %v795 = vpop.f32.mrb[0].mxu0
        %796 = vmatprep.mubr.bf16.mxu0 0
        %797 = vmatmul.mubr.bf16.gmra.mrb[0].mxu0 %v658
        %v798 = vpop.f32.mrb[0].mxu0
        %v799 = vadd.f32 0.0, %v798
        %v800 = vpop.f32.mrb[0].mxu0
        %v801 = vpop.f32.mrb[0].mxu0
        %v802 = vadd.f32 0.0, %v801
        %v803 = vpop.f32.mrb[0].mxu0
        %804 = vmatprep.mubr.bf16.mxu0 0
        %805 = vmatmul.mubr.bf16.gmra.mrb[0].mxu0 %v659
        %v806 = vpop.f32.mrb[0].mxu0
        %v807 = vadd.f32 0.0, %v806
        %v808 = vpop.f32.mrb[0].mxu0
        %v809 = vpop.f32.mrb[0].mxu0
        %v810 = vadd.f32 0.0, %v809
        %v811 = vpop.f32.mrb[0].mxu0
        %812 = vdwg.mxu0
        %v813 = vadd.f32 %v572, %v751
        %v814 = vadd.f32 %v573, %v754
        %v815 = vadd.f32 %v574, %v759
        %v816 = vadd.f32 %v575, %v762
        %v817 = vadd.f32 %v576, %v767
        %v818 = vadd.f32 %v577, %v770
        %v819 = vadd.f32 %v578, %v775
        %v820 = vadd.f32 %v579, %v778
        %v821 = vadd.f32 %v580, %v783
        %v822 = vadd.f32 %v581, %v786
        %v823 = vadd.f32 %v582, %v791
        %v824 = vadd.f32 %v583, %v794
        %v825 = vadd.f32 %v584, %v799
        %v826 = vadd.f32 %v585, %v802
        %v827 = vadd.f32 %v586, %v807
        %v828 = vadd.f32 %v587, %v810
        %829 = vst [vmem:[#allocation2] sm:$0xff] %v813
        %830 = vst [vmem:[#allocation2 + $0x8] sm:$0xff] %v814
        %831 = vst [vmem:[#allocation2 + $0x10] sm:$0xff] %v815
        %832 = vst [vmem:[#allocation2 + $0x18] sm:$0xff] %v816
        %833 = vst [vmem:[#allocation2 + $0x20] sm:$0xff] %v817
        %834 = vst [vmem:[#allocation2 + $0x28] sm:$0xff] %v818
        %835 = vst [vmem:[#allocation2 + $0x30] sm:$0xff] %v819
        %836 = vst [vmem:[#allocation2 + $0x38] sm:$0xff] %v820
        %837 = vst [vmem:[#allocation2 + $0x40] sm:$0xff] %v821
        %838 = vst [vmem:[#allocation2 + $0x48] sm:$0xff] %v822
        %839 = vst [vmem:[#allocation2 + $0x50] sm:$0xff] %v823
        %840 = vst [vmem:[#allocation2 + $0x58] sm:$0xff] %v824
        %841 = vst [vmem:[#allocation2 + $0x60] sm:$0xff] %v825
        %842 = vst [vmem:[#allocation2 + $0x68] sm:$0xff] %v826
        %843 = vst [vmem:[#allocation2 + $0x70] sm:$0xff] %v827
        %844 = vst [vmem:[#allocation2 + $0x78] sm:$0xff] %v828
        %p845 = scmp.eq.s32.totalorder %s27, 2
        // Predicated region
        $region110: #{net_forward.8} parent=100 // pred_check
          %p846 = pneg %p845
        $region111: #{net_forward.8} parent=100 // pred_check_branch
          %848 = sbr.rel (%p846) target = $region113
        $region112: #{net_forward.8} parent=100 // pred_region
          %v849 = vld [vmem:[#allocation2] sm:$0xff]
          %v850 = vld [vmem:[#allocation2 + $0x8] sm:$0xff]
          %v851 = vld [vmem:[#allocation2 + $0x10] sm:$0xff]
          %v852 = vld [vmem:[#allocation2 + $0x18] sm:$0xff]
          %v853 = vld [vmem:[#allocation2 + $0x20] sm:$0xff]
          %v854 = vld [vmem:[#allocation2 + $0x28] sm:$0xff]
          %v855 = vld [vmem:[#allocation2 + $0x30] sm:$0xff]
          %v856 = vld [vmem:[#allocation2 + $0x38] sm:$0xff]
          %v857 = vld [vmem:[#allocation2 + $0x40] sm:$0xff]
          %v858 = vld [vmem:[#allocation2 + $0x48] sm:$0xff]
          %v859 = vld [vmem:[#allocation2 + $0x50] sm:$0xff]
          %v860 = vld [vmem:[#allocation2 + $0x58] sm:$0xff]
          %v861 = vld [vmem:[#allocation2 + $0x60] sm:$0xff]
          %v862 = vld [vmem:[#allocation2 + $0x68] sm:$0xff]
          %v863 = vld [vmem:[#allocation2 + $0x70] sm:$0xff]
          %v864 = vld [vmem:[#allocation2 + $0x78] sm:$0xff]
          %v865 = vld [vmem:[%s3] sm:$0xff]
          %v866 = vld [vmem:[%s3 + $0x8] sm:$0xff]
          %v867 = vld [vmem:[%s3 + $0x10] sm:$0xff]
          %v868 = vld [vmem:[%s3 + $0x18] sm:$0xff]
          %v869 = vld [vmem:[%s3 + $0x20] sm:$0xff]
          %v870 = vld [vmem:[%s3 + $0x28] sm:$0xff]
          %v871 = vld [vmem:[%s3 + $0x30] sm:$0xff]
          %v872 = vld [vmem:[%s3 + $0x38] sm:$0xff]
          %v873 = vld [vmem:[%s3 + $0x40] sm:$0xff]
          %v874 = vld [vmem:[%s3 + $0x48] sm:$0xff]
          %v875 = vld [vmem:[%s3 + $0x50] sm:$0xff]
          %v876 = vld [vmem:[%s3 + $0x58] sm:$0xff]
          %v877 = vld [vmem:[%s3 + $0x60] sm:$0xff]
          %v878 = vld [vmem:[%s3 + $0x68] sm:$0xff]
          %v879 = vld [vmem:[%s3 + $0x70] sm:$0xff]
          %v880 = vld [vmem:[%s3 + $0x78] sm:$0xff]
          %v881 = vld [vmem:[%s4] sm:$0x1]
          %v882 = vld [vmem:[%s5] sm:$0xff]
          %v883 = vld [vmem:[%s5 + $0x8] sm:$0xff]
          %v884 = vld [vmem:[%s5 + $0x10] sm:$0xff]
          %v885 = vld [vmem:[%s5 + $0x18] sm:$0xff]
          %v886 = vld [vmem:[%s5 + $0x20] sm:$0xff]
          %v887 = vld [vmem:[%s5 + $0x28] sm:$0xff]
          %v888 = vld [vmem:[%s5 + $0x30] sm:$0xff]
          %v889 = vld [vmem:[%s5 + $0x38] sm:$0xff]
          %v890 = vld [vmem:[%s5 + $0x40] sm:$0xff]
          %v891 = vld [vmem:[%s5 + $0x48] sm:$0xff]
          %v892 = vld [vmem:[%s5 + $0x50] sm:$0xff]
          %v893 = vld [vmem:[%s5 + $0x58] sm:$0xff]
          %v894 = vld [vmem:[%s5 + $0x60] sm:$0xff]
          %v895 = vld [vmem:[%s5 + $0x68] sm:$0xff]
          %v896 = vld [vmem:[%s5 + $0x70] sm:$0xff]
          %v897 = vld [vmem:[%s5 + $0x78] sm:$0xff]
          %v898 = vld [vmem:[%s6] sm:$0x1]
          %v900 = vlaneseq
          %v901 = vshrl.u32 %v900, 7
          %v902 = vsub.s32 0, %v901
          %v903 = vrot.slane %v881, %v902
          %905 = vmatprep.subr.mxu0 0.0
          %906 = vmatpush1.msra.mxu0 %v865
          %907 = vmatprep.subr.mxu0 0.0
          %908 = vmatpush1.msra.mxu0 %v866
          %909 = vmatprep.subr.mxu0 0.0
          %910 = vmatpush1.msra.mxu0 %v867
          %911 = vmatprep.subr.mxu0 0.0
          %912 = vmatpush1.msra.mxu0 %v868
          %913 = vmatprep.subr.mxu0 0.0
          %914 = vmatpush1.msra.mxu0 %v869
          %915 = vmatprep.subr.mxu0 0.0
          %916 = vmatpush1.msra.mxu0 %v870
          %917 = vmatprep.subr.mxu0 0.0
          %918 = vmatpush1.msra.mxu0 %v871
          %919 = vmatprep.subr.mxu0 0.0
          %920 = vmatpush1.msra.mxu0 %v872
          %921 = vmatprep.subr.mxu0 0.0
          %922 = vmatpush1.msra.mxu0 %v873
          %923 = vmatprep.subr.mxu0 0.0
          %924 = vmatpush1.msra.mxu0 %v874
          %925 = vmatprep.subr.mxu0 0.0
          %926 = vmatpush1.msra.mxu0 %v875
          %927 = vmatprep.subr.mxu0 0.0
          %928 = vmatpush1.msra.mxu0 %v876
          %929 = vmatprep.subr.mxu0 0.0
          %930 = vmatpush1.msra.mxu0 %v877
          %931 = vmatprep.subr.mxu0 0.0
          %932 = vmatpush1.msra.mxu0 %v878
          %933 = vmatprep.subr.mxu0 0.0
          %934 = vmatpush1.msra.mxu0 %v879
          %935 = vmatprep.subr.mxu0 0.0
          %936 = vmatpush1.msra.mxu0 %v880
          %937 = vmatprep.subr.mxu0 0.0
          %938 = vmatpush1.msra.mxu0 0.0
          %939 = vmatprep.subr.mxu0 0.0
          %940 = vmatpush1.msra.mxu0 0.0
          %941 = vmatprep.subr.mxu0 0.0
          %942 = vmatpush1.msra.mxu0 0.0
          %943 = vmatprep.subr.mxu0 0.0
          %944 = vmatpush1.msra.mxu0 0.0
          %945 = vmatprep.subr.mxu0 0.0
          %946 = vmatpush1.msra.mxu0 0.0
          %947 = vmatprep.subr.mxu0 0.0
          %948 = vmatpush1.msra.mxu0 0.0
          %949 = vmatprep.subr.mxu0 0.0
          %950 = vmatpush1.msra.mxu0 0.0
          %951 = vmatprep.subr.mxu0 0.0
          %952 = vmatpush1.msra.mxu0 0.0
          %953 = vmatprep.subr.mxu0 0.0
          %954 = vmatpush1.msra.mxu0 0.0
          %955 = vmatprep.subr.mxu0 0.0
          %956 = vmatpush1.msra.mxu0 0.0
          %957 = vmatprep.subr.mxu0 0.0
          %958 = vmatpush1.msra.mxu0 0.0
          %959 = vmatprep.subr.mxu0 0.0
          %960 = vmatpush1.msra.mxu0 0.0
          %961 = vmatprep.subr.mxu0 0.0
          %962 = vmatpush1.msra.mxu0 0.0
          %963 = vmatprep.subr.mxu0 0.0
          %964 = vmatpush1.msra.mxu0 0.0
          %965 = vmatprep.subr.mxu0 0.0
          %966 = vmatpush1.msra.mxu0 0.0
          %967 = vmatprep.subr.mxu0 0.0
          %968 = vmatpush1.msra.mxu0 0.0
          %969 = vmatprep.mubr.f32.mxu0 0.0
          %970 = vmatmul.mubr.f32.gmra.mrb[0].mxu0 %v849
          %v971 = vpop.f32.mrb[0].mxu0
          %v972 = vadd.f32 %v903, %v971
          %v973 = vpop.f32.mrb[0].mxu0
          %974 = vmatprep.mubr.f32.mxu0 0.0
          %975 = vmatmul.mubr.f32.gmra.mrb[0].mxu0 %v850
          %v976 = vpop.f32.mrb[0].mxu0
          %v977 = vadd.f32 %v903, %v976
          %v978 = vpop.f32.mrb[0].mxu0
          %979 = vmatprep.mubr.f32.mxu0 0.0
          %980 = vmatmul.mubr.f32.gmra.mrb[0].mxu0 %v851
          %v981 = vpop.f32.mrb[0].mxu0
          %v982 = vadd.f32 %v903, %v981
          %v983 = vpop.f32.mrb[0].mxu0
          %984 = vmatprep.mubr.f32.mxu0 0.0
          %985 = vmatmul.mubr.f32.gmra.mrb[0].mxu0 %v852
          %v986 = vpop.f32.mrb[0].mxu0
          %v987 = vadd.f32 %v903, %v986
          %v988 = vpop.f32.mrb[0].mxu0
          %989 = vmatprep.mubr.f32.mxu0 0.0
          %990 = vmatmul.mubr.f32.gmra.mrb[0].mxu0 %v853
          %v991 = vpop.f32.mrb[0].mxu0
          %v992 = vadd.f32 %v903, %v991
          %v993 = vpop.f32.mrb[0].mxu0
          %994 = vmatprep.mubr.f32.mxu0 0.0
          %995 = vmatmul.mubr.f32.gmra.mrb[0].mxu0 %v854
          %v996 = vpop.f32.mrb[0].mxu0
          %v997 = vadd.f32 %v903, %v996
          %v998 = vpop.f32.mrb[0].mxu0
          %999 = vmatprep.mubr.f32.mxu0 0.0
          %1000 = vmatmul.mubr.f32.gmra.mrb[0].mxu0 %v855
          %v1001 = vpop.f32.mrb[0].mxu0
          %v1002 = vadd.f32 %v903, %v1001
          %v1003 = vpop.f32.mrb[0].mxu0
          %1004 = vmatprep.mubr.f32.mxu0 0.0
          %1005 = vmatmul.mubr.f32.gmra.mrb[0].mxu0 %v856
          %v1006 = vpop.f32.mrb[0].mxu0
          %v1007 = vadd.f32 %v903, %v1006
          %v1008 = vpop.f32.mrb[0].mxu0
          %1009 = vmatprep.mubr.f32.mxu0 0.0
          %1010 = vmatmul.mubr.f32.gmra.mrb[0].mxu0 %v857
          %v1011 = vpop.f32.mrb[0].mxu0
          %v1012 = vadd.f32 %v903, %v1011
          %v1013 = vpop.f32.mrb[0].mxu0
          %1014 = vmatprep.mubr.f32.mxu0 0.0
          %1015 = vmatmul.mubr.f32.gmra.mrb[0].mxu0 %v858
          %v1016 = vpop.f32.mrb[0].mxu0
          %v1017 = vadd.f32 %v903, %v1016
          %v1018 = vpop.f32.mrb[0].mxu0
          %1019 = vmatprep.mubr.f32.mxu0 0.0
          %1020 = vmatmul.mubr.f32.gmra.mrb[0].mxu0 %v859
          %v1021 = vpop.f32.mrb[0].mxu0
          %v1022 = vadd.f32 %v903, %v1021
          %v1023 = vpop.f32.mrb[0].mxu0
          %1024 = vmatprep.mubr.f32.mxu0 0.0
          %1025 = vmatmul.mubr.f32.gmra.mrb[0].mxu0 %v860
          %v1026 = vpop.f32.mrb[0].mxu0
          %v1027 = vadd.f32 %v903, %v1026
          %v1028 = vpop.f32.mrb[0].mxu0
          %1029 = vmatprep.mubr.f32.mxu0 0.0
          %1030 = vmatmul.mubr.f32.gmra.mrb[0].mxu0 %v861
          %v1031 = vpop.f32.mrb[0].mxu0
          %v1032 = vadd.f32 %v903, %v1031
          %v1033 = vpop.f32.mrb[0].mxu0
          %1034 = vmatprep.mubr.f32.mxu0 0.0
          %1035 = vmatmul.mubr.f32.gmra.mrb[0].mxu0 %v862
          %v1036 = vpop.f32.mrb[0].mxu0
          %v1037 = vadd.f32 %v903, %v1036
          %v1038 = vpop.f32.mrb[0].mxu0
          %1039 = vmatprep.mubr.f32.mxu0 0.0
          %1040 = vmatmul.mubr.f32.gmra.mrb[0].mxu0 %v863
          %v1041 = vpop.f32.mrb[0].mxu0
          %v1042 = vadd.f32 %v903, %v1041
          %v1043 = vpop.f32.mrb[0].mxu0
          %1044 = vmatprep.mubr.f32.mxu0 0.0
          %1045 = vmatmul.mubr.f32.gmra.mrb[0].mxu0 %v864
          %v1046 = vpop.f32.mrb[0].mxu0
          %v1047 = vadd.f32 %v903, %v1046
          %v1048 = vpop.f32.mrb[0].mxu0
          %1049 = vdwg.mxu0
          %v1050 = vmax.f32 %v972, 0.0
          %v1051 = vmax.f32 %v977, 0.0
          %v1052 = vmax.f32 %v982, 0.0
          %v1053 = vmax.f32 %v987, 0.0
          %v1054 = vmax.f32 %v992, 0.0
          %v1055 = vmax.f32 %v997, 0.0
          %v1056 = vmax.f32 %v1002, 0.0
          %v1057 = vmax.f32 %v1007, 0.0
          %v1058 = vmax.f32 %v1012, 0.0
          %v1059 = vmax.f32 %v1017, 0.0
          %v1060 = vmax.f32 %v1022, 0.0
          %v1061 = vmax.f32 %v1027, 0.0
          %v1062 = vmax.f32 %v1032, 0.0
          %v1063 = vmax.f32 %v1037, 0.0
          %v1064 = vmax.f32 %v1042, 0.0
          %v1065 = vmax.f32 %v1047, 0.0
          %v1067 = vlaneseq
          %v1068 = vshrl.u32 %v1067, 7
          %v1069 = vsub.s32 0, %v1068
          %v1070 = vrot.slane %v898, %v1069
          %1072 = vmatprep.subr.mxu0 0.0
          %1073 = vmatpush1.msra.mxu0 %v882
          %1074 = vmatprep.subr.mxu0 0.0
          %1075 = vmatpush1.msra.mxu0 %v883
          %1076 = vmatprep.subr.mxu0 0.0
          %1077 = vmatpush1.msra.mxu0 %v884
          %1078 = vmatprep.subr.mxu0 0.0
          %1079 = vmatpush1.msra.mxu0 %v885
          %1080 = vmatprep.subr.mxu0 0.0
          %1081 = vmatpush1.msra.mxu0 %v886
          %1082 = vmatprep.subr.mxu0 0.0
          %1083 = vmatpush1.msra.mxu0 %v887
          %1084 = vmatprep.subr.mxu0 0.0
          %1085 = vmatpush1.msra.mxu0 %v888
          %1086 = vmatprep.subr.mxu0 0.0
          %1087 = vmatpush1.msra.mxu0 %v889
          %1088 = vmatprep.subr.mxu0 0.0
          %1089 = vmatpush1.msra.mxu0 %v890
          %1090 = vmatprep.subr.mxu0 0.0
          %1091 = vmatpush1.msra.mxu0 %v891
          %1092 = vmatprep.subr.mxu0 0.0
          %1093 = vmatpush1.msra.mxu0 %v892
          %1094 = vmatprep.subr.mxu0 0.0
          %1095 = vmatpush1.msra.mxu0 %v893
          %1096 = vmatprep.subr.mxu0 0.0
          %1097 = vmatpush1.msra.mxu0 %v894
          %1098 = vmatprep.subr.mxu0 0.0
          %1099 = vmatpush1.msra.mxu0 %v895
          %1100 = vmatprep.subr.mxu0 0.0
          %1101 = vmatpush1.msra.mxu0 %v896
          %1102 = vmatprep.subr.mxu0 0.0
          %1103 = vmatpush1.msra.mxu0 %v897
          %1104 = vmatprep.subr.mxu0 0.0
          %1105 = vmatpush1.msra.mxu0 0.0
          %1106 = vmatprep.subr.mxu0 0.0
          %1107 = vmatpush1.msra.mxu0 0.0
          %1108 = vmatprep.subr.mxu0 0.0
          %1109 = vmatpush1.msra.mxu0 0.0
          %1110 = vmatprep.subr.mxu0 0.0
          %1111 = vmatpush1.msra.mxu0 0.0
          %1112 = vmatprep.subr.mxu0 0.0
          %1113 = vmatpush1.msra.mxu0 0.0
          %1114 = vmatprep.subr.mxu0 0.0
          %1115 = vmatpush1.msra.mxu0 0.0
          %1116 = vmatprep.subr.mxu0 0.0
          %1117 = vmatpush1.msra.mxu0 0.0
          %1118 = vmatprep.subr.mxu0 0.0
          %1119 = vmatpush1.msra.mxu0 0.0
          %1120 = vmatprep.subr.mxu0 0.0
          %1121 = vmatpush1.msra.mxu0 0.0
          %1122 = vmatprep.subr.mxu0 0.0
          %1123 = vmatpush1.msra.mxu0 0.0
          %1124 = vmatprep.subr.mxu0 0.0
          %1125 = vmatpush1.msra.mxu0 0.0
          %1126 = vmatprep.subr.mxu0 0.0
          %1127 = vmatpush1.msra.mxu0 0.0
          %1128 = vmatprep.subr.mxu0 0.0
          %1129 = vmatpush1.msra.mxu0 0.0
          %1130 = vmatprep.subr.mxu0 0.0
          %1131 = vmatpush1.msra.mxu0 0.0
          %1132 = vmatprep.subr.mxu0 0.0
          %1133 = vmatpush1.msra.mxu0 0.0
          %1134 = vmatprep.subr.mxu0 0.0
          %1135 = vmatpush1.msra.mxu0 0.0
          %1136 = vmatprep.mubr.f32.mxu0 0.0
          %1137 = vmatmul.mubr.f32.gmra.mrb[0].mxu0 %v1050
          %v1138 = vpop.f32.mrb[0].mxu0
          %v1139 = vadd.f32 %v1070, %v1138
          %v1140 = vpop.f32.mrb[0].mxu0
          %1141 = vmatprep.mubr.f32.mxu0 0.0
          %1142 = vmatmul.mubr.f32.gmra.mrb[0].mxu0 %v1051
          %v1143 = vpop.f32.mrb[0].mxu0
          %v1144 = vadd.f32 %v1070, %v1143
          %v1145 = vpop.f32.mrb[0].mxu0
          %1146 = vmatprep.mubr.f32.mxu0 0.0
          %1147 = vmatmul.mubr.f32.gmra.mrb[0].mxu0 %v1052
          %v1148 = vpop.f32.mrb[0].mxu0
          %v1149 = vadd.f32 %v1070, %v1148
          %v1150 = vpop.f32.mrb[0].mxu0
          %1151 = vmatprep.mubr.f32.mxu0 0.0
          %1152 = vmatmul.mubr.f32.gmra.mrb[0].mxu0 %v1053
          %v1153 = vpop.f32.mrb[0].mxu0
          %v1154 = vadd.f32 %v1070, %v1153
          %v1155 = vpop.f32.mrb[0].mxu0
          %1156 = vmatprep.mubr.f32.mxu0 0.0
          %1157 = vmatmul.mubr.f32.gmra.mrb[0].mxu0 %v1054
          %v1158 = vpop.f32.mrb[0].mxu0
          %v1159 = vadd.f32 %v1070, %v1158
          %v1160 = vpop.f32.mrb[0].mxu0
          %1161 = vmatprep.mubr.f32.mxu0 0.0
          %1162 = vmatmul.mubr.f32.gmra.mrb[0].mxu0 %v1055
          %v1163 = vpop.f32.mrb[0].mxu0
          %v1164 = vadd.f32 %v1070, %v1163
          %v1165 = vpop.f32.mrb[0].mxu0
          %1166 = vmatprep.mubr.f32.mxu0 0.0
          %1167 = vmatmul.mubr.f32.gmra.mrb[0].mxu0 %v1056
          %v1168 = vpop.f32.mrb[0].mxu0
          %v1169 = vadd.f32 %v1070, %v1168
          %v1170 = vpop.f32.mrb[0].mxu0
          %1171 = vmatprep.mubr.f32.mxu0 0.0
          %1172 = vmatmul.mubr.f32.gmra.mrb[0].mxu0 %v1057
          %v1173 = vpop.f32.mrb[0].mxu0
          %v1174 = vadd.f32 %v1070, %v1173
          %v1175 = vpop.f32.mrb[0].mxu0
          %1176 = vmatprep.mubr.f32.mxu0 0.0
          %1177 = vmatmul.mubr.f32.gmra.mrb[0].mxu0 %v1058
          %v1178 = vpop.f32.mrb[0].mxu0
          %v1179 = vadd.f32 %v1070, %v1178
          %v1180 = vpop.f32.mrb[0].mxu0
          %1181 = vmatprep.mubr.f32.mxu0 0.0
          %1182 = vmatmul.mubr.f32.gmra.mrb[0].mxu0 %v1059
          %v1183 = vpop.f32.mrb[0].mxu0
          %v1184 = vadd.f32 %v1070, %v1183
          %v1185 = vpop.f32.mrb[0].mxu0
          %1186 = vmatprep.mubr.f32.mxu0 0.0
          %1187 = vmatmul.mubr.f32.gmra.mrb[0].mxu0 %v1060
          %v1188 = vpop.f32.mrb[0].mxu0
          %v1189 = vadd.f32 %v1070, %v1188
          %v1190 = vpop.f32.mrb[0].mxu0
          %1191 = vmatprep.mubr.f32.mxu0 0.0
          %1192 = vmatmul.mubr.f32.gmra.mrb[0].mxu0 %v1061
          %v1193 = vpop.f32.mrb[0].mxu0
          %v1194 = vadd.f32 %v1070, %v1193
          %v1195 = vpop.f32.mrb[0].mxu0
          %1196 = vmatprep.mubr.f32.mxu0 0.0
          %1197 = vmatmul.mubr.f32.gmra.mrb[0].mxu0 %v1062
          %v1198 = vpop.f32.mrb[0].mxu0
          %v1199 = vadd.f32 %v1070, %v1198
          %v1200 = vpop.f32.mrb[0].mxu0
          %1201 = vmatprep.mubr.f32.mxu0 0.0
          %1202 = vmatmul.mubr.f32.gmra.mrb[0].mxu0 %v1063
          %v1203 = vpop.f32.mrb[0].mxu0
          %v1204 = vadd.f32 %v1070, %v1203
          %v1205 = vpop.f32.mrb[0].mxu0
          %1206 = vmatprep.mubr.f32.mxu0 0.0
          %1207 = vmatmul.mubr.f32.gmra.mrb[0].mxu0 %v1064
          %v1208 = vpop.f32.mrb[0].mxu0
          %v1209 = vadd.f32 %v1070, %v1208
          %v1210 = vpop.f32.mrb[0].mxu0
          %1211 = vmatprep.mubr.f32.mxu0 0.0
          %1212 = vmatmul.mubr.f32.gmra.mrb[0].mxu0 %v1065
          %v1213 = vpop.f32.mrb[0].mxu0
          %v1214 = vadd.f32 %v1070, %v1213
          %v1215 = vpop.f32.mrb[0].mxu0
          %1216 = vdwg.mxu0
          %v1217 = vmax.f32 %v1139, 0.0
          %v1218 = vmax.f32 %v1144, 0.0
          %v1219 = vmax.f32 %v1149, 0.0
          %v1220 = vmax.f32 %v1154, 0.0
          %v1221 = vmax.f32 %v1159, 0.0
          %v1222 = vmax.f32 %v1164, 0.0
          %v1223 = vmax.f32 %v1169, 0.0
          %v1224 = vmax.f32 %v1174, 0.0
          %v1225 = vmax.f32 %v1179, 0.0
          %v1226 = vmax.f32 %v1184, 0.0
          %v1227 = vmax.f32 %v1189, 0.0
          %v1228 = vmax.f32 %v1194, 0.0
          %v1229 = vmax.f32 %v1199, 0.0
          %v1230 = vmax.f32 %v1204, 0.0
          %v1231 = vmax.f32 %v1209, 0.0
          %v1232 = vmax.f32 %v1214, 0.0
          %v1233 = vld [vmem:[%s543] sm:$0xff]
          %v1234 = vld [vmem:[%s543 + $0x8] sm:$0xff]
          %v1235 = vld [vmem:[%s543 + $0x10] sm:$0xff]
          %v1236 = vld [vmem:[%s543 + $0x18] sm:$0xff]
          %v1237 = vld [vmem:[%s543 + $0x20] sm:$0xff]
          %v1238 = vld [vmem:[%s543 + $0x28] sm:$0xff]
          %v1239 = vld [vmem:[%s543 + $0x30] sm:$0xff]
          %v1240 = vld [vmem:[%s543 + $0x38] sm:$0xff]
          %v1241 = vld [vmem:[%s543 + $0x40] sm:$0xff]
          %v1242 = vld [vmem:[%s543 + $0x48] sm:$0xff]
          %v1243 = vld [vmem:[%s543 + $0x50] sm:$0xff]
          %v1244 = vld [vmem:[%s543 + $0x58] sm:$0xff]
          %v1245 = vld [vmem:[%s543 + $0x60] sm:$0xff]
          %v1246 = vld [vmem:[%s543 + $0x68] sm:$0xff]
          %v1247 = vld [vmem:[%s543 + $0x70] sm:$0xff]
          %v1248 = vld [vmem:[%s543 + $0x78] sm:$0xff]
          %v1249 = vadd.f32 %v1233, %v1217
          %v1250 = vadd.f32 %v1234, %v1218
          %v1251 = vadd.f32 %v1235, %v1219
          %v1252 = vadd.f32 %v1236, %v1220
          %v1253 = vadd.f32 %v1237, %v1221
          %v1254 = vadd.f32 %v1238, %v1222
          %v1255 = vadd.f32 %v1239, %v1223
          %v1256 = vadd.f32 %v1240, %v1224
          %v1257 = vadd.f32 %v1241, %v1225
          %v1258 = vadd.f32 %v1242, %v1226
          %v1259 = vadd.f32 %v1243, %v1227
          %v1260 = vadd.f32 %v1244, %v1228
          %v1261 = vadd.f32 %v1245, %v1229
          %v1262 = vadd.f32 %v1246, %v1230
          %v1263 = vadd.f32 %v1247, %v1231
          %v1264 = vadd.f32 %v1248, %v1232
          %v1265 = vld [vmem:[%s7] sm:$0xff]
          %v1266 = vld [vmem:[%s7 + $0x8] sm:$0xff]
          %v1267 = vld [vmem:[%s7 + $0x10] sm:$0xff]
          %v1268 = vld [vmem:[%s7 + $0x18] sm:$0xff]
          %v1269 = vld [vmem:[%s7 + $0x20] sm:$0xff]
          %v1270 = vld [vmem:[%s7 + $0x28] sm:$0xff]
          %v1271 = vld [vmem:[%s7 + $0x30] sm:$0xff]
          %v1272 = vld [vmem:[%s7 + $0x38] sm:$0xff]
          %v1273 = vld [vmem:[%s7 + $0x40] sm:$0xff]
          %v1274 = vld [vmem:[%s7 + $0x48] sm:$0xff]
          %v1275 = vld [vmem:[%s7 + $0x50] sm:$0xff]
          %v1276 = vld [vmem:[%s7 + $0x58] sm:$0xff]
          %v1277 = vld [vmem:[%s7 + $0x60] sm:$0xff]
          %v1278 = vld [vmem:[%s7 + $0x68] sm:$0xff]
          %v1279 = vld [vmem:[%s7 + $0x70] sm:$0xff]
          %v1280 = vld [vmem:[%s7 + $0x78] sm:$0xff]
          %v1281 = vld [vmem:[%s8] sm:$0x1]
          %v1282 = vld [vmem:[%s9] sm:$0xff]
          %v1283 = vld [vmem:[%s9 + $0x8] sm:$0xff]
          %v1284 = vld [vmem:[%s9 + $0x10] sm:$0xff]
          %v1285 = vld [vmem:[%s9 + $0x18] sm:$0xff]
          %v1286 = vld [vmem:[%s9 + $0x20] sm:$0xff]
          %v1287 = vld [vmem:[%s9 + $0x28] sm:$0xff]
          %v1288 = vld [vmem:[%s9 + $0x30] sm:$0xff]
          %v1289 = vld [vmem:[%s9 + $0x38] sm:$0xff]
          %v1290 = vld [vmem:[%s9 + $0x40] sm:$0xff]
          %v1291 = vld [vmem:[%s9 + $0x48] sm:$0xff]
          %v1292 = vld [vmem:[%s9 + $0x50] sm:$0xff]
          %v1293 = vld [vmem:[%s9 + $0x58] sm:$0xff]
          %v1294 = vld [vmem:[%s9 + $0x60] sm:$0xff]
          %v1295 = vld [vmem:[%s9 + $0x68] sm:$0xff]
          %v1296 = vld [vmem:[%s9 + $0x70] sm:$0xff]
          %v1297 = vld [vmem:[%s9 + $0x78] sm:$0xff]
          %v1298 = vld [vmem:[%s10] sm:$0x1]
          %v1300 = vlaneseq
          %v1301 = vshrl.u32 %v1300, 7
          %v1302 = vsub.s32 0, %v1301
          %v1303 = vrot.slane %v1281, %v1302
          %1305 = vmatprep.subr.mxu0 0.0
          %1306 = vmatpush1.msra.mxu0 %v1265
          %1307 = vmatprep.subr.mxu0 0.0
          %1308 = vmatpush1.msra.mxu0 %v1266
          %1309 = vmatprep.subr.mxu0 0.0
          %1310 = vmatpush1.msra.mxu0 %v1267
          %1311 = vmatprep.subr.mxu0 0.0
          %1312 = vmatpush1.msra.mxu0 %v1268
          %1313 = vmatprep.subr.mxu0 0.0
          %1314 = vmatpush1.msra.mxu0 %v1269
          %1315 = vmatprep.subr.mxu0 0.0
          %1316 = vmatpush1.msra.mxu0 %v1270
          %1317 = vmatprep.subr.mxu0 0.0
          %1318 = vmatpush1.msra.mxu0 %v1271
          %1319 = vmatprep.subr.mxu0 0.0
          %1320 = vmatpush1.msra.mxu0 %v1272
          %1321 = vmatprep.subr.mxu0 0.0
          %1322 = vmatpush1.msra.mxu0 %v1273
          %1323 = vmatprep.subr.mxu0 0.0
          %1324 = vmatpush1.msra.mxu0 %v1274
          %1325 = vmatprep.subr.mxu0 0.0
          %1326 = vmatpush1.msra.mxu0 %v1275
          %1327 = vmatprep.subr.mxu0 0.0
          %1328 = vmatpush1.msra.mxu0 %v1276
          %1329 = vmatprep.subr.mxu0 0.0
          %1330 = vmatpush1.msra.mxu0 %v1277
          %1331 = vmatprep.subr.mxu0 0.0
          %1332 = vmatpush1.msra.mxu0 %v1278
          %1333 = vmatprep.subr.mxu0 0.0
          %1334 = vmatpush1.msra.mxu0 %v1279
          %1335 = vmatprep.subr.mxu0 0.0
          %1336 = vmatpush1.msra.mxu0 %v1280
          %1337 = vmatprep.subr.mxu0 0.0
          %1338 = vmatpush1.msra.mxu0 0.0
          %1339 = vmatprep.subr.mxu0 0.0
          %1340 = vmatpush1.msra.mxu0 0.0
          %1341 = vmatprep.subr.mxu0 0.0
          %1342 = vmatpush1.msra.mxu0 0.0
          %1343 = vmatprep.subr.mxu0 0.0
          %1344 = vmatpush1.msra.mxu0 0.0
          %1345 = vmatprep.subr.mxu0 0.0
          %1346 = vmatpush1.msra.mxu0 0.0
          %1347 = vmatprep.subr.mxu0 0.0
          %1348 = vmatpush1.msra.mxu0 0.0
          %1349 = vmatprep.subr.mxu0 0.0
          %1350 = vmatpush1.msra.mxu0 0.0
          %1351 = vmatprep.subr.mxu0 0.0
          %1352 = vmatpush1.msra.mxu0 0.0
          %1353 = vmatprep.subr.mxu0 0.0
          %1354 = vmatpush1.msra.mxu0 0.0
          %1355 = vmatprep.subr.mxu0 0.0
          %1356 = vmatpush1.msra.mxu0 0.0
          %1357 = vmatprep.subr.mxu0 0.0
          %1358 = vmatpush1.msra.mxu0 0.0
          %1359 = vmatprep.subr.mxu0 0.0
          %1360 = vmatpush1.msra.mxu0 0.0
          %1361 = vmatprep.subr.mxu0 0.0
          %1362 = vmatpush1.msra.mxu0 0.0
          %1363 = vmatprep.subr.mxu0 0.0
          %1364 = vmatpush1.msra.mxu0 0.0
          %1365 = vmatprep.subr.mxu0 0.0
          %1366 = vmatpush1.msra.mxu0 0.0
          %1367 = vmatprep.subr.mxu0 0.0
          %1368 = vmatpush1.msra.mxu0 0.0
          %1369 = vmatprep.mubr.f32.mxu0 0.0
          %1370 = vmatmul.mubr.f32.gmra.mrb[0].mxu0 %v1249
          %v1371 = vpop.f32.mrb[0].mxu0
          %v1372 = vadd.f32 %v1303, %v1371
          %v1373 = vpop.f32.mrb[0].mxu0
          %1374 = vmatprep.mubr.f32.mxu0 0.0
          %1375 = vmatmul.mubr.f32.gmra.mrb[0].mxu0 %v1250
          %v1376 = vpop.f32.mrb[0].mxu0
          %v1377 = vadd.f32 %v1303, %v1376
          %v1378 = vpop.f32.mrb[0].mxu0
          %1379 = vmatprep.mubr.f32.mxu0 0.0
          %1380 = vmatmul.mubr.f32.gmra.mrb[0].mxu0 %v1251
          %v1381 = vpop.f32.mrb[0].mxu0
          %v1382 = vadd.f32 %v1303, %v1381
          %v1383 = vpop.f32.mrb[0].mxu0
          %1384 = vmatprep.mubr.f32.mxu0 0.0
          %1385 = vmatmul.mubr.f32.gmra.mrb[0].mxu0 %v1252
          %v1386 = vpop.f32.mrb[0].mxu0
          %v1387 = vadd.f32 %v1303, %v1386
          %v1388 = vpop.f32.mrb[0].mxu0
          %1389 = vmatprep.mubr.f32.mxu0 0.0
          %1390 = vmatmul.mubr.f32.gmra.mrb[0].mxu0 %v1253
          %v1391 = vpop.f32.mrb[0].mxu0
          %v1392 = vadd.f32 %v1303, %v1391
          %v1393 = vpop.f32.mrb[0].mxu0
          %1394 = vmatprep.mubr.f32.mxu0 0.0
          %1395 = vmatmul.mubr.f32.gmra.mrb[0].mxu0 %v1254
          %v1396 = vpop.f32.mrb[0].mxu0
          %v1397 = vadd.f32 %v1303, %v1396
          %v1398 = vpop.f32.mrb[0].mxu0
          %1399 = vmatprep.mubr.f32.mxu0 0.0
          %1400 = vmatmul.mubr.f32.gmra.mrb[0].mxu0 %v1255
          %v1401 = vpop.f32.mrb[0].mxu0
          %v1402 = vadd.f32 %v1303, %v1401
          %v1403 = vpop.f32.mrb[0].mxu0
          %1404 = vmatprep.mubr.f32.mxu0 0.0
          %1405 = vmatmul.mubr.f32.gmra.mrb[0].mxu0 %v1256
          %v1406 = vpop.f32.mrb[0].mxu0
          %v1407 = vadd.f32 %v1303, %v1406
          %v1408 = vpop.f32.mrb[0].mxu0
          %1409 = vmatprep.mubr.f32.mxu0 0.0
          %1410 = vmatmul.mubr.f32.gmra.mrb[0].mxu0 %v1257
          %v1411 = vpop.f32.mrb[0].mxu0
          %v1412 = vadd.f32 %v1303, %v1411
          %v1413 = vpop.f32.mrb[0].mxu0
          %1414 = vmatprep.mubr.f32.mxu0 0.0
          %1415 = vmatmul.mubr.f32.gmra.mrb[0].mxu0 %v1258
          %v1416 = vpop.f32.mrb[0].mxu0
          %v1417 = vadd.f32 %v1303, %v1416
          %v1418 = vpop.f32.mrb[0].mxu0
          %1419 = vmatprep.mubr.f32.mxu0 0.0
          %1420 = vmatmul.mubr.f32.gmra.mrb[0].mxu0 %v1259
          %v1421 = vpop.f32.mrb[0].mxu0
          %v1422 = vadd.f32 %v1303, %v1421
          %v1423 = vpop.f32.mrb[0].mxu0
          %1424 = vmatprep.mubr.f32.mxu0 0.0
          %1425 = vmatmul.mubr.f32.gmra.mrb[0].mxu0 %v1260
          %v1426 = vpop.f32.mrb[0].mxu0
          %v1427 = vadd.f32 %v1303, %v1426
          %v1428 = vpop.f32.mrb[0].mxu0
          %1429 = vmatprep.mubr.f32.mxu0 0.0
          %1430 = vmatmul.mubr.f32.gmra.mrb[0].mxu0 %v1261
          %v1431 = vpop.f32.mrb[0].mxu0
          %v1432 = vadd.f32 %v1303, %v1431
          %v1433 = vpop.f32.mrb[0].mxu0
          %1434 = vmatprep.mubr.f32.mxu0 0.0
          %1435 = vmatmul.mubr.f32.gmra.mrb[0].mxu0 %v1262
          %v1436 = vpop.f32.mrb[0].mxu0
          %v1437 = vadd.f32 %v1303, %v1436
          %v1438 = vpop.f32.mrb[0].mxu0
          %1439 = vmatprep.mubr.f32.mxu0 0.0
          %1440 = vmatmul.mubr.f32.gmra.mrb[0].mxu0 %v1263
          %v1441 = vpop.f32.mrb[0].mxu0
          %v1442 = vadd.f32 %v1303, %v1441
          %v1443 = vpop.f32.mrb[0].mxu0
          %1444 = vmatprep.mubr.f32.mxu0 0.0
          %1445 = vmatmul.mubr.f32.gmra.mrb[0].mxu0 %v1264
          %v1446 = vpop.f32.mrb[0].mxu0
          %v1447 = vadd.f32 %v1303, %v1446
          %v1448 = vpop.f32.mrb[0].mxu0
          %1449 = vdwg.mxu0
          %v1450 = vmax.f32 %v1372, 0.0
          %v1451 = vmax.f32 %v1377, 0.0
          %v1452 = vmax.f32 %v1382, 0.0
          %v1453 = vmax.f32 %v1387, 0.0
          %v1454 = vmax.f32 %v1392, 0.0
          %v1455 = vmax.f32 %v1397, 0.0
          %v1456 = vmax.f32 %v1402, 0.0
          %v1457 = vmax.f32 %v1407, 0.0
          %v1458 = vmax.f32 %v1412, 0.0
          %v1459 = vmax.f32 %v1417, 0.0
          %v1460 = vmax.f32 %v1422, 0.0
          %v1461 = vmax.f32 %v1427, 0.0
          %v1462 = vmax.f32 %v1432, 0.0
          %v1463 = vmax.f32 %v1437, 0.0
          %v1464 = vmax.f32 %v1442, 0.0
          %v1465 = vmax.f32 %v1447, 0.0
          %v1467 = vlaneseq
          %v1468 = vshrl.u32 %v1467, 7
          %v1469 = vsub.s32 0, %v1468
          %v1470 = vrot.slane %v1298, %v1469
          %1472 = vmatprep.subr.mxu0 0.0
          %1473 = vmatpush1.msra.mxu0 %v1282
          %1474 = vmatprep.subr.mxu0 0.0
          %1475 = vmatpush1.msra.mxu0 %v1283
          %1476 = vmatprep.subr.mxu0 0.0
          %1477 = vmatpush1.msra.mxu0 %v1284
          %1478 = vmatprep.subr.mxu0 0.0
          %1479 = vmatpush1.msra.mxu0 %v1285
          %1480 = vmatprep.subr.mxu0 0.0
          %1481 = vmatpush1.msra.mxu0 %v1286
          %1482 = vmatprep.subr.mxu0 0.0
          %1483 = vmatpush1.msra.mxu0 %v1287
          %1484 = vmatprep.subr.mxu0 0.0
          %1485 = vmatpush1.msra.mxu0 %v1288
          %1486 = vmatprep.subr.mxu0 0.0
          %1487 = vmatpush1.msra.mxu0 %v1289
          %1488 = vmatprep.subr.mxu0 0.0
          %1489 = vmatpush1.msra.mxu0 %v1290
          %1490 = vmatprep.subr.mxu0 0.0
          %1491 = vmatpush1.msra.mxu0 %v1291
          %1492 = vmatprep.subr.mxu0 0.0
          %1493 = vmatpush1.msra.mxu0 %v1292
          %1494 = vmatprep.subr.mxu0 0.0
          %1495 = vmatpush1.msra.mxu0 %v1293
          %1496 = vmatprep.subr.mxu0 0.0
          %1497 = vmatpush1.msra.mxu0 %v1294
          %1498 = vmatprep.subr.mxu0 0.0
          %1499 = vmatpush1.msra.mxu0 %v1295
          %1500 = vmatprep.subr.mxu0 0.0
          %1501 = vmatpush1.msra.mxu0 %v1296
          %1502 = vmatprep.subr.mxu0 0.0
          %1503 = vmatpush1.msra.mxu0 %v1297
          %1504 = vmatprep.subr.mxu0 0.0
          %1505 = vmatpush1.msra.mxu0 0.0
          %1506 = vmatprep.subr.mxu0 0.0
          %1507 = vmatpush1.msra.mxu0 0.0
          %1508 = vmatprep.subr.mxu0 0.0
          %1509 = vmatpush1.msra.mxu0 0.0
          %1510 = vmatprep.subr.mxu0 0.0
          %1511 = vmatpush1.msra.mxu0 0.0
          %1512 = vmatprep.subr.mxu0 0.0
          %1513 = vmatpush1.msra.mxu0 0.0
          %1514 = vmatprep.subr.mxu0 0.0
          %1515 = vmatpush1.msra.mxu0 0.0
          %1516 = vmatprep.subr.mxu0 0.0
          %1517 = vmatpush1.msra.mxu0 0.0
          %1518 = vmatprep.subr.mxu0 0.0
          %1519 = vmatpush1.msra.mxu0 0.0
          %1520 = vmatprep.subr.mxu0 0.0
          %1521 = vmatpush1.msra.mxu0 0.0
          %1522 = vmatprep.subr.mxu0 0.0
          %1523 = vmatpush1.msra.mxu0 0.0
          %1524 = vmatprep.subr.mxu0 0.0
          %1525 = vmatpush1.msra.mxu0 0.0
          %1526 = vmatprep.subr.mxu0 0.0
          %1527 = vmatpush1.msra.mxu0 0.0
          %1528 = vmatprep.subr.mxu0 0.0
          %1529 = vmatpush1.msra.mxu0 0.0
          %1530 = vmatprep.subr.mxu0 0.0
          %1531 = vmatpush1.msra.mxu0 0.0
          %1532 = vmatprep.subr.mxu0 0.0
          %1533 = vmatpush1.msra.mxu0 0.0
          %1534 = vmatprep.subr.mxu0 0.0
          %1535 = vmatpush1.msra.mxu0 0.0
          %1536 = vmatprep.mubr.f32.mxu0 0.0
          %1537 = vmatmul.mubr.f32.gmra.mrb[0].mxu0 %v1450
          %v1538 = vpop.f32.mrb[0].mxu0
          %v1539 = vadd.f32 %v1470, %v1538
          %v1540 = vpop.f32.mrb[0].mxu0
          %1541 = vmatprep.mubr.f32.mxu0 0.0
          %1542 = vmatmul.mubr.f32.gmra.mrb[0].mxu0 %v1451
          %v1543 = vpop.f32.mrb[0].mxu0
          %v1544 = vadd.f32 %v1470, %v1543
          %v1545 = vpop.f32.mrb[0].mxu0
          %1546 = vmatprep.mubr.f32.mxu0 0.0
          %1547 = vmatmul.mubr.f32.gmra.mrb[0].mxu0 %v1452
          %v1548 = vpop.f32.mrb[0].mxu0
          %v1549 = vadd.f32 %v1470, %v1548
          %v1550 = vpop.f32.mrb[0].mxu0
          %1551 = vmatprep.mubr.f32.mxu0 0.0
          %1552 = vmatmul.mubr.f32.gmra.mrb[0].mxu0 %v1453
          %v1553 = vpop.f32.mrb[0].mxu0
          %v1554 = vadd.f32 %v1470, %v1553
          %v1555 = vpop.f32.mrb[0].mxu0
          %1556 = vmatprep.mubr.f32.mxu0 0.0
          %1557 = vmatmul.mubr.f32.gmra.mrb[0].mxu0 %v1454
          %v1558 = vpop.f32.mrb[0].mxu0
          %v1559 = vadd.f32 %v1470, %v1558
          %v1560 = vpop.f32.mrb[0].mxu0
          %1561 = vmatprep.mubr.f32.mxu0 0.0
          %1562 = vmatmul.mubr.f32.gmra.mrb[0].mxu0 %v1455
          %v1563 = vpop.f32.mrb[0].mxu0
          %v1564 = vadd.f32 %v1470, %v1563
          %v1565 = vpop.f32.mrb[0].mxu0
          %1566 = vmatprep.mubr.f32.mxu0 0.0
          %1567 = vmatmul.mubr.f32.gmra.mrb[0].mxu0 %v1456
          %v1568 = vpop.f32.mrb[0].mxu0
          %v1569 = vadd.f32 %v1470, %v1568
          %v1570 = vpop.f32.mrb[0].mxu0
          %1571 = vmatprep.mubr.f32.mxu0 0.0
          %1572 = vmatmul.mubr.f32.gmra.mrb[0].mxu0 %v1457
          %v1573 = vpop.f32.mrb[0].mxu0
          %v1574 = vadd.f32 %v1470, %v1573
          %v1575 = vpop.f32.mrb[0].mxu0
          %1576 = vmatprep.mubr.f32.mxu0 0.0
          %1577 = vmatmul.mubr.f32.gmra.mrb[0].mxu0 %v1458
          %v1578 = vpop.f32.mrb[0].mxu0
          %v1579 = vadd.f32 %v1470, %v1578
          %v1580 = vpop.f32.mrb[0].mxu0
          %1581 = vmatprep.mubr.f32.mxu0 0.0
          %1582 = vmatmul.mubr.f32.gmra.mrb[0].mxu0 %v1459
          %v1583 = vpop.f32.mrb[0].mxu0
          %v1584 = vadd.f32 %v1470, %v1583
          %v1585 = vpop.f32.mrb[0].mxu0
          %1586 = vmatprep.mubr.f32.mxu0 0.0
          %1587 = vmatmul.mubr.f32.gmra.mrb[0].mxu0 %v1460
          %v1588 = vpop.f32.mrb[0].mxu0
          %v1589 = vadd.f32 %v1470, %v1588
          %v1590 = vpop.f32.mrb[0].mxu0
          %1591 = vmatprep.mubr.f32.mxu0 0.0
          %1592 = vmatmul.mubr.f32.gmra.mrb[0].mxu0 %v1461
          %v1593 = vpop.f32.mrb[0].mxu0
          %v1594 = vadd.f32 %v1470, %v1593
          %v1595 = vpop.f32.mrb[0].mxu0
          %1596 = vmatprep.mubr.f32.mxu0 0.0
          %1597 = vmatmul.mubr.f32.gmra.mrb[0].mxu0 %v1462
          %v1598 = vpop.f32.mrb[0].mxu0
          %v1599 = vadd.f32 %v1470, %v1598
          %v1600 = vpop.f32.mrb[0].mxu0
          %1601 = vmatprep.mubr.f32.mxu0 0.0
          %1602 = vmatmul.mubr.f32.gmra.mrb[0].mxu0 %v1463
          %v1603 = vpop.f32.mrb[0].mxu0
          %v1604 = vadd.f32 %v1470, %v1603
          %v1605 = vpop.f32.mrb[0].mxu0
          %1606 = vmatprep.mubr.f32.mxu0 0.0
          %1607 = vmatmul.mubr.f32.gmra.mrb[0].mxu0 %v1464
          %v1608 = vpop.f32.mrb[0].mxu0
          %v1609 = vadd.f32 %v1470, %v1608
          %v1610 = vpop.f32.mrb[0].mxu0
          %1611 = vmatprep.mubr.f32.mxu0 0.0
          %1612 = vmatmul.mubr.f32.gmra.mrb[0].mxu0 %v1465
          %v1613 = vpop.f32.mrb[0].mxu0
          %v1614 = vadd.f32 %v1470, %v1613
          %v1615 = vpop.f32.mrb[0].mxu0
          %1616 = vdwg.mxu0
          %v1617 = vmax.f32 %v1539, 0.0
          %v1618 = vmax.f32 %v1544, 0.0
          %v1619 = vmax.f32 %v1549, 0.0
          %v1620 = vmax.f32 %v1554, 0.0
          %v1621 = vmax.f32 %v1559, 0.0
          %v1622 = vmax.f32 %v1564, 0.0
          %v1623 = vmax.f32 %v1569, 0.0
          %v1624 = vmax.f32 %v1574, 0.0
          %v1625 = vmax.f32 %v1579, 0.0
          %v1626 = vmax.f32 %v1584, 0.0
          %v1627 = vmax.f32 %v1589, 0.0
          %v1628 = vmax.f32 %v1594, 0.0
          %v1629 = vmax.f32 %v1599, 0.0
          %v1630 = vmax.f32 %v1604, 0.0
          %v1631 = vmax.f32 %v1609, 0.0
          %v1632 = vmax.f32 %v1614, 0.0
          %1633 = vst [vmem:[%s549] sm:$0xff] %v1617
          %1634 = vst [vmem:[%s549 + $0x8] sm:$0xff] %v1618
          %1635 = vst [vmem:[%s549 + $0x10] sm:$0xff] %v1619
          %1636 = vst [vmem:[%s549 + $0x18] sm:$0xff] %v1620
          %1637 = vst [vmem:[%s549 + $0x20] sm:$0xff] %v1621
          %1638 = vst [vmem:[%s549 + $0x28] sm:$0xff] %v1622
          %1639 = vst [vmem:[%s549 + $0x30] sm:$0xff] %v1623
          %1640 = vst [vmem:[%s549 + $0x38] sm:$0xff] %v1624
          %1641 = vst [vmem:[%s549 + $0x40] sm:$0xff] %v1625
          %1642 = vst [vmem:[%s549 + $0x48] sm:$0xff] %v1626
          %1643 = vst [vmem:[%s549 + $0x50] sm:$0xff] %v1627
          %1644 = vst [vmem:[%s549 + $0x58] sm:$0xff] %v1628
          %1645 = vst [vmem:[%s549 + $0x60] sm:$0xff] %v1629
          %1646 = vst [vmem:[%s549 + $0x68] sm:$0xff] %v1630
          %1647 = vst [vmem:[%s549 + $0x70] sm:$0xff] %v1631
          %1648 = vst [vmem:[%s549 + $0x78] sm:$0xff] %v1632
        $region113: #{net_forward.8} parent=100 // pred_fallthru
          _
        %s1649 = smul.u32 16, %s26
        %p1650 = scmp.lt.s32.totalorder %s1649, 47
        %s1651 = scalar_select %p1650, %s1649, 47
        %s1652 = smul.addr %s1651, 8
        %s1653 = scalar_lea.vmem %s11, %s1652
        // Predicated region
        $region114: #{net_forward.8} parent=100 // pred_check
          %p1654 = pneg %p300
        $region115: #{net_forward.8} parent=100 // pred_check_branch
          %1656 = sbr.rel (%p1654) target = $region117
        $region116: #{net_forward.8} parent=100 // pred_region
          %s1657 = smul.u32 16, %s26
        $region117: #{net_forward.8} parent=100 // pred_fallthru
          _
      $region101: #{net_forward.8} parent=5 // pred_fallthru
        _
      %p1658 = scmp.le.s32.totalorder 2, %s17
      // Predicated region
      $region118: #{net_forward.8} parent=5 // pred_check
        %p1659 = pneg %p1658
      $region119: #{net_forward.8} parent=5 // pred_check_branch
        %1661 = sbr.rel (%p1659) target = $region121
      $region120: #{net_forward.8} parent=5 // pred_region
        %s1662 = ssub.s32 %s17, 2
        // Predicated region
        $region122: #{net_forward.8} parent=120 // pred_check
          %p1663 = pneg %p306
        $region123: #{net_forward.8} parent=120 // pred_check_branch
          %1665 = sbr.rel (%p1663) target = $region125
        $region124: #{net_forward.8} parent=120 // pred_region
          %s1666 = smul.u32 16, %s28
          %p1667 = scmp.lt.s32.totalorder %s1666, 47
          %s1668 = scalar_select %p1667, %s1666, 47
          %s1669 = smul.addr %s1668, 8
          %s1670 = scalar_lea.vmem %s11, %s1669
        $region125: #{net_forward.8} parent=120 // pred_fallthru
          _
      $region121: #{net_forward.8} parent=5 // pred_fallthru
        _
    $region6: #{net_forward.8} parent=1 // loop_footer
      %s21 = sadd.s32 1, %s17
    $region7: #{net_forward.8} parent=1 // loop_footer_branch
      %16 = sbr.rel target = $region3
    $region8: #{net_forward.8} parent=1 // loop_exit
      _

</llo_original>
